<compile_context>
chip_gen: v5e
topology: v5e:2x2
jax: 0.10.0
libtpu: 0.0.40
codegen_flags: <defaults>
</compile_context>

<pallas_src>
import math
import functools

import jax
import jax.numpy as jnp
from jax.experimental import pallas as pl
from jax.experimental.pallas import tpu as pltpu


# Flip to jnp.bfloat16 on v6e/v7x to halve the DMA bytes of the 27x-duplicated tap
# tensor; the matmul always accumulates in f32 (preferred_element_type) and the
# InstanceNorm / LeakyReLU math stays f32.  Default f32 keeps parity with the PyTorch
# reference (and v5e has no bf16 VPU path anyway).
MXU_INPUT_DTYPE = jnp.float32


# ----------------------------------------------------------------------------
# Pallas kernels
# ----------------------------------------------------------------------------
def _conv_block_kernel(taps_ref, w_ref, b_ref, o_ref, *, norm_act):
    """Fused Conv3d (as (Cout,K)@(K,M) matmul) + bias [+ InstanceNorm3d + LeakyReLU].

    taps: (K, M)    K = Cin*27 contraction rows, M = D*H*W (lane-dense, multiple of 128)
    w   : (Cout, K)
    b   : (Cout, 1)
    o   : (Cout, M)
    """
    acc = jnp.dot(w_ref[...], taps_ref[...], preferred_element_type=jnp.float32)
    acc = acc + b_ref[...]
    if norm_act:
        # InstanceNorm3d: per (sample, channel) stats over D*H*W, biased variance, f32.
        mean = jnp.mean(acc, axis=-1, keepdims=True)
        xc = acc - mean
        var = jnp.mean(xc * xc, axis=-1, keepdims=True)
        y = xc * jax.lax.rsqrt(var + 1e-5)
        acc = jnp.where(y >= 0, y, 0.01 * y)              # LeakyReLU(negative_slope=0.01)
    o_ref[...] = acc


def _fused_conv_block_call(tapsT, wmat, b, *, norm_act):
    n, k, m = tapsT.shape
    cout = wmat.shape[0]
    kernel = functools.partial(_conv_block_kernel, norm_act=norm_act)
    return pl.pallas_call(
        kernel,
        out_shape=jax.ShapeDtypeStruct((n, cout, m), jnp.float32),
        grid=(n,),
        in_specs=[
            pl.BlockSpec((None, k, m), lambda i: (i, 0, 0)),   # per-sample taps in VMEM
            pl.BlockSpec((cout, k), lambda i: (0, 0)),         # weights, resident
            pl.BlockSpec((cout, 1), lambda i: (0, 0)),         # bias, resident
        ],
        out_specs=pl.BlockSpec((None, cout, m), lambda i: (i, 0, 0)),
        compiler_params=pltpu.CompilerParams(
            dimension_semantics=("parallel",)),                # v7x: split batch over 2 TCs
    )(tapsT.astype(MXU_INPUT_DTYPE), wmat.astype(MXU_INPUT_DTYPE),
      b.reshape(cout, 1).astype(jnp.float32))


def _latent_kernel(flat_ref, few_ref, feb_ref, eps_ref, fdw_ref, fdb_ref,
                   dec_ref, mu_ref, logvar_ref, *, output_dim):
    """enc_fc Linear -> split(mu, logvar) -> reparametrize -> dec_fc Linear (one launch)."""
    z2 = jnp.dot(flat_ref[...], few_ref[...],
                 preferred_element_type=jnp.float32) + feb_ref[...]
    mu = z2[:, :output_dim]
    logvar = z2[:, output_dim:]
    z = mu + eps_ref[...] * jnp.exp(0.5 * logvar)              # training=True branch
    dec = jnp.dot(z, fdw_ref[...],
                  preferred_element_type=jnp.float32) + fdb_ref[...]
    dec_ref[...] = dec
    mu_ref[...] = mu
    logvar_ref[...] = logvar


def latent_fused(flat, fce_w, fce_b, eps, fcd_w, fcd_b, output_dim):
    n = flat.shape[0]
    enc_dim = fcd_w.shape[1]
    kernel = functools.partial(_latent_kernel, output_dim=output_dim)
    return pl.pallas_call(
        kernel,
        out_shape=(jax.ShapeDtypeStruct((n, enc_dim), jnp.float32),
                   jax.ShapeDtypeStruct((n, output_dim), jnp.float32),
                   jax.ShapeDtypeStruct((n, output_dim), jnp.float32)),
    )(flat, fce_w, fce_b.reshape(1, -1), eps, fcd_w, fcd_b.reshape(1, -1))


# ----------------------------------------------------------------------------
# JAX glue around the Pallas kernels
# ----------------------------------------------------------------------------
def conv_block(x, w, b, *, norm_act=True, padding_mode="zeros"):
    """Conv3d(k=3, s=1, p=1) [+ InstanceNorm3d + LeakyReLU], single fused Pallas call.

    x: (N, Cin, D, H, W); w: (Cout, Cin, 3, 3, 3); b: (Cout,)
    """
    n, cin, d, h, wd = x.shape
    cout = w.shape[0]
    mode = "edge" if padding_mode == "replicate" else "constant"
    xp = jnp.pad(x, ((0, 0), (0, 0), (1, 1), (1, 1), (1, 1)), mode=mode)
    # Tap stacking only (no big XLA transpose): (N, Cin, 27, D, H, W) -> (N, Cin*27, DHW).
    taps = [xp[:, :, kd:kd + d, kh:kh + h, kw:kw + wd]
            for kd in range(3) for kh in range(3) for kw in range(3)]
    tapsT = jnp.stack(taps, axis=2).reshape(n, cin * 27, d * h * wd)
    wmat = w.reshape(cout, cin * 27)            # ci-major, tap-minor: matches taps order
    out = _fused_conv_block_call(tapsT, wmat, b, norm_act=norm_act)
    return out.reshape(n, cout, d, h, wd)


def maxpool3d_2(x):
    # TODO(synk): could be folded into the conv-block kernel epilogue; left to XLA
    # (tiny reshape+max that fuses with the surrounding ops).
    n, c, d, h, w = x.shape
    x = x.reshape(n, c, d // 2, 2, h // 2, 2, w // 2, 2)
    return x.max(axis=(3, 5, 7))


def _interp1d_x2(x, axis):
    """1D x2 linear upsample matching PyTorch 'trilinear', align_corners=False (per axis)."""
    L = x.shape[axis]
    left = jnp.concatenate(
        [jax.lax.slice_in_dim(x, 0, 1, axis=axis),
         jax.lax.slice_in_dim(x, 0, L - 1, axis=axis)], axis=axis)
    right = jnp.concatenate(
        [jax.lax.slice_in_dim(x, 1, L, axis=axis),
         jax.lax.slice_in_dim(x, L - 1, L, axis=axis)], axis=axis)
    even = 0.25 * left + 0.75 * x        # out[2i]   = 0.25*x[i-1] + 0.75*x[i]  (edge clamp)
    odd = 0.75 * x + 0.25 * right        # out[2i+1] = 0.75*x[i]   + 0.25*x[i+1](edge clamp)
    out = jnp.stack([even, odd], axis=axis + 1)
    new_shape = list(x.shape)
    new_shape[axis] = 2 * L
    return out.reshape(new_shape)


def upsample_trilinear_x2(x):
    # separable trilinear, scale_factor=2, align_corners=False
    for ax in (2, 3, 4):
        x = _interp1d_x2(x, ax)
    return x


# ----------------------------------------------------------------------------
# Parameters (deterministic kaiming-style init, as in the module __init__)
# ----------------------------------------------------------------------------
def _kaiming_normal(key, shape, fan_in, a=0.0):
    gain = math.sqrt(2.0 / (1.0 + a * a))
    std = gain / math.sqrt(fan_in)
    return (std * jax.random.normal(key, shape)).astype(jnp.float32)


def init_params(key, input_dim=1, feature_dim=4, output_dim=8, enc_dim=512):
    ks = jax.random.split(key, 8)
    f1, f2 = feature_dim, feature_dim * 2
    return {
        # encoder ConvBlocks
        "e1_w": _kaiming_normal(ks[0], (f1, input_dim, 3, 3, 3), input_dim * 27),
        "e1_b": jnp.zeros((f1,), jnp.float32),
        "e2_w": _kaiming_normal(ks[1], (f2, f1, 3, 3, 3), f1 * 27),
        "e2_b": jnp.zeros((f2,), jnp.float32),
        # enc_fc : Linear(enc_dim, 2*output_dim)   (stored as (in, out))
        "fce_w": _kaiming_normal(ks[2], (enc_dim, 2 * output_dim), enc_dim),
        "fce_b": 0.01 * jax.random.normal(ks[3], (2 * output_dim,), jnp.float32),
        # dec_fc : Linear(output_dim, enc_dim)
        "fcd_w": _kaiming_normal(ks[4], (output_dim, enc_dim), output_dim),
        "fcd_b": 0.01 * jax.random.normal(ks[5], (enc_dim,), jnp.float32),
        # decoder ConvBlock + final Conv3d (replicate padding)
        "d1_w": _kaiming_normal(ks[6], (f1, f2, 3, 3, 3), f2 * 27),
        "d1_b": jnp.zeros((f1,), jnp.float32),
        "d2_w": _kaiming_normal(ks[7], (input_dim, f1, 3, 3, 3), f1 * 27),
        "d2_b": jnp.zeros((input_dim,), jnp.float32),
    }


# ----------------------------------------------------------------------------
# VAE forward  (input_shape=(16,16,16), input_dim=1, feature_dim=4, num_layers=2,
#               output_dim=8, fc_layers=1, upsample_mode='interp', norm_type='in')
# ----------------------------------------------------------------------------
OUTPUT_DIM = 8
ENC_SHAPE = (8, 4, 4, 4)   # (feature_dim*2^(num_layers-1), 16/4, 16/4, 16/4)
ENC_DIM = 8 * 4 * 4 * 4


@jax.jit
def vae_forward(params, x, eps):
    # ---- encode ----
    h = conv_block(x, params["e1_w"], params["e1_b"])          # (N, 4, 16,16,16) fused conv+IN+LReLU
    h = maxpool3d_2(h)                                         # (N, 4, 8, 8, 8)
    h = conv_block(h, params["e2_w"], params["e2_b"])          # (N, 8, 8, 8, 8)
    h = maxpool3d_2(h)                                         # (N, 8, 4, 4, 4)
    flat = h.reshape(h.shape[0], -1)                           # (N, 512)
    # ---- enc_fc -> reparametrize -> dec_fc, fused into one kernel ----
    dec, mu, logvar = latent_fused(flat, params["fce_w"], params["fce_b"],
                                   eps, params["fcd_w"], params["fcd_b"], OUTPUT_DIM)
    # ---- decode ----
    d = dec.reshape(dec.shape[0], *ENC_SHAPE)                  # (N, 8, 4, 4, 4)
    d = upsample_trilinear_x2(d)                               # (N, 8, 8, 8, 8)
    d = conv_block(d, params["d1_w"], params["d1_b"])          # (N, 4, 8, 8, 8)
    d = upsample_trilinear_x2(d)                               # (N, 4, 16,16,16)
    d = conv_block(d, params["d2_w"], params["d2_b"],
                   norm_act=False, padding_mode="replicate")   # (N, 1, 16,16,16)
    return d, mu, logvar


# ----------------------------------------------------------------------------
if __name__ == "__main__":
    key = jax.random.PRNGKey(0)
    k_x, k_p, k_eps = jax.random.split(key, 3)

    batch = 2
    x = jax.random.normal(k_x, (batch, 1, 16, 16, 16), dtype=jnp.float32)
    params = init_params(k_p)
    # torch.randn_like(std) in reparametrize -> deterministic jax.random.normal here
    eps = jax.random.normal(k_eps, (batch, OUTPUT_DIM), dtype=jnp.float32)

    recon, mu, logvar = vae_forward(params, x, eps)
    jax.block_until_ready((recon, mu, logvar))

    assert recon.shape == (batch, 1, 16, 16, 16)
    assert mu.shape == (batch, OUTPUT_DIM) and logvar.shape == (batch, OUTPUT_DIM)
    assert bool(jnp.all(jnp.isfinite(recon)))
    print("KERNEL_OK")
</pallas_src>

<mosaic_0001>
module attributes {stable_mosaic.version = 11 : i64} {
  func.func @_conv_block_kernel(%arg0: i32, %arg1: memref<1x27x4096xf32, #tpu.memory_space<vmem>>, %arg2: memref<4x27xf32, #tpu.memory_space<vmem>>, %arg3: memref<4x1xf32, #tpu.memory_space<vmem>>, %arg4: memref<1x4x4096xf32, #tpu.memory_space<vmem>>) attributes {dimension_semantics = [#tpu.dimension_semantics<parallel>], iteration_bounds = array<i64: 2>, scalar_prefetch = 0 : i64, scratch_operands = 0 : i64, tpu.core_type = #tpu.core_type<tc>, window_params = [{transform_indices = @transform_0, window_bounds = array<i64: 1, 27, 4096>}, {pipeline_mode = #tpu.pipeline_mode<synchronous>, transform_indices = @transform_1, window_bounds = array<i64: 4, 27>}, {pipeline_mode = #tpu.pipeline_mode<synchronous>, transform_indices = @transform_2, window_bounds = array<i64: 4, 1>}, {transform_indices = @transform_3, window_bounds = array<i64: 1, 4, 4096>}]} {
    %c0 = arith.constant 0 : index
    %c0_0 = arith.constant 0 : index
    %0 = vector.load %arg2[%c0, %c0_0] : memref<4x27xf32, #tpu.memory_space<vmem>>, vector<4x27xf32>
    %c0_1 = arith.constant 0 : index
    %c0_2 = arith.constant 0 : index
    %c0_3 = arith.constant 0 : index
    %1 = vector.load %arg1[%c0_1, %c0_2, %c0_3] : memref<1x27x4096xf32, #tpu.memory_space<vmem>>, vector<1x27x4096xf32>
    %2 = vector.shape_cast %1 : vector<1x27x4096xf32> to vector<27x4096xf32>
    %cst = arith.constant dense<0.000000e+00> : vector<4x4096xf32>
    %3 = tpu.matmul %0, %2, %cst {dimension_numbers = #tpu.dot_dimension_numbers<[1], [0], [0], [1], [0, 0, 1, 1], [], []>} : vector<4x27xf32>, vector<27x4096xf32>, vector<4x4096xf32> -> vector<4x4096xf32>
    %c0_4 = arith.constant 0 : index
    %c0_5 = arith.constant 0 : index
    %4 = vector.load %arg3[%c0_4, %c0_5] : memref<4x1xf32, #tpu.memory_space<vmem>>, vector<4x1xf32>
    %5 = vector.broadcast %4 : vector<4x1xf32> to vector<4x4096xf32>
    %6 = arith.addf %3, %5 : vector<4x4096xf32>
    %cst_6 = arith.constant dense<0.000000e+00> : vector<4xf32>
    %7 = vector.multi_reduction <add>, %6, %cst_6 [1] : vector<4x4096xf32> to vector<4xf32>
    %8 = vector.shape_cast %7 : vector<4xf32> to vector<4x1xf32>
    %cst_7 = arith.constant 4.096000e+03 : f32
    %9 = vector.broadcast %cst_7 : f32 to vector<4x1xf32>
    %10 = arith.divf %8, %9 : vector<4x1xf32>
    %11 = vector.broadcast %10 : vector<4x1xf32> to vector<4x4096xf32>
    %12 = arith.subf %6, %11 : vector<4x4096xf32>
    %13 = arith.mulf %12, %12 : vector<4x4096xf32>
    %cst_8 = arith.constant dense<0.000000e+00> : vector<4xf32>
    %14 = vector.multi_reduction <add>, %13, %cst_8 [1] : vector<4x4096xf32> to vector<4xf32>
    %15 = vector.shape_cast %14 : vector<4xf32> to vector<4x1xf32>
    %cst_9 = arith.constant 4.096000e+03 : f32
    %16 = vector.broadcast %cst_9 : f32 to vector<4x1xf32>
    %17 = arith.divf %15, %16 : vector<4x1xf32>
    %cst_10 = arith.constant 9.99999974E-6 : f32
    %18 = vector.broadcast %cst_10 : f32 to vector<4x1xf32>
    %19 = arith.addf %17, %18 : vector<4x1xf32>
    %20 = math.rsqrt %19 : vector<4x1xf32>
    %21 = vector.broadcast %20 : vector<4x1xf32> to vector<4x4096xf32>
    %22 = arith.mulf %12, %21 : vector<4x4096xf32>
    %cst_11 = arith.constant 0.000000e+00 : f32
    %23 = vector.broadcast %cst_11 : f32 to vector<4x4096xf32>
    %24 = arith.cmpf oge, %22, %23 : vector<4x4096xf32>
    %cst_12 = arith.constant 0.00999999977 : f32
    %25 = vector.broadcast %cst_12 : f32 to vector<4x4096xf32>
    %26 = arith.mulf %25, %22 : vector<4x4096xf32>
    %27 = arith.select %24, %22, %26 : vector<4x4096xi1>, vector<4x4096xf32>
    %c0_13 = arith.constant 0 : index
    %c0_14 = arith.constant 0 : index
    %c0_15 = arith.constant 0 : index
    %28 = vector.load %arg4[%c0_13, %c0_14, %c0_15] : memref<1x4x4096xf32, #tpu.memory_space<vmem>>, vector<1x4x4096xf32>
    %29 = vector.shape_cast %28 : vector<1x4x4096xf32> to vector<4x4096xf32>
    %30 = vector.shape_cast %27 : vector<4x4096xf32> to vector<1x4x4096xf32>
    tpu.vector_store %arg4[%c0_13, %c0_14, %c0_15], %30 {strides = array<i32>} : memref<1x4x4096xf32, #tpu.memory_space<vmem>>, vector<1x4x4096xf32>,
    return
  }
  func.func @transform_0(%arg0: i32) -> (i32, i32, i32) {
    %c0_i32 = arith.constant 0 : i32
    %c0_i32_0 = arith.constant 0 : i32
    %c0_i32_1 = arith.constant 0 : i32
    return %arg0, %c0_i32, %c0_i32_0 : i32, i32, i32
  }
  func.func @transform_1(%arg0: i32) -> (i32, i32) {
    %c0_i32 = arith.constant 0 : i32
    %c0_i32_0 = arith.constant 0 : i32
    %c0_i32_1 = arith.constant 0 : i32
    return %c0_i32, %c0_i32_0 : i32, i32
  }
  func.func @transform_2(%arg0: i32) -> (i32, i32) {
    %c0_i32 = arith.constant 0 : i32
    %c0_i32_0 = arith.constant 0 : i32
    %c0_i32_1 = arith.constant 0 : i32
    return %c0_i32, %c0_i32_0 : i32, i32
  }
  func.func @transform_3(%arg0: i32) -> (i32, i32, i32) {
    %c0_i32 = arith.constant 0 : i32
    %c0_i32_0 = arith.constant 0 : i32
    %c0_i32_1 = arith.constant 0 : i32
    return %arg0, %c0_i32, %c0_i32_0 : i32, i32, i32
  }
}

module attributes {stable_mosaic.version = 11 : i64} {
  func.func @_conv_block_kernel(%arg0: i32, %arg1: memref<1x108x512xf32, #tpu.memory_space<vmem>>, %arg2: memref<8x108xf32, #tpu.memory_space<vmem>>, %arg3: memref<8x1xf32, #tpu.memory_space<vmem>>, %arg4: memref<1x8x512xf32, #tpu.memory_space<vmem>>) attributes {dimension_semantics = [#tpu.dimension_semantics<parallel>], iteration_bounds = array<i64: 2>, scalar_prefetch = 0 : i64, scratch_operands = 0 : i64, tpu.core_type = #tpu.core_type<tc>, window_params = [{transform_indices = @transform_0, window_bounds = array<i64: 1, 108, 512>}, {pipeline_mode = #tpu.pipeline_mode<synchronous>, transform_indices = @transform_1, window_bounds = array<i64: 8, 108>}, {pipeline_mode = #tpu.pipeline_mode<synchronous>, transform_indices = @transform_2, window_bounds = array<i64: 8, 1>}, {transform_indices = @transform_3, window_bounds = array<i64: 1, 8, 512>}]} {
    %c0 = arith.constant 0 : index
    %c0_0 = arith.constant 0 : index
    %0 = vector.load %arg2[%c0, %c0_0] : memref<8x108xf32, #tpu.memory_space<vmem>>, vector<8x108xf32>
    %c0_1 = arith.constant 0 : index
    %c0_2 = arith.constant 0 : index
    %c0_3 = arith.constant 0 : index
    %1 = vector.load %arg1[%c0_1, %c0_2, %c0_3] : memref<1x108x512xf32, #tpu.memory_space<vmem>>, vector<1x108x512xf32>
    %2 = vector.shape_cast %1 : vector<1x108x512xf32> to vector<108x512xf32>
    %cst = arith.constant dense<0.000000e+00> : vector<8x512xf32>
    %3 = tpu.matmul %0, %2, %cst {dimension_numbers = #tpu.dot_dimension_numbers<[1], [0], [0], [1], [0, 0, 1, 1], [], []>} : vector<8x108xf32>, vector<108x512xf32>, vector<8x512xf32> -> vector<8x512xf32>
    %c0_4 = arith.constant 0 : index
    %c0_5 = arith.constant 0 : index
    %4 = vector.load %arg3[%c0_4, %c0_5] : memref<8x1xf32, #tpu.memory_space<vmem>>, vector<8x1xf32>
    %5 = vector.broadcast %4 : vector<8x1xf32> to vector<8x512xf32>
    %6 = arith.addf %3, %5 : vector<8x512xf32>
    %cst_6 = arith.constant dense<0.000000e+00> : vector<8xf32>
    %7 = vector.multi_reduction <add>, %6, %cst_6 [1] : vector<8x512xf32> to vector<8xf32>
    %8 = vector.shape_cast %7 : vector<8xf32> to vector<8x1xf32>
    %cst_7 = arith.constant 5.120000e+02 : f32
    %9 = vector.broadcast %cst_7 : f32 to vector<8x1xf32>
    %10 = arith.divf %8, %9 : vector<8x1xf32>
    %11 = vector.broadcast %10 : vector<8x1xf32> to vector<8x512xf32>
    %12 = arith.subf %6, %11 : vector<8x512xf32>
    %13 = arith.mulf %12, %12 : vector<8x512xf32>
    %cst_8 = arith.constant dense<0.000000e+00> : vector<8xf32>
    %14 = vector.multi_reduction <add>, %13, %cst_8 [1] : vector<8x512xf32> to vector<8xf32>
    %15 = vector.shape_cast %14 : vector<8xf32> to vector<8x1xf32>
    %cst_9 = arith.constant 5.120000e+02 : f32
    %16 = vector.broadcast %cst_9 : f32 to vector<8x1xf32>
    %17 = arith.divf %15, %16 : vector<8x1xf32>
    %cst_10 = arith.constant 9.99999974E-6 : f32
    %18 = vector.broadcast %cst_10 : f32 to vector<8x1xf32>
    %19 = arith.addf %17, %18 : vector<8x1xf32>
    %20 = math.rsqrt %19 : vector<8x1xf32>
    %21 = vector.broadcast %20 : vector<8x1xf32> to vector<8x512xf32>
    %22 = arith.mulf %12, %21 : vector<8x512xf32>
    %cst_11 = arith.constant 0.000000e+00 : f32
    %23 = vector.broadcast %cst_11 : f32 to vector<8x512xf32>
    %24 = arith.cmpf oge, %22, %23 : vector<8x512xf32>
    %cst_12 = arith.constant 0.00999999977 : f32
    %25 = vector.broadcast %cst_12 : f32 to vector<8x512xf32>
    %26 = arith.mulf %25, %22 : vector<8x512xf32>
    %27 = arith.select %24, %22, %26 : vector<8x512xi1>, vector<8x512xf32>
    %c0_13 = arith.constant 0 : index
    %c0_14 = arith.constant 0 : index
    %c0_15 = arith.constant 0 : index
    %28 = vector.load %arg4[%c0_13, %c0_14, %c0_15] : memref<1x8x512xf32, #tpu.memory_space<vmem>>, vector<1x8x512xf32>
    %29 = vector.shape_cast %28 : vector<1x8x512xf32> to vector<8x512xf32>
    %30 = vector.shape_cast %27 : vector<8x512xf32> to vector<1x8x512xf32>
    tpu.vector_store %arg4[%c0_13, %c0_14, %c0_15], %30 {strides = array<i32>} : memref<1x8x512xf32, #tpu.memory_space<vmem>>, vector<1x8x512xf32>,
    return
  }
  func.func @transform_0(%arg0: i32) -> (i32, i32, i32) {
    %c0_i32 = arith.constant 0 : i32
    %c0_i32_0 = arith.constant 0 : i32
    %c0_i32_1 = arith.constant 0 : i32
    return %arg0, %c0_i32, %c0_i32_0 : i32, i32, i32
  }
  func.func @transform_1(%arg0: i32) -> (i32, i32) {
    %c0_i32 = arith.constant 0 : i32
    %c0_i32_0 = arith.constant 0 : i32
    %c0_i32_1 = arith.constant 0 : i32
    return %c0_i32, %c0_i32_0 : i32, i32
  }
  func.func @transform_2(%arg0: i32) -> (i32, i32) {
    %c0_i32 = arith.constant 0 : i32
    %c0_i32_0 = arith.constant 0 : i32
    %c0_i32_1 = arith.constant 0 : i32
    return %c0_i32, %c0_i32_0 : i32, i32
  }
  func.func @transform_3(%arg0: i32) -> (i32, i32, i32) {
    %c0_i32 = arith.constant 0 : i32
    %c0_i32_0 = arith.constant 0 : i32
    %c0_i32_1 = arith.constant 0 : i32
    return %arg0, %c0_i32, %c0_i32_0 : i32, i32, i32
  }
}

module attributes {stable_mosaic.version = 11 : i64} {
  func.func @_latent_kernel(%arg0: memref<2x512xf32, #tpu.memory_space<vmem>>, %arg1: memref<512x16xf32, #tpu.memory_space<vmem>>, %arg2: memref<1x16xf32, #tpu.memory_space<vmem>>, %arg3: memref<2x8xf32, #tpu.memory_space<vmem>>, %arg4: memref<8x512xf32, #tpu.memory_space<vmem>>, %arg5: memref<1x512xf32, #tpu.memory_space<vmem>>, %arg6: memref<2x512xf32, #tpu.memory_space<vmem>>, %arg7: memref<2x8xf32, #tpu.memory_space<vmem>>, %arg8: memref<2x8xf32, #tpu.memory_space<vmem>>) attributes {dimension_semantics = [], scalar_prefetch = 0 : i64, scratch_operands = 0 : i64, tpu.core_type = #tpu.core_type<tc>} {
    %c0 = arith.constant 0 : index
    %c0_0 = arith.constant 0 : index
    %0 = vector.load %arg0[%c0, %c0_0] : memref<2x512xf32, #tpu.memory_space<vmem>>, vector<2x512xf32>
    %c0_1 = arith.constant 0 : index
    %c0_2 = arith.constant 0 : index
    %1 = vector.load %arg1[%c0_1, %c0_2] : memref<512x16xf32, #tpu.memory_space<vmem>>, vector<512x16xf32>
    %cst = arith.constant dense<0.000000e+00> : vector<2x16xf32>
    %2 = tpu.matmul %0, %1, %cst {dimension_numbers = #tpu.dot_dimension_numbers<[1], [0], [0], [1], [0, 0, 1, 1], [], []>} : vector<2x512xf32>, vector<512x16xf32>, vector<2x16xf32> -> vector<2x16xf32>
    %c0_3 = arith.constant 0 : index
    %c0_4 = arith.constant 0 : index
    %3 = vector.load %arg2[%c0_3, %c0_4] : memref<1x16xf32, #tpu.memory_space<vmem>>, vector<1x16xf32>
    %4 = vector.broadcast %3 : vector<1x16xf32> to vector<2x16xf32>
    %5 = arith.addf %2, %4 : vector<2x16xf32>
    %6 = vector.extract_strided_slice %5 {offsets = [0, 0], sizes = [2, 8], strides = [1, 1]} : vector<2x16xf32> to vector<2x8xf32>
    %7 = vector.extract_strided_slice %5 {offsets = [0, 8], sizes = [2, 8], strides = [1, 1]} : vector<2x16xf32> to vector<2x8xf32>
    %c0_5 = arith.constant 0 : index
    %c0_6 = arith.constant 0 : index
    %8 = vector.load %arg3[%c0_5, %c0_6] : memref<2x8xf32, #tpu.memory_space<vmem>>, vector<2x8xf32>
    %cst_7 = arith.constant 5.000000e-01 : f32
    %9 = vector.broadcast %cst_7 : f32 to vector<2x8xf32>
    %10 = arith.mulf %9, %7 : vector<2x8xf32>
    %11 = math.exp %10 : vector<2x8xf32>
    %12 = arith.mulf %8, %11 : vector<2x8xf32>
    %13 = arith.addf %6, %12 : vector<2x8xf32>
    %c0_8 = arith.constant 0 : index
    %c0_9 = arith.constant 0 : index
    %14 = vector.load %arg4[%c0_8, %c0_9] : memref<8x512xf32, #tpu.memory_space<vmem>>, vector<8x512xf32>
    %cst_10 = arith.constant dense<0.000000e+00> : vector<2x512xf32>
    %15 = tpu.matmul %13, %14, %cst_10 {dimension_numbers = #tpu.dot_dimension_numbers<[1], [0], [0], [1], [0, 0, 1, 1], [], []>} : vector<2x8xf32>, vector<8x512xf32>, vector<2x512xf32> -> vector<2x512xf32>
    %c0_11 = arith.constant 0 : index
    %c0_12 = arith.constant 0 : index
    %16 = vector.load %arg5[%c0_11, %c0_12] : memref<1x512xf32, #tpu.memory_space<vmem>>, vector<1x512xf32>
    %17 = vector.broadcast %16 : vector<1x512xf32> to vector<2x512xf32>
    %18 = arith.addf %15, %17 : vector<2x512xf32>
    %c0_13 = arith.constant 0 : index
    %c0_14 = arith.constant 0 : index
    %19 = vector.load %arg6[%c0_13, %c0_14] : memref<2x512xf32, #tpu.memory_space<vmem>>, vector<2x512xf32>
    tpu.vector_store %arg6[%c0_13, %c0_14], %18 {strides = array<i32>} : memref<2x512xf32, #tpu.memory_space<vmem>>, vector<2x512xf32>,
    %c0_15 = arith.constant 0 : index
    %c0_16 = arith.constant 0 : index
    %20 = vector.load %arg7[%c0_15, %c0_16] : memref<2x8xf32, #tpu.memory_space<vmem>>, vector<2x8xf32>
    tpu.vector_store %arg7[%c0_15, %c0_16], %6 {strides = array<i32>} : memref<2x8xf32, #tpu.memory_space<vmem>>, vector<2x8xf32>,
    %c0_17 = arith.constant 0 : index
    %c0_18 = arith.constant 0 : index
    %21 = vector.load %arg8[%c0_17, %c0_18] : memref<2x8xf32, #tpu.memory_space<vmem>>, vector<2x8xf32>
    tpu.vector_store %arg8[%c0_17, %c0_18], %7 {strides = array<i32>} : memref<2x8xf32, #tpu.memory_space<vmem>>, vector<2x8xf32>,
    return
  }
}

module attributes {stable_mosaic.version = 11 : i64} {
  func.func @_conv_block_kernel(%arg0: i32, %arg1: memref<1x216x512xf32, #tpu.memory_space<vmem>>, %arg2: memref<4x216xf32, #tpu.memory_space<vmem>>, %arg3: memref<4x1xf32, #tpu.memory_space<vmem>>, %arg4: memref<1x4x512xf32, #tpu.memory_space<vmem>>) attributes {dimension_semantics = [#tpu.dimension_semantics<parallel>], iteration_bounds = array<i64: 2>, scalar_prefetch = 0 : i64, scratch_operands = 0 : i64, tpu.core_type = #tpu.core_type<tc>, window_params = [{transform_indices = @transform_0, window_bounds = array<i64: 1, 216, 512>}, {pipeline_mode = #tpu.pipeline_mode<synchronous>, transform_indices = @transform_1, window_bounds = array<i64: 4, 216>}, {pipeline_mode = #tpu.pipeline_mode<synchronous>, transform_indices = @transform_2, window_bounds = array<i64: 4, 1>}, {transform_indices = @transform_3, window_bounds = array<i64: 1, 4, 512>}]} {
    %c0 = arith.constant 0 : index
    %c0_0 = arith.constant 0 : index
    %0 = vector.load %arg2[%c0, %c0_0] : memref<4x216xf32, #tpu.memory_space<vmem>>, vector<4x216xf32>
    %c0_1 = arith.constant 0 : index
    %c0_2 = arith.constant 0 : index
    %c0_3 = arith.constant 0 : index
    %1 = vector.load %arg1[%c0_1, %c0_2, %c0_3] : memref<1x216x512xf32, #tpu.memory_space<vmem>>, vector<1x216x512xf32>
    %2 = vector.shape_cast %1 : vector<1x216x512xf32> to vector<216x512xf32>
    %cst = arith.constant dense<0.000000e+00> : vector<4x512xf32>
    %3 = tpu.matmul %0, %2, %cst {dimension_numbers = #tpu.dot_dimension_numbers<[1], [0], [0], [1], [0, 0, 1, 1], [], []>} : vector<4x216xf32>, vector<216x512xf32>, vector<4x512xf32> -> vector<4x512xf32>
    %c0_4 = arith.constant 0 : index
    %c0_5 = arith.constant 0 : index
    %4 = vector.load %arg3[%c0_4, %c0_5] : memref<4x1xf32, #tpu.memory_space<vmem>>, vector<4x1xf32>
    %5 = vector.broadcast %4 : vector<4x1xf32> to vector<4x512xf32>
    %6 = arith.addf %3, %5 : vector<4x512xf32>
    %cst_6 = arith.constant dense<0.000000e+00> : vector<4xf32>
    %7 = vector.multi_reduction <add>, %6, %cst_6 [1] : vector<4x512xf32> to vector<4xf32>
    %8 = vector.shape_cast %7 : vector<4xf32> to vector<4x1xf32>
    %cst_7 = arith.constant 5.120000e+02 : f32
    %9 = vector.broadcast %cst_7 : f32 to vector<4x1xf32>
    %10 = arith.divf %8, %9 : vector<4x1xf32>
    %11 = vector.broadcast %10 : vector<4x1xf32> to vector<4x512xf32>
    %12 = arith.subf %6, %11 : vector<4x512xf32>
    %13 = arith.mulf %12, %12 : vector<4x512xf32>
    %cst_8 = arith.constant dense<0.000000e+00> : vector<4xf32>
    %14 = vector.multi_reduction <add>, %13, %cst_8 [1] : vector<4x512xf32> to vector<4xf32>
    %15 = vector.shape_cast %14 : vector<4xf32> to vector<4x1xf32>
    %cst_9 = arith.constant 5.120000e+02 : f32
    %16 = vector.broadcast %cst_9 : f32 to vector<4x1xf32>
    %17 = arith.divf %15, %16 : vector<4x1xf32>
    %cst_10 = arith.constant 9.99999974E-6 : f32
    %18 = vector.broadcast %cst_10 : f32 to vector<4x1xf32>
    %19 = arith.addf %17, %18 : vector<4x1xf32>
    %20 = math.rsqrt %19 : vector<4x1xf32>
    %21 = vector.broadcast %20 : vector<4x1xf32> to vector<4x512xf32>
    %22 = arith.mulf %12, %21 : vector<4x512xf32>
    %cst_11 = arith.constant 0.000000e+00 : f32
    %23 = vector.broadcast %cst_11 : f32 to vector<4x512xf32>
    %24 = arith.cmpf oge, %22, %23 : vector<4x512xf32>
    %cst_12 = arith.constant 0.00999999977 : f32
    %25 = vector.broadcast %cst_12 : f32 to vector<4x512xf32>
    %26 = arith.mulf %25, %22 : vector<4x512xf32>
    %27 = arith.select %24, %22, %26 : vector<4x512xi1>, vector<4x512xf32>
    %c0_13 = arith.constant 0 : index
    %c0_14 = arith.constant 0 : index
    %c0_15 = arith.constant 0 : index
    %28 = vector.load %arg4[%c0_13, %c0_14, %c0_15] : memref<1x4x512xf32, #tpu.memory_space<vmem>>, vector<1x4x512xf32>
    %29 = vector.shape_cast %28 : vector<1x4x512xf32> to vector<4x512xf32>
    %30 = vector.shape_cast %27 : vector<4x512xf32> to vector<1x4x512xf32>
    tpu.vector_store %arg4[%c0_13, %c0_14, %c0_15], %30 {strides = array<i32>} : memref<1x4x512xf32, #tpu.memory_space<vmem>>, vector<1x4x512xf32>,
    return
  }
  func.func @transform_0(%arg0: i32) -> (i32, i32, i32) {
    %c0_i32 = arith.constant 0 : i32
    %c0_i32_0 = arith.constant 0 : i32
    %c0_i32_1 = arith.constant 0 : i32
    return %arg0, %c0_i32, %c0_i32_0 : i32, i32, i32
  }
  func.func @transform_1(%arg0: i32) -> (i32, i32) {
    %c0_i32 = arith.constant 0 : i32
    %c0_i32_0 = arith.constant 0 : i32
    %c0_i32_1 = arith.constant 0 : i32
    return %c0_i32, %c0_i32_0 : i32, i32
  }
  func.func @transform_2(%arg0: i32) -> (i32, i32) {
    %c0_i32 = arith.constant 0 : i32
    %c0_i32_0 = arith.constant 0 : i32
    %c0_i32_1 = arith.constant 0 : i32
    return %c0_i32, %c0_i32_0 : i32, i32
  }
  func.func @transform_3(%arg0: i32) -> (i32, i32, i32) {
    %c0_i32 = arith.constant 0 : i32
    %c0_i32_0 = arith.constant 0 : i32
    %c0_i32_1 = arith.constant 0 : i32
    return %arg0, %c0_i32, %c0_i32_0 : i32, i32, i32
  }
}

module attributes {stable_mosaic.version = 11 : i64} {
  func.func @_conv_block_kernel(%arg0: i32, %arg1: memref<1x108x4096xf32, #tpu.memory_space<vmem>>, %arg2: memref<1x108xf32, #tpu.memory_space<vmem>>, %arg3: memref<1x1xf32, #tpu.memory_space<vmem>>, %arg4: memref<1x1x4096xf32, #tpu.memory_space<vmem>>) attributes {dimension_semantics = [#tpu.dimension_semantics<parallel>], iteration_bounds = array<i64: 2>, scalar_prefetch = 0 : i64, scratch_operands = 0 : i64, tpu.core_type = #tpu.core_type<tc>, window_params = [{transform_indices = @transform_0, window_bounds = array<i64: 1, 108, 4096>}, {pipeline_mode = #tpu.pipeline_mode<synchronous>, transform_indices = @transform_1, window_bounds = array<i64: 1, 108>}, {pipeline_mode = #tpu.pipeline_mode<synchronous>, transform_indices = @transform_2, window_bounds = array<i64: 1, 1>}, {transform_indices = @transform_3, window_bounds = array<i64: 1, 1, 4096>}]} {
    %c0 = arith.constant 0 : index
    %c0_0 = arith.constant 0 : index
    %0 = vector.load %arg2[%c0, %c0_0] : memref<1x108xf32, #tpu.memory_space<vmem>>, vector<1x108xf32>
    %c0_1 = arith.constant 0 : index
    %c0_2 = arith.constant 0 : index
    %c0_3 = arith.constant 0 : index
    %1 = vector.load %arg1[%c0_1, %c0_2, %c0_3] : memref<1x108x4096xf32, #tpu.memory_space<vmem>>, vector<1x108x4096xf32>
    %2 = vector.shape_cast %1 : vector<1x108x4096xf32> to vector<108x4096xf32>
    %cst = arith.constant dense<0.000000e+00> : vector<1x4096xf32>
    %3 = tpu.matmul %0, %2, %cst {dimension_numbers = #tpu.dot_dimension_numbers<[1], [0], [0], [1], [0, 0, 1, 1], [], []>} : vector<1x108xf32>, vector<108x4096xf32>, vector<1x4096xf32> -> vector<1x4096xf32>
    %c0_4 = arith.constant 0 : index
    %c0_5 = arith.constant 0 : index
    %4 = vector.load %arg3[%c0_4, %c0_5] : memref<1x1xf32, #tpu.memory_space<vmem>>, vector<1x1xf32>
    %5 = vector.broadcast %4 : vector<1x1xf32> to vector<1x4096xf32>
    %6 = arith.addf %3, %5 : vector<1x4096xf32>
    %c0_6 = arith.constant 0 : index
    %c0_7 = arith.constant 0 : index
    %c0_8 = arith.constant 0 : index
    %7 = vector.load %arg4[%c0_6, %c0_7, %c0_8] : memref<1x1x4096xf32, #tpu.memory_space<vmem>>, vector<1x1x4096xf32>
    %8 = vector.shape_cast %7 : vector<1x1x4096xf32> to vector<1x4096xf32>
    %9 = vector.shape_cast %6 : vector<1x4096xf32> to vector<1x1x4096xf32>
    tpu.vector_store %arg4[%c0_6, %c0_7, %c0_8], %9 {strides = array<i32>} : memref<1x1x4096xf32, #tpu.memory_space<vmem>>, vector<1x1x4096xf32>,
    return
  }
  func.func @transform_0(%arg0: i32) -> (i32, i32, i32) {
    %c0_i32 = arith.constant 0 : i32
    %c0_i32_0 = arith.constant 0 : i32
    %c0_i32_1 = arith.constant 0 : i32
    return %arg0, %c0_i32, %c0_i32_0 : i32, i32, i32
  }
  func.func @transform_1(%arg0: i32) -> (i32, i32) {
    %c0_i32 = arith.constant 0 : i32
    %c0_i32_0 = arith.constant 0 : i32
    %c0_i32_1 = arith.constant 0 : i32
    return %c0_i32, %c0_i32_0 : i32, i32
  }
  func.func @transform_2(%arg0: i32) -> (i32, i32) {
    %c0_i32 = arith.constant 0 : i32
    %c0_i32_0 = arith.constant 0 : i32
    %c0_i32_1 = arith.constant 0 : i32
    return %c0_i32, %c0_i32_0 : i32, i32
  }
  func.func @transform_3(%arg0: i32) -> (i32, i32, i32) {
    %c0_i32 = arith.constant 0 : i32
    %c0_i32_0 = arith.constant 0 : i32
    %c0_i32_1 = arith.constant 0 : i32
    return %arg0, %c0_i32, %c0_i32_0 : i32, i32, i32
  }
}

</mosaic_0001>

<llo_original>
// kernel: vae_forward.5
$region0: #{vae_forward.5}
  #allocation0 [shape = 'u32[]', space=smem, size = 0x4, offset = 0x4, fixed_abs, tag = 'smem constant byte address 0x4 - core index']
  #allocation1 [shape = 'u32[72,128]{1,0:T(1,128)}', space=vmem, size = 0x9000, scoped, tag = 'internal scratch']
  %s0 = inlined_call_operand.vmem [shape: f32[2,27,4096], index: 0, kind: input, shape index: {}]
  %s1 = inlined_call_operand.vmem [shape: f32[4,27], index: 1, kind: input, shape index: {}]
  %s2 = inlined_call_operand.vmem [shape: f32[4,1], index: 2, kind: input, shape index: {}]
  %s3 = inlined_call_operand.vmem [shape: f32[2,4,4096], index: 3, kind: output, shape index: {}]
  %s4 = sld [smem:[#allocation0]]
  $region45: #{vae_forward.5} parent=0
    _
  %s6 = ssub.s32 1, %s4
  %s7 = scalar_select 0, %s6, %s4
  loop: start=0, step=1, limit=4
  $region2: #{vae_forward.5} parent=0 // loop_pre_header
    _
  $region3: #{vae_forward.5} parent=0 // loop_header
    %s9 = sphi 0, %s13
    %p10 = scmp.ge.s32.totalorder %s9, 4
    %s19 = sphi 0, %s21
    %s22 = sphi 0, %s19
    %s23 = sphi 0, %s22
    %s39 = sphi 0, %s23
    %s43 = sphi 0, %s43
    %s45 = sphi 0, %s43
    %s46 = sphi 0, %s45
    %s60 = sphi 0, %s46
    %s64 = sphi 0, %s64
    %s66 = sphi 0, %s64
    %s67 = sphi 0, %s66
    %s81 = sphi 0, %s67
    %s87 = sphi 0, %s89
    %s90 = sphi 0, %s87
    %s91 = sphi 0, %s90
    %s107 = sphi 0, %s91
  $region4: #{vae_forward.5} parent=0 // loop_header_branch
    %12 = sbr.rel (%p10) target = $region8
  $region5: #{vae_forward.5} parent=0 // loop_body
    %s14 = ssub.s32 %s9, 1
    %s15 = ssub.s32 %s9, 2
    %s16 = sadd.s32 %s9, 1
    %s17 = ssub.s32 %s9, %s16
    %p18 = scmp.eq.s32.totalorder %s17, 0
    %s20 = sadd.s32 %s19, 1
    %s21 = scalar_select %p18, %s19, %s20
    %p24 = pneg %p18
    %p25 = scmp.eq.s32.totalorder %s9, 1
    %p26 = por %p24, %p25
    %p27 = scmp.ne.s32.totalorder %s19, %s22
    %p28 = scmp.eq.s32.totalorder %s9, 0
    %p29 = por %p27, %p28
    %p30 = scmp.ne.s32.totalorder %s19, %s22
    %p31 = scmp.eq.s32.totalorder %s14, 1
    %p32 = por %p30, %p31
    %p33 = scmp.ne.s32.totalorder %s22, %s23
    %p34 = scmp.eq.s32.totalorder %s14, 0
    %p35 = por %p33, %p34
    %p36 = scmp.ne.s32.totalorder %s22, %s23
    %p37 = scmp.eq.s32.totalorder %s15, 1
    %p38 = por %p36, %p37
    %p40 = scmp.ne.s32.totalorder %s23, %s39
    %p41 = scmp.eq.s32.totalorder %s15, 0
    %p42 = por %p40, %p41
    %s44 = sadd.s32 %s43, 1
    %p47 = scmp.eq.s32.totalorder %s9, 1
    %p48 = scmp.ne.s32.totalorder %s43, %s45
    %p49 = scmp.eq.s32.totalorder %s9, 0
    %p50 = por %p48, %p49
    %p51 = scmp.ne.s32.totalorder %s43, %s45
    %p52 = scmp.eq.s32.totalorder %s14, 1
    %p53 = por %p51, %p52
    %p54 = scmp.ne.s32.totalorder %s45, %s46
    %p55 = scmp.eq.s32.totalorder %s14, 0
    %p56 = por %p54, %p55
    %p57 = scmp.ne.s32.totalorder %s45, %s46
    %p58 = scmp.eq.s32.totalorder %s15, 1
    %p59 = por %p57, %p58
    %p61 = scmp.ne.s32.totalorder %s46, %s60
    %p62 = scmp.eq.s32.totalorder %s15, 0
    %p63 = por %p61, %p62
    %s65 = sadd.s32 %s64, 1
    %p68 = scmp.eq.s32.totalorder %s9, 1
    %p69 = scmp.ne.s32.totalorder %s64, %s66
    %p70 = scmp.eq.s32.totalorder %s9, 0
    %p71 = por %p69, %p70
    %p72 = scmp.ne.s32.totalorder %s64, %s66
    %p73 = scmp.eq.s32.totalorder %s14, 1
    %p74 = por %p72, %p73
    %p75 = scmp.ne.s32.totalorder %s66, %s67
    %p76 = scmp.eq.s32.totalorder %s14, 0
    %p77 = por %p75, %p76
    %p78 = scmp.ne.s32.totalorder %s66, %s67
    %p79 = scmp.eq.s32.totalorder %s15, 1
    %p80 = por %p78, %p79
    %p82 = scmp.ne.s32.totalorder %s67, %s81
    %p83 = scmp.eq.s32.totalorder %s15, 0
    %p84 = por %p82, %p83
    %s85 = ssub.s32 %s9, %s16
    %p86 = scmp.eq.s32.totalorder %s85, 0
    %s88 = sadd.s32 %s87, 1
    %s89 = scalar_select %p86, %s87, %s88
    %p92 = pneg %p86
    %p93 = scmp.eq.s32.totalorder %s9, 1
    %p94 = por %p92, %p93
    %p95 = scmp.ne.s32.totalorder %s87, %s90
    %p96 = scmp.eq.s32.totalorder %s9, 0
    %p97 = por %p95, %p96
    %p98 = scmp.ne.s32.totalorder %s87, %s90
    %p99 = scmp.eq.s32.totalorder %s14, 1
    %p100 = por %p98, %p99
    %p101 = scmp.ne.s32.totalorder %s90, %s91
    %p102 = scmp.eq.s32.totalorder %s14, 0
    %p103 = por %p101, %p102
    %p104 = scmp.ne.s32.totalorder %s90, %s91
    %p105 = scmp.eq.s32.totalorder %s15, 1
    %p106 = por %p104, %p105
    %p108 = scmp.ne.s32.totalorder %s91, %s107
    %p109 = scmp.eq.s32.totalorder %s15, 0
    %p110 = por %p108, %p109
    %p111 = scmp.le.s32.totalorder 1, %s9
    %p112 = scmp.lt.s32.totalorder %s9, 3
    %p113 = pnand %p111, %p112
    %p114 = pneg %p113
    // Predicated region
    $region9: #{vae_forward.5} parent=5 // pred_check
      _
    $region10: #{vae_forward.5} parent=5 // pred_check_branch
      %116 = sbr.rel (%p113) target = $region12
    $region11: #{vae_forward.5} parent=5 // pred_region
      %s117 = ssub.s32 %s9, 1
      // Predicated region
      $region13: #{vae_forward.5} parent=11 // pred_check
        %p118 = pneg %p56
      $region14: #{vae_forward.5} parent=11 // pred_check_branch
        %120 = sbr.rel (%p118) target = $region16
      $region15: #{vae_forward.5} parent=11 // pred_region
        _
      $region16: #{vae_forward.5} parent=11 // pred_fallthru
        _
      // Predicated region
      $region17: #{vae_forward.5} parent=11 // pred_check
        %p121 = pneg %p77
      $region18: #{vae_forward.5} parent=11 // pred_check_branch
        %123 = sbr.rel (%p121) target = $region20
      $region19: #{vae_forward.5} parent=11 // pred_region
        _
      $region20: #{vae_forward.5} parent=11 // pred_fallthru
        _
    $region12: #{vae_forward.5} parent=5 // pred_fallthru
      _
    %p124 = scmp.lt.s32.totalorder %s9, 2
    // Predicated region
    $region21: #{vae_forward.5} parent=5 // pred_check
      %p125 = pneg %p124
    $region22: #{vae_forward.5} parent=5 // pred_check_branch
      %127 = sbr.rel (%p125) target = $region24
    $region23: #{vae_forward.5} parent=5 // pred_region
      // Predicated region
      $region25: #{vae_forward.5} parent=23 // pred_check
        %p128 = pneg %p29
      $region26: #{vae_forward.5} parent=23 // pred_check_branch
        %130 = sbr.rel (%p128) target = $region28
      $region27: #{vae_forward.5} parent=23 // pred_region
        %p131 = scmp.lt.s32.totalorder %s9, 1
        %s132 = scalar_select %p131, %s9, 1
        %s133 = smul.addr %s132, 128
        %s134 = smul.addr %s133, 8
        %s135 = scalar_lea.vmem %s0, %s134
      $region28: #{vae_forward.5} parent=23 // pred_fallthru
        _
    $region24: #{vae_forward.5} parent=5 // pred_fallthru
      _
    %p136 = scmp.le.s32.totalorder 1, %s9
    %p137 = scmp.lt.s32.totalorder %s9, 3
    %p138 = pnand %p136, %p137
    %p139 = pneg %p138
    // Predicated region
    $region29: #{vae_forward.5} parent=5 // pred_check
      _
    $region30: #{vae_forward.5} parent=5 // pred_check_branch
      %141 = sbr.rel (%p138) target = $region32
    $region31: #{vae_forward.5} parent=5 // pred_region
      %s142 = ssub.s32 %s9, 1
      %p143 = scmp.lt.s32.totalorder %s14, 1
      %s144 = scalar_select %p143, %s14, 1
      %s145 = smul.addr %s144, 128
      %s146 = smul.addr %s145, 8
      %s147 = scalar_lea.vmem %s0, %s146
      %p148 = pneg %p35
      %p149 = pneg %p32
      %p150 = pneg %p56
      %p151 = pneg %p53
      %p152 = pneg %p77
      %p153 = pneg %p74
      %p154 = pneg %p103
      %p155 = pneg %p100
      %p156 = scmp.lt.s32.totalorder %s14, 1
      %s157 = scalar_select %p156, %s14, 1
      %s158 = smul.addr %s157, 32
      %s159 = smul.addr %s158, 4
      %s160 = scalar_lea.vmem %s3, %s159
      %p161 = scmp.lt.s32.totalorder %s14, 1
      %s162 = scalar_select %p161, %s14, 1
      %s163 = smul.addr %s162, 128
      %s164 = smul.addr %s163, 8
      %s165 = scalar_lea.vmem %s0, %s164
      %p166 = scmp.lt.s32.totalorder %s14, 1
      %s167 = scalar_select %p166, %s14, 1
      %s168 = smul.addr %s167, 32
      %s169 = smul.addr %s168, 4
      %s170 = scalar_lea.vmem %s3, %s169
      %v171 = vld [vmem:[%s1] sm:$0xf]
      %v172 = vld [vmem:[%s165] sm:$0xff]
      %v173 = vld [vmem:[%s165 + $0x8] sm:$0xff]
      %v174 = vld [vmem:[%s165 + $0x10] sm:$0xff]
      %v175 = vld [vmem:[%s165 + $0x18] sm:$0xff]
      %v176 = vld [vmem:[%s165 + $0x20] sm:$0xff]
      %v177 = vld [vmem:[%s165 + $0x28] sm:$0xff]
      %v178 = vld [vmem:[%s165 + $0x30] sm:$0xff]
      %v179 = vld [vmem:[%s165 + $0x38] sm:$0xff]
      %v180 = vld [vmem:[%s165 + $0x40] sm:$0xff]
      %v181 = vld [vmem:[%s165 + $0x48] sm:$0xff]
      %v182 = vld [vmem:[%s165 + $0x50] sm:$0xff]
      %v183 = vld [vmem:[%s165 + $0x58] sm:$0xff]
      %v184 = vld [vmem:[%s165 + $0x60] sm:$0xff]
      %v185 = vld [vmem:[%s165 + $0x68] sm:$0xff]
      %v186 = vld [vmem:[%s165 + $0x70] sm:$0xff]
      %v187 = vld [vmem:[%s165 + $0x78] sm:$0xff]
      %v188 = vld [vmem:[%s165 + $0x80] sm:$0xff]
      %v189 = vld [vmem:[%s165 + $0x88] sm:$0xff]
      %v190 = vld [vmem:[%s165 + $0x90] sm:$0xff]
      %v191 = vld [vmem:[%s165 + $0x98] sm:$0xff]
      %v192 = vld [vmem:[%s165 + $0xa0] sm:$0xff]
      %v193 = vld [vmem:[%s165 + $0xa8] sm:$0xff]
      %v194 = vld [vmem:[%s165 + $0xb0] sm:$0xff]
      %v195 = vld [vmem:[%s165 + $0xb8] sm:$0xff]
      %v196 = vld [vmem:[%s165 + $0xc0] sm:$0xff]
      %v197 = vld [vmem:[%s165 + $0xc8] sm:$0xff]
      %v198 = vld [vmem:[%s165 + $0xd0] sm:$0xff]
      %v199 = vld [vmem:[%s165 + $0xd8] sm:$0xff]
      %v200 = vld [vmem:[%s165 + $0xe0] sm:$0xff]
      %v201 = vld [vmem:[%s165 + $0xe8] sm:$0xff]
      %v202 = vld [vmem:[%s165 + $0xf0] sm:$0xff]
      %v203 = vld [vmem:[%s165 + $0xf8] sm:$0xff]
      %v204 = vld [vmem:[%s165 + $0x100] sm:$0xff]
      %v205 = vld [vmem:[%s165 + $0x108] sm:$0xff]
      %v206 = vld [vmem:[%s165 + $0x110] sm:$0xff]
      %v207 = vld [vmem:[%s165 + $0x118] sm:$0xff]
      %v208 = vld [vmem:[%s165 + $0x120] sm:$0xff]
      %v209 = vld [vmem:[%s165 + $0x128] sm:$0xff]
      %v210 = vld [vmem:[%s165 + $0x130] sm:$0xff]
      %v211 = vld [vmem:[%s165 + $0x138] sm:$0xff]
      %v212 = vld [vmem:[%s165 + $0x140] sm:$0xff]
      %v213 = vld [vmem:[%s165 + $0x148] sm:$0xff]
      %v214 = vld [vmem:[%s165 + $0x150] sm:$0xff]
      %v215 = vld [vmem:[%s165 + $0x158] sm:$0xff]
      %v216 = vld [vmem:[%s165 + $0x160] sm:$0xff]
      %v217 = vld [vmem:[%s165 + $0x168] sm:$0xff]
      %v218 = vld [vmem:[%s165 + $0x170] sm:$0xff]
      %v219 = vld [vmem:[%s165 + $0x178] sm:$0xff]
      %v220 = vld [vmem:[%s165 + $0x180] sm:$0xff]
      %v221 = vld [vmem:[%s165 + $0x188] sm:$0xff]
      %v222 = vld [vmem:[%s165 + $0x190] sm:$0xff]
      %v223 = vld [vmem:[%s165 + $0x198] sm:$0xff]
      %v224 = vld [vmem:[%s165 + $0x1a0] sm:$0xff]
      %v225 = vld [vmem:[%s165 + $0x1a8] sm:$0xff]
      %v226 = vld [vmem:[%s165 + $0x1b0] sm:$0xff]
      %v227 = vld [vmem:[%s165 + $0x1b8] sm:$0xff]
      %v228 = vld [vmem:[%s165 + $0x1c0] sm:$0xff]
      %v229 = vld [vmem:[%s165 + $0x1c8] sm:$0xff]
      %v230 = vld [vmem:[%s165 + $0x1d0] sm:$0xff]
      %v231 = vld [vmem:[%s165 + $0x1d8] sm:$0xff]
      %v232 = vld [vmem:[%s165 + $0x1e0] sm:$0xff]
      %v233 = vld [vmem:[%s165 + $0x1e8] sm:$0xff]
      %v234 = vld [vmem:[%s165 + $0x1f0] sm:$0xff]
      %v235 = vld [vmem:[%s165 + $0x1f8] sm:$0xff]
      %v236 = vld [vmem:[%s165 + $0x200] sm:$0xff]
      %v237 = vld [vmem:[%s165 + $0x208] sm:$0xff]
      %v238 = vld [vmem:[%s165 + $0x210] sm:$0xff]
      %v239 = vld [vmem:[%s165 + $0x218] sm:$0xff]
      %v240 = vld [vmem:[%s165 + $0x220] sm:$0xff]
      %v241 = vld [vmem:[%s165 + $0x228] sm:$0xff]
      %v242 = vld [vmem:[%s165 + $0x230] sm:$0xff]
      %v243 = vld [vmem:[%s165 + $0x238] sm:$0xff]
      %v244 = vld [vmem:[%s165 + $0x240] sm:$0xff]
      %v245 = vld [vmem:[%s165 + $0x248] sm:$0xff]
      %v246 = vld [vmem:[%s165 + $0x250] sm:$0xff]
      %v247 = vld [vmem:[%s165 + $0x258] sm:$0xff]
      %v248 = vld [vmem:[%s165 + $0x260] sm:$0xff]
      %v249 = vld [vmem:[%s165 + $0x268] sm:$0xff]
      %v250 = vld [vmem:[%s165 + $0x270] sm:$0xff]
      %v251 = vld [vmem:[%s165 + $0x278] sm:$0xff]
      %v252 = vld [vmem:[%s165 + $0x280] sm:$0xff]
      %v253 = vld [vmem:[%s165 + $0x288] sm:$0xff]
      %v254 = vld [vmem:[%s165 + $0x290] sm:$0xff]
      %v255 = vld [vmem:[%s165 + $0x298] sm:$0xff]
      %v256 = vld [vmem:[%s165 + $0x2a0] sm:$0xff]
      %v257 = vld [vmem:[%s165 + $0x2a8] sm:$0xff]
      %v258 = vld [vmem:[%s165 + $0x2b0] sm:$0xff]
      %v259 = vld [vmem:[%s165 + $0x2b8] sm:$0xff]
      %v260 = vld [vmem:[%s165 + $0x2c0] sm:$0xff]
      %v261 = vld [vmem:[%s165 + $0x2c8] sm:$0xff]
      %v262 = vld [vmem:[%s165 + $0x2d0] sm:$0xff]
      %v263 = vld [vmem:[%s165 + $0x2d8] sm:$0xff]
      %v264 = vld [vmem:[%s165 + $0x2e0] sm:$0xff]
      %v265 = vld [vmem:[%s165 + $0x2e8] sm:$0xff]
      %v266 = vld [vmem:[%s165 + $0x2f0] sm:$0xff]
      %v267 = vld [vmem:[%s165 + $0x2f8] sm:$0xff]
      %v268 = vld [vmem:[%s165 + $0x300] sm:$0x7]
      %v269 = vld [vmem:[%s165 + $0x308] sm:$0x7]
      %v270 = vld [vmem:[%s165 + $0x310] sm:$0x7]
      %v271 = vld [vmem:[%s165 + $0x318] sm:$0x7]
      %v272 = vld [vmem:[%s165 + $0x320] sm:$0x7]
      %v273 = vld [vmem:[%s165 + $0x328] sm:$0x7]
      %v274 = vld [vmem:[%s165 + $0x330] sm:$0x7]
      %v275 = vld [vmem:[%s165 + $0x338] sm:$0x7]
      %v276 = vld [vmem:[%s165 + $0x340] sm:$0x7]
      %v277 = vld [vmem:[%s165 + $0x348] sm:$0x7]
      %v278 = vld [vmem:[%s165 + $0x350] sm:$0x7]
      %v279 = vld [vmem:[%s165 + $0x358] sm:$0x7]
      %v280 = vld [vmem:[%s165 + $0x360] sm:$0x7]
      %v281 = vld [vmem:[%s165 + $0x368] sm:$0x7]
      %v282 = vld [vmem:[%s165 + $0x370] sm:$0x7]
      %v283 = vld [vmem:[%s165 + $0x378] sm:$0x7]
      %v284 = vld [vmem:[%s165 + $0x380] sm:$0x7]
      %v285 = vld [vmem:[%s165 + $0x388] sm:$0x7]
      %v286 = vld [vmem:[%s165 + $0x390] sm:$0x7]
      %v287 = vld [vmem:[%s165 + $0x398] sm:$0x7]
      %v288 = vld [vmem:[%s165 + $0x3a0] sm:$0x7]
      %v289 = vld [vmem:[%s165 + $0x3a8] sm:$0x7]
      %v290 = vld [vmem:[%s165 + $0x3b0] sm:$0x7]
      %v291 = vld [vmem:[%s165 + $0x3b8] sm:$0x7]
      %v292 = vld [vmem:[%s165 + $0x3c0] sm:$0x7]
      %v293 = vld [vmem:[%s165 + $0x3c8] sm:$0x7]
      %v294 = vld [vmem:[%s165 + $0x3d0] sm:$0x7]
      %v295 = vld [vmem:[%s165 + $0x3d8] sm:$0x7]
      %v296 = vld [vmem:[%s165 + $0x3e0] sm:$0x7]
      %v297 = vld [vmem:[%s165 + $0x3e8] sm:$0x7]
      %v298 = vld [vmem:[%s165 + $0x3f0] sm:$0x7]
      %v299 = vld [vmem:[%s165 + $0x3f8] sm:$0x7]
      %v300 = vld [vmem:[%s2] sm:$0xf]
      %302 = vset.pattern.permute.xlu0 0
      %303 = vperm.xlu0 %302, %v300
      %v304 = vpop.permute.xlu0 %303
      %vm306 = vcmask 220160
      %v308 = vsel %vm306, %v171, 0
      %vm310 = vcmask 1042432
      %v312 = vsel %vm310, %v268, 0
      %v315 = vsel %vm310, %v269, 0
      %v318 = vsel %vm310, %v270, 0
      %v321 = vsel %vm310, %v271, 0
      %v324 = vsel %vm310, %v272, 0
      %v327 = vsel %vm310, %v273, 0
      %v330 = vsel %vm310, %v274, 0
      %v333 = vsel %vm310, %v275, 0
      %v336 = vsel %vm310, %v276, 0
      %v339 = vsel %vm310, %v277, 0
      %v342 = vsel %vm310, %v278, 0
      %v345 = vsel %vm310, %v279, 0
      %v348 = vsel %vm310, %v280, 0
      %v351 = vsel %vm310, %v281, 0
      %v354 = vsel %vm310, %v282, 0
      %v357 = vsel %vm310, %v283, 0
      %v360 = vsel %vm310, %v284, 0
      %v363 = vsel %vm310, %v285, 0
      %v366 = vsel %vm310, %v286, 0
      %v369 = vsel %vm310, %v287, 0
      %v372 = vsel %vm310, %v288, 0
      %v375 = vsel %vm310, %v289, 0
      %v378 = vsel %vm310, %v290, 0
      %v381 = vsel %vm310, %v291, 0
      %v384 = vsel %vm310, %v292, 0
      %v387 = vsel %vm310, %v293, 0
      %v390 = vsel %vm310, %v294, 0
      %v393 = vsel %vm310, %v295, 0
      %v396 = vsel %vm310, %v296, 0
      %v399 = vsel %vm310, %v297, 0
      %v402 = vsel %vm310, %v298, 0
      %v405 = vsel %vm310, %v299, 0
      %407 = vmatpush.msra.mxu0 0.0
      %408 = vmatpush.msra.mxu0 0.0
      %409 = vmatpush.msra.mxu0 0.0
      %410 = vmatpush.msra.mxu0 0.0
      %411 = vmatpush.msra.mxu0 0.0
      %412 = vmatpush.msra.mxu0 0.0
      %413 = vmatpush.msra.mxu0 0.0
      %414 = vmatpush.msra.mxu0 0.0
      %415 = vmatpush.msra.mxu0 0.0
      %416 = vmatpush.msra.mxu0 0.0
      %417 = vmatpush.msra.mxu0 0.0
      %418 = vmatpush.msra.mxu0 0.0
      %419 = vmatpush.msra.mxu0 %v312
      %420 = vmatpush.msra.mxu0 %v236
      %421 = vmatpush.msra.mxu0 %v204
      %422 = vmatpush.msra.mxu0 %v172
      %423 = vmatmul.f32.gmra.mxu0 %v308
      %v424 = vpop.f32.mrf.mxu0
      %v425 = vadd.f32 %v304, %v424
      %426 = vdwg.mxu0
      %427 = vmatpush.msra.mxu0 0.0
      %428 = vmatpush.msra.mxu0 0.0
      %429 = vmatpush.msra.mxu0 0.0
      %430 = vmatpush.msra.mxu0 0.0
      %431 = vmatpush.msra.mxu0 0.0
      %432 = vmatpush.msra.mxu0 0.0
      %433 = vmatpush.msra.mxu0 0.0
      %434 = vmatpush.msra.mxu0 0.0
      %435 = vmatpush.msra.mxu0 0.0
      %436 = vmatpush.msra.mxu0 0.0
      %437 = vmatpush.msra.mxu0 0.0
      %438 = vmatpush.msra.mxu0 0.0
      %439 = vmatpush.msra.mxu0 %v315
      %440 = vmatpush.msra.mxu0 %v237
      %441 = vmatpush.msra.mxu0 %v205
      %442 = vmatpush.msra.mxu0 %v173
      %443 = vmatmul.f32.gmra.mxu0 %v308
      %v444 = vpop.f32.mrf.mxu0
      %v445 = vadd.f32 %v304, %v444
      %446 = vdwg.mxu0
      %447 = vmatpush.msra.mxu0 0.0
      %448 = vmatpush.msra.mxu0 0.0
      %449 = vmatpush.msra.mxu0 0.0
      %450 = vmatpush.msra.mxu0 0.0
      %451 = vmatpush.msra.mxu0 0.0
      %452 = vmatpush.msra.mxu0 0.0
      %453 = vmatpush.msra.mxu0 0.0
      %454 = vmatpush.msra.mxu0 0.0
      %455 = vmatpush.msra.mxu0 0.0
      %456 = vmatpush.msra.mxu0 0.0
      %457 = vmatpush.msra.mxu0 0.0
      %458 = vmatpush.msra.mxu0 0.0
      %459 = vmatpush.msra.mxu0 %v318
      %460 = vmatpush.msra.mxu0 %v238
      %461 = vmatpush.msra.mxu0 %v206
      %462 = vmatpush.msra.mxu0 %v174
      %463 = vmatmul.f32.gmra.mxu0 %v308
      %v464 = vpop.f32.mrf.mxu0
      %v465 = vadd.f32 %v304, %v464
      %466 = vdwg.mxu0
      %467 = vmatpush.msra.mxu0 0.0
      %468 = vmatpush.msra.mxu0 0.0
      %469 = vmatpush.msra.mxu0 0.0
      %470 = vmatpush.msra.mxu0 0.0
      %471 = vmatpush.msra.mxu0 0.0
      %472 = vmatpush.msra.mxu0 0.0
      %473 = vmatpush.msra.mxu0 0.0
      %474 = vmatpush.msra.mxu0 0.0
      %475 = vmatpush.msra.mxu0 0.0
      %476 = vmatpush.msra.mxu0 0.0
      %477 = vmatpush.msra.mxu0 0.0
      %478 = vmatpush.msra.mxu0 0.0
      %479 = vmatpush.msra.mxu0 %v321
      %480 = vmatpush.msra.mxu0 %v239
      %481 = vmatpush.msra.mxu0 %v207
      %482 = vmatpush.msra.mxu0 %v175
      %483 = vmatmul.f32.gmra.mxu0 %v308
      %v484 = vpop.f32.mrf.mxu0
      %v485 = vadd.f32 %v304, %v484
      %486 = vdwg.mxu0
      %487 = vmatpush.msra.mxu0 0.0
      %488 = vmatpush.msra.mxu0 0.0
      %489 = vmatpush.msra.mxu0 0.0
      %490 = vmatpush.msra.mxu0 0.0
      %491 = vmatpush.msra.mxu0 0.0
      %492 = vmatpush.msra.mxu0 0.0
      %493 = vmatpush.msra.mxu0 0.0
      %494 = vmatpush.msra.mxu0 0.0
      %495 = vmatpush.msra.mxu0 0.0
      %496 = vmatpush.msra.mxu0 0.0
      %497 = vmatpush.msra.mxu0 0.0
      %498 = vmatpush.msra.mxu0 0.0
      %499 = vmatpush.msra.mxu0 %v324
      %500 = vmatpush.msra.mxu0 %v240
      %501 = vmatpush.msra.mxu0 %v208
      %502 = vmatpush.msra.mxu0 %v176
      %503 = vmatmul.f32.gmra.mxu0 %v308
      %v504 = vpop.f32.mrf.mxu0
      %v505 = vadd.f32 %v304, %v504
      %506 = vdwg.mxu0
      %507 = vmatpush.msra.mxu0 0.0
      %508 = vmatpush.msra.mxu0 0.0
      %509 = vmatpush.msra.mxu0 0.0
      %510 = vmatpush.msra.mxu0 0.0
      %511 = vmatpush.msra.mxu0 0.0
      %512 = vmatpush.msra.mxu0 0.0
      %513 = vmatpush.msra.mxu0 0.0
      %514 = vmatpush.msra.mxu0 0.0
      %515 = vmatpush.msra.mxu0 0.0
      %516 = vmatpush.msra.mxu0 0.0
      %517 = vmatpush.msra.mxu0 0.0
      %518 = vmatpush.msra.mxu0 0.0
      %519 = vmatpush.msra.mxu0 %v327
      %520 = vmatpush.msra.mxu0 %v241
      %521 = vmatpush.msra.mxu0 %v209
      %522 = vmatpush.msra.mxu0 %v177
      %523 = vmatmul.f32.gmra.mxu0 %v308
      %v524 = vpop.f32.mrf.mxu0
      %v525 = vadd.f32 %v304, %v524
      %526 = vdwg.mxu0
      %527 = vmatpush.msra.mxu0 0.0
      %528 = vmatpush.msra.mxu0 0.0
      %529 = vmatpush.msra.mxu0 0.0
      %530 = vmatpush.msra.mxu0 0.0
      %531 = vmatpush.msra.mxu0 0.0
      %532 = vmatpush.msra.mxu0 0.0
      %533 = vmatpush.msra.mxu0 0.0
      %534 = vmatpush.msra.mxu0 0.0
      %535 = vmatpush.msra.mxu0 0.0
      %536 = vmatpush.msra.mxu0 0.0
      %537 = vmatpush.msra.mxu0 0.0
      %538 = vmatpush.msra.mxu0 0.0
      %539 = vmatpush.msra.mxu0 %v330
      %540 = vmatpush.msra.mxu0 %v242
      %541 = vmatpush.msra.mxu0 %v210
      %542 = vmatpush.msra.mxu0 %v178
      %543 = vmatmul.f32.gmra.mxu0 %v308
      %v544 = vpop.f32.mrf.mxu0
      %v545 = vadd.f32 %v304, %v544
      %546 = vdwg.mxu0
      %547 = vmatpush.msra.mxu0 0.0
      %548 = vmatpush.msra.mxu0 0.0
      %549 = vmatpush.msra.mxu0 0.0
      %550 = vmatpush.msra.mxu0 0.0
      %551 = vmatpush.msra.mxu0 0.0
      %552 = vmatpush.msra.mxu0 0.0
      %553 = vmatpush.msra.mxu0 0.0
      %554 = vmatpush.msra.mxu0 0.0
      %555 = vmatpush.msra.mxu0 0.0
      %556 = vmatpush.msra.mxu0 0.0
      %557 = vmatpush.msra.mxu0 0.0
      %558 = vmatpush.msra.mxu0 0.0
      %559 = vmatpush.msra.mxu0 %v333
      %560 = vmatpush.msra.mxu0 %v243
      %561 = vmatpush.msra.mxu0 %v211
      %562 = vmatpush.msra.mxu0 %v179
      %563 = vmatmul.f32.gmra.mxu0 %v308
      %v564 = vpop.f32.mrf.mxu0
      %v565 = vadd.f32 %v304, %v564
      %566 = vdwg.mxu0
      %567 = vmatpush.msra.mxu0 0.0
      %568 = vmatpush.msra.mxu0 0.0
      %569 = vmatpush.msra.mxu0 0.0
      %570 = vmatpush.msra.mxu0 0.0
      %571 = vmatpush.msra.mxu0 0.0
      %572 = vmatpush.msra.mxu0 0.0
      %573 = vmatpush.msra.mxu0 0.0
      %574 = vmatpush.msra.mxu0 0.0
      %575 = vmatpush.msra.mxu0 0.0
      %576 = vmatpush.msra.mxu0 0.0
      %577 = vmatpush.msra.mxu0 0.0
      %578 = vmatpush.msra.mxu0 0.0
      %579 = vmatpush.msra.mxu0 %v336
      %580 = vmatpush.msra.mxu0 %v244
      %581 = vmatpush.msra.mxu0 %v212
      %582 = vmatpush.msra.mxu0 %v180
      %583 = vmatmul.f32.gmra.mxu0 %v308
      %v584 = vpop.f32.mrf.mxu0
      %v585 = vadd.f32 %v304, %v584
      %586 = vdwg.mxu0
      %587 = vmatpush.msra.mxu0 0.0
      %588 = vmatpush.msra.mxu0 0.0
      %589 = vmatpush.msra.mxu0 0.0
      %590 = vmatpush.msra.mxu0 0.0
      %591 = vmatpush.msra.mxu0 0.0
      %592 = vmatpush.msra.mxu0 0.0
      %593 = vmatpush.msra.mxu0 0.0
      %594 = vmatpush.msra.mxu0 0.0
      %595 = vmatpush.msra.mxu0 0.0
      %596 = vmatpush.msra.mxu0 0.0
      %597 = vmatpush.msra.mxu0 0.0
      %598 = vmatpush.msra.mxu0 0.0
      %599 = vmatpush.msra.mxu0 %v339
      %600 = vmatpush.msra.mxu0 %v245
      %601 = vmatpush.msra.mxu0 %v213
      %602 = vmatpush.msra.mxu0 %v181
      %603 = vmatmul.f32.gmra.mxu0 %v308
      %v604 = vpop.f32.mrf.mxu0
      %v605 = vadd.f32 %v304, %v604
      %606 = vdwg.mxu0
      %607 = vmatpush.msra.mxu0 0.0
      %608 = vmatpush.msra.mxu0 0.0
      %609 = vmatpush.msra.mxu0 0.0
      %610 = vmatpush.msra.mxu0 0.0
      %611 = vmatpush.msra.mxu0 0.0
      %612 = vmatpush.msra.mxu0 0.0
      %613 = vmatpush.msra.mxu0 0.0
      %614 = vmatpush.msra.mxu0 0.0
      %615 = vmatpush.msra.mxu0 0.0
      %616 = vmatpush.msra.mxu0 0.0
      %617 = vmatpush.msra.mxu0 0.0
      %618 = vmatpush.msra.mxu0 0.0
      %619 = vmatpush.msra.mxu0 %v342
      %620 = vmatpush.msra.mxu0 %v246
      %621 = vmatpush.msra.mxu0 %v214
      %622 = vmatpush.msra.mxu0 %v182
      %623 = vmatmul.f32.gmra.mxu0 %v308
      %v624 = vpop.f32.mrf.mxu0
      %v625 = vadd.f32 %v304, %v624
      %626 = vdwg.mxu0
      %627 = vmatpush.msra.mxu0 0.0
      %628 = vmatpush.msra.mxu0 0.0
      %629 = vmatpush.msra.mxu0 0.0
      %630 = vmatpush.msra.mxu0 0.0
      %631 = vmatpush.msra.mxu0 0.0
      %632 = vmatpush.msra.mxu0 0.0
      %633 = vmatpush.msra.mxu0 0.0
      %634 = vmatpush.msra.mxu0 0.0
      %635 = vmatpush.msra.mxu0 0.0
      %636 = vmatpush.msra.mxu0 0.0
      %637 = vmatpush.msra.mxu0 0.0
      %638 = vmatpush.msra.mxu0 0.0
      %639 = vmatpush.msra.mxu0 %v345
      %640 = vmatpush.msra.mxu0 %v247
      %641 = vmatpush.msra.mxu0 %v215
      %642 = vmatpush.msra.mxu0 %v183
      %643 = vmatmul.f32.gmra.mxu0 %v308
      %v644 = vpop.f32.mrf.mxu0
      %v645 = vadd.f32 %v304, %v644
      %646 = vdwg.mxu0
      %647 = vmatpush.msra.mxu0 0.0
      %648 = vmatpush.msra.mxu0 0.0
      %649 = vmatpush.msra.mxu0 0.0
      %650 = vmatpush.msra.mxu0 0.0
      %651 = vmatpush.msra.mxu0 0.0
      %652 = vmatpush.msra.mxu0 0.0
      %653 = vmatpush.msra.mxu0 0.0
      %654 = vmatpush.msra.mxu0 0.0
      %655 = vmatpush.msra.mxu0 0.0
      %656 = vmatpush.msra.mxu0 0.0
      %657 = vmatpush.msra.mxu0 0.0
      %658 = vmatpush.msra.mxu0 0.0
      %659 = vmatpush.msra.mxu0 %v348
      %660 = vmatpush.msra.mxu0 %v248
      %661 = vmatpush.msra.mxu0 %v216
      %662 = vmatpush.msra.mxu0 %v184
      %663 = vmatmul.f32.gmra.mxu0 %v308
      %v664 = vpop.f32.mrf.mxu0
      %v665 = vadd.f32 %v304, %v664
      %666 = vdwg.mxu0
      %667 = vmatpush.msra.mxu0 0.0
      %668 = vmatpush.msra.mxu0 0.0
      %669 = vmatpush.msra.mxu0 0.0
      %670 = vmatpush.msra.mxu0 0.0
      %671 = vmatpush.msra.mxu0 0.0
      %672 = vmatpush.msra.mxu0 0.0
      %673 = vmatpush.msra.mxu0 0.0
      %674 = vmatpush.msra.mxu0 0.0
      %675 = vmatpush.msra.mxu0 0.0
      %676 = vmatpush.msra.mxu0 0.0
      %677 = vmatpush.msra.mxu0 0.0
      %678 = vmatpush.msra.mxu0 0.0
      %679 = vmatpush.msra.mxu0 %v351
      %680 = vmatpush.msra.mxu0 %v249
      %681 = vmatpush.msra.mxu0 %v217
      %682 = vmatpush.msra.mxu0 %v185
      %683 = vmatmul.f32.gmra.mxu0 %v308
      %v684 = vpop.f32.mrf.mxu0
      %v685 = vadd.f32 %v304, %v684
      %686 = vdwg.mxu0
      %687 = vmatpush.msra.mxu0 0.0
      %688 = vmatpush.msra.mxu0 0.0
      %689 = vmatpush.msra.mxu0 0.0
      %690 = vmatpush.msra.mxu0 0.0
      %691 = vmatpush.msra.mxu0 0.0
      %692 = vmatpush.msra.mxu0 0.0
      %693 = vmatpush.msra.mxu0 0.0
      %694 = vmatpush.msra.mxu0 0.0
      %695 = vmatpush.msra.mxu0 0.0
      %696 = vmatpush.msra.mxu0 0.0
      %697 = vmatpush.msra.mxu0 0.0
      %698 = vmatpush.msra.mxu0 0.0
      %699 = vmatpush.msra.mxu0 %v354
      %700 = vmatpush.msra.mxu0 %v250
      %701 = vmatpush.msra.mxu0 %v218
      %702 = vmatpush.msra.mxu0 %v186
      %703 = vmatmul.f32.gmra.mxu0 %v308
      %v704 = vpop.f32.mrf.mxu0
      %v705 = vadd.f32 %v304, %v704
      %706 = vdwg.mxu0
      %707 = vmatpush.msra.mxu0 0.0
      %708 = vmatpush.msra.mxu0 0.0
      %709 = vmatpush.msra.mxu0 0.0
      %710 = vmatpush.msra.mxu0 0.0
      %711 = vmatpush.msra.mxu0 0.0
      %712 = vmatpush.msra.mxu0 0.0
      %713 = vmatpush.msra.mxu0 0.0
      %714 = vmatpush.msra.mxu0 0.0
      %715 = vmatpush.msra.mxu0 0.0
      %716 = vmatpush.msra.mxu0 0.0
      %717 = vmatpush.msra.mxu0 0.0
      %718 = vmatpush.msra.mxu0 0.0
      %719 = vmatpush.msra.mxu0 %v357
      %720 = vmatpush.msra.mxu0 %v251
      %721 = vmatpush.msra.mxu0 %v219
      %722 = vmatpush.msra.mxu0 %v187
      %723 = vmatmul.f32.gmra.mxu0 %v308
      %v724 = vpop.f32.mrf.mxu0
      %v725 = vadd.f32 %v304, %v724
      %726 = vdwg.mxu0
      %727 = vmatpush.msra.mxu0 0.0
      %728 = vmatpush.msra.mxu0 0.0
      %729 = vmatpush.msra.mxu0 0.0
      %730 = vmatpush.msra.mxu0 0.0
      %731 = vmatpush.msra.mxu0 0.0
      %732 = vmatpush.msra.mxu0 0.0
      %733 = vmatpush.msra.mxu0 0.0
      %734 = vmatpush.msra.mxu0 0.0
      %735 = vmatpush.msra.mxu0 0.0
      %736 = vmatpush.msra.mxu0 0.0
      %737 = vmatpush.msra.mxu0 0.0
      %738 = vmatpush.msra.mxu0 0.0
      %739 = vmatpush.msra.mxu0 %v360
      %740 = vmatpush.msra.mxu0 %v252
      %741 = vmatpush.msra.mxu0 %v220
      %742 = vmatpush.msra.mxu0 %v188
      %743 = vmatmul.f32.gmra.mxu0 %v308
      %v744 = vpop.f32.mrf.mxu0
      %v745 = vadd.f32 %v304, %v744
      %746 = vdwg.mxu0
      %747 = vmatpush.msra.mxu0 0.0
      %748 = vmatpush.msra.mxu0 0.0
      %749 = vmatpush.msra.mxu0 0.0
      %750 = vmatpush.msra.mxu0 0.0
      %751 = vmatpush.msra.mxu0 0.0
      %752 = vmatpush.msra.mxu0 0.0
      %753 = vmatpush.msra.mxu0 0.0
      %754 = vmatpush.msra.mxu0 0.0
      %755 = vmatpush.msra.mxu0 0.0
      %756 = vmatpush.msra.mxu0 0.0
      %757 = vmatpush.msra.mxu0 0.0
      %758 = vmatpush.msra.mxu0 0.0
      %759 = vmatpush.msra.mxu0 %v363
      %760 = vmatpush.msra.mxu0 %v253
      %761 = vmatpush.msra.mxu0 %v221
      %762 = vmatpush.msra.mxu0 %v189
      %763 = vmatmul.f32.gmra.mxu0 %v308
      %v764 = vpop.f32.mrf.mxu0
      %v765 = vadd.f32 %v304, %v764
      %766 = vdwg.mxu0
      %767 = vmatpush.msra.mxu0 0.0
      %768 = vmatpush.msra.mxu0 0.0
      %769 = vmatpush.msra.mxu0 0.0
      %770 = vmatpush.msra.mxu0 0.0
      %771 = vmatpush.msra.mxu0 0.0
      %772 = vmatpush.msra.mxu0 0.0
      %773 = vmatpush.msra.mxu0 0.0
      %774 = vmatpush.msra.mxu0 0.0
      %775 = vmatpush.msra.mxu0 0.0
      %776 = vmatpush.msra.mxu0 0.0
      %777 = vmatpush.msra.mxu0 0.0
      %778 = vmatpush.msra.mxu0 0.0
      %779 = vmatpush.msra.mxu0 %v366
      %780 = vmatpush.msra.mxu0 %v254
      %781 = vmatpush.msra.mxu0 %v222
      %782 = vmatpush.msra.mxu0 %v190
      %783 = vmatmul.f32.gmra.mxu0 %v308
      %v784 = vpop.f32.mrf.mxu0
      %v785 = vadd.f32 %v304, %v784
      %786 = vdwg.mxu0
      %787 = vmatpush.msra.mxu0 0.0
      %788 = vmatpush.msra.mxu0 0.0
      %789 = vmatpush.msra.mxu0 0.0
      %790 = vmatpush.msra.mxu0 0.0
      %791 = vmatpush.msra.mxu0 0.0
      %792 = vmatpush.msra.mxu0 0.0
      %793 = vmatpush.msra.mxu0 0.0
      %794 = vmatpush.msra.mxu0 0.0
      %795 = vmatpush.msra.mxu0 0.0
      %796 = vmatpush.msra.mxu0 0.0
      %797 = vmatpush.msra.mxu0 0.0
      %798 = vmatpush.msra.mxu0 0.0
      %799 = vmatpush.msra.mxu0 %v369
      %800 = vmatpush.msra.mxu0 %v255
      %801 = vmatpush.msra.mxu0 %v223
      %802 = vmatpush.msra.mxu0 %v191
      %803 = vmatmul.f32.gmra.mxu0 %v308
      %v804 = vpop.f32.mrf.mxu0
      %v805 = vadd.f32 %v304, %v804
      %806 = vdwg.mxu0
      %807 = vmatpush.msra.mxu0 0.0
      %808 = vmatpush.msra.mxu0 0.0
      %809 = vmatpush.msra.mxu0 0.0
      %810 = vmatpush.msra.mxu0 0.0
      %811 = vmatpush.msra.mxu0 0.0
      %812 = vmatpush.msra.mxu0 0.0
      %813 = vmatpush.msra.mxu0 0.0
      %814 = vmatpush.msra.mxu0 0.0
      %815 = vmatpush.msra.mxu0 0.0
      %816 = vmatpush.msra.mxu0 0.0
      %817 = vmatpush.msra.mxu0 0.0
      %818 = vmatpush.msra.mxu0 0.0
      %819 = vmatpush.msra.mxu0 %v372
      %820 = vmatpush.msra.mxu0 %v256
      %821 = vmatpush.msra.mxu0 %v224
      %822 = vmatpush.msra.mxu0 %v192
      %823 = vmatmul.f32.gmra.mxu0 %v308
      %v824 = vpop.f32.mrf.mxu0
      %v825 = vadd.f32 %v304, %v824
      %826 = vdwg.mxu0
      %827 = vmatpush.msra.mxu0 0.0
      %828 = vmatpush.msra.mxu0 0.0
      %829 = vmatpush.msra.mxu0 0.0
      %830 = vmatpush.msra.mxu0 0.0
      %831 = vmatpush.msra.mxu0 0.0
      %832 = vmatpush.msra.mxu0 0.0
      %833 = vmatpush.msra.mxu0 0.0
      %834 = vmatpush.msra.mxu0 0.0
      %835 = vmatpush.msra.mxu0 0.0
      %836 = vmatpush.msra.mxu0 0.0
      %837 = vmatpush.msra.mxu0 0.0
      %838 = vmatpush.msra.mxu0 0.0
      %839 = vmatpush.msra.mxu0 %v375
      %840 = vmatpush.msra.mxu0 %v257
      %841 = vmatpush.msra.mxu0 %v225
      %842 = vmatpush.msra.mxu0 %v193
      %843 = vmatmul.f32.gmra.mxu0 %v308
      %v844 = vpop.f32.mrf.mxu0
      %v845 = vadd.f32 %v304, %v844
      %846 = vdwg.mxu0
      %847 = vmatpush.msra.mxu0 0.0
      %848 = vmatpush.msra.mxu0 0.0
      %849 = vmatpush.msra.mxu0 0.0
      %850 = vmatpush.msra.mxu0 0.0
      %851 = vmatpush.msra.mxu0 0.0
      %852 = vmatpush.msra.mxu0 0.0
      %853 = vmatpush.msra.mxu0 0.0
      %854 = vmatpush.msra.mxu0 0.0
      %855 = vmatpush.msra.mxu0 0.0
      %856 = vmatpush.msra.mxu0 0.0
      %857 = vmatpush.msra.mxu0 0.0
      %858 = vmatpush.msra.mxu0 0.0
      %859 = vmatpush.msra.mxu0 %v378
      %860 = vmatpush.msra.mxu0 %v258
      %861 = vmatpush.msra.mxu0 %v226
      %862 = vmatpush.msra.mxu0 %v194
      %863 = vmatmul.f32.gmra.mxu0 %v308
      %v864 = vpop.f32.mrf.mxu0
      %v865 = vadd.f32 %v304, %v864
      %866 = vdwg.mxu0
      %867 = vmatpush.msra.mxu0 0.0
      %868 = vmatpush.msra.mxu0 0.0
      %869 = vmatpush.msra.mxu0 0.0
      %870 = vmatpush.msra.mxu0 0.0
      %871 = vmatpush.msra.mxu0 0.0
      %872 = vmatpush.msra.mxu0 0.0
      %873 = vmatpush.msra.mxu0 0.0
      %874 = vmatpush.msra.mxu0 0.0
      %875 = vmatpush.msra.mxu0 0.0
      %876 = vmatpush.msra.mxu0 0.0
      %877 = vmatpush.msra.mxu0 0.0
      %878 = vmatpush.msra.mxu0 0.0
      %879 = vmatpush.msra.mxu0 %v381
      %880 = vmatpush.msra.mxu0 %v259
      %881 = vmatpush.msra.mxu0 %v227
      %882 = vmatpush.msra.mxu0 %v195
      %883 = vmatmul.f32.gmra.mxu0 %v308
      %v884 = vpop.f32.mrf.mxu0
      %v885 = vadd.f32 %v304, %v884
      %886 = vdwg.mxu0
      %887 = vmatpush.msra.mxu0 0.0
      %888 = vmatpush.msra.mxu0 0.0
      %889 = vmatpush.msra.mxu0 0.0
      %890 = vmatpush.msra.mxu0 0.0
      %891 = vmatpush.msra.mxu0 0.0
      %892 = vmatpush.msra.mxu0 0.0
      %893 = vmatpush.msra.mxu0 0.0
      %894 = vmatpush.msra.mxu0 0.0
      %895 = vmatpush.msra.mxu0 0.0
      %896 = vmatpush.msra.mxu0 0.0
      %897 = vmatpush.msra.mxu0 0.0
      %898 = vmatpush.msra.mxu0 0.0
      %899 = vmatpush.msra.mxu0 %v384
      %900 = vmatpush.msra.mxu0 %v260
      %901 = vmatpush.msra.mxu0 %v228
      %902 = vmatpush.msra.mxu0 %v196
      %903 = vmatmul.f32.gmra.mxu0 %v308
      %v904 = vpop.f32.mrf.mxu0
      %v905 = vadd.f32 %v304, %v904
      %906 = vdwg.mxu0
      %907 = vmatpush.msra.mxu0 0.0
      %908 = vmatpush.msra.mxu0 0.0
      %909 = vmatpush.msra.mxu0 0.0
      %910 = vmatpush.msra.mxu0 0.0
      %911 = vmatpush.msra.mxu0 0.0
      %912 = vmatpush.msra.mxu0 0.0
      %913 = vmatpush.msra.mxu0 0.0
      %914 = vmatpush.msra.mxu0 0.0
      %915 = vmatpush.msra.mxu0 0.0
      %916 = vmatpush.msra.mxu0 0.0
      %917 = vmatpush.msra.mxu0 0.0
      %918 = vmatpush.msra.mxu0 0.0
      %919 = vmatpush.msra.mxu0 %v387
      %920 = vmatpush.msra.mxu0 %v261
      %921 = vmatpush.msra.mxu0 %v229
      %922 = vmatpush.msra.mxu0 %v197
      %923 = vmatmul.f32.gmra.mxu0 %v308
      %v924 = vpop.f32.mrf.mxu0
      %v925 = vadd.f32 %v304, %v924
      %926 = vdwg.mxu0
      %927 = vmatpush.msra.mxu0 0.0
      %928 = vmatpush.msra.mxu0 0.0
      %929 = vmatpush.msra.mxu0 0.0
      %930 = vmatpush.msra.mxu0 0.0
      %931 = vmatpush.msra.mxu0 0.0
      %932 = vmatpush.msra.mxu0 0.0
      %933 = vmatpush.msra.mxu0 0.0
      %934 = vmatpush.msra.mxu0 0.0
      %935 = vmatpush.msra.mxu0 0.0
      %936 = vmatpush.msra.mxu0 0.0
      %937 = vmatpush.msra.mxu0 0.0
      %938 = vmatpush.msra.mxu0 0.0
      %939 = vmatpush.msra.mxu0 %v390
      %940 = vmatpush.msra.mxu0 %v262
      %941 = vmatpush.msra.mxu0 %v230
      %942 = vmatpush.msra.mxu0 %v198
      %943 = vmatmul.f32.gmra.mxu0 %v308
      %v944 = vpop.f32.mrf.mxu0
      %v945 = vadd.f32 %v304, %v944
      %946 = vdwg.mxu0
      %947 = vmatpush.msra.mxu0 0.0
      %948 = vmatpush.msra.mxu0 0.0
      %949 = vmatpush.msra.mxu0 0.0
      %950 = vmatpush.msra.mxu0 0.0
      %951 = vmatpush.msra.mxu0 0.0
      %952 = vmatpush.msra.mxu0 0.0
      %953 = vmatpush.msra.mxu0 0.0
      %954 = vmatpush.msra.mxu0 0.0
      %955 = vmatpush.msra.mxu0 0.0
      %956 = vmatpush.msra.mxu0 0.0
      %957 = vmatpush.msra.mxu0 0.0
      %958 = vmatpush.msra.mxu0 0.0
      %959 = vmatpush.msra.mxu0 %v393
      %960 = vmatpush.msra.mxu0 %v263
      %961 = vmatpush.msra.mxu0 %v231
      %962 = vmatpush.msra.mxu0 %v199
      %963 = vmatmul.f32.gmra.mxu0 %v308
      %v964 = vpop.f32.mrf.mxu0
      %v965 = vadd.f32 %v304, %v964
      %966 = vdwg.mxu0
      %967 = vmatpush.msra.mxu0 0.0
      %968 = vmatpush.msra.mxu0 0.0
      %969 = vmatpush.msra.mxu0 0.0
      %970 = vmatpush.msra.mxu0 0.0
      %971 = vmatpush.msra.mxu0 0.0
      %972 = vmatpush.msra.mxu0 0.0
      %973 = vmatpush.msra.mxu0 0.0
      %974 = vmatpush.msra.mxu0 0.0
      %975 = vmatpush.msra.mxu0 0.0
      %976 = vmatpush.msra.mxu0 0.0
      %977 = vmatpush.msra.mxu0 0.0
      %978 = vmatpush.msra.mxu0 0.0
      %979 = vmatpush.msra.mxu0 %v396
      %980 = vmatpush.msra.mxu0 %v264
      %981 = vmatpush.msra.mxu0 %v232
      %982 = vmatpush.msra.mxu0 %v200
      %983 = vmatmul.f32.gmra.mxu0 %v308
      %v984 = vpop.f32.mrf.mxu0
      %v985 = vadd.f32 %v304, %v984
      %986 = vdwg.mxu0
      %987 = vmatpush.msra.mxu0 0.0
      %988 = vmatpush.msra.mxu0 0.0
      %989 = vmatpush.msra.mxu0 0.0
      %990 = vmatpush.msra.mxu0 0.0
      %991 = vmatpush.msra.mxu0 0.0
      %992 = vmatpush.msra.mxu0 0.0
      %993 = vmatpush.msra.mxu0 0.0
      %994 = vmatpush.msra.mxu0 0.0
      %995 = vmatpush.msra.mxu0 0.0
      %996 = vmatpush.msra.mxu0 0.0
      %997 = vmatpush.msra.mxu0 0.0
      %998 = vmatpush.msra.mxu0 0.0
      %999 = vmatpush.msra.mxu0 %v399
      %1000 = vmatpush.msra.mxu0 %v265
      %1001 = vmatpush.msra.mxu0 %v233
      %1002 = vmatpush.msra.mxu0 %v201
      %1003 = vmatmul.f32.gmra.mxu0 %v308
      %v1004 = vpop.f32.mrf.mxu0
      %v1005 = vadd.f32 %v304, %v1004
      %1006 = vdwg.mxu0
      %1007 = vmatpush.msra.mxu0 0.0
      %1008 = vmatpush.msra.mxu0 0.0
      %1009 = vmatpush.msra.mxu0 0.0
      %1010 = vmatpush.msra.mxu0 0.0
      %1011 = vmatpush.msra.mxu0 0.0
      %1012 = vmatpush.msra.mxu0 0.0
      %1013 = vmatpush.msra.mxu0 0.0
      %1014 = vmatpush.msra.mxu0 0.0
      %1015 = vmatpush.msra.mxu0 0.0
      %1016 = vmatpush.msra.mxu0 0.0
      %1017 = vmatpush.msra.mxu0 0.0
      %1018 = vmatpush.msra.mxu0 0.0
      %1019 = vmatpush.msra.mxu0 %v402
      %1020 = vmatpush.msra.mxu0 %v266
      %1021 = vmatpush.msra.mxu0 %v234
      %1022 = vmatpush.msra.mxu0 %v202
      %1023 = vmatmul.f32.gmra.mxu0 %v308
      %v1024 = vpop.f32.mrf.mxu0
      %v1025 = vadd.f32 %v304, %v1024
      %1026 = vdwg.mxu0
      %1027 = vmatpush.msra.mxu0 0.0
      %1028 = vmatpush.msra.mxu0 0.0
      %1029 = vmatpush.msra.mxu0 0.0
      %1030 = vmatpush.msra.mxu0 0.0
      %1031 = vmatpush.msra.mxu0 0.0
      %1032 = vmatpush.msra.mxu0 0.0
      %1033 = vmatpush.msra.mxu0 0.0
      %1034 = vmatpush.msra.mxu0 0.0
      %1035 = vmatpush.msra.mxu0 0.0
      %1036 = vmatpush.msra.mxu0 0.0
      %1037 = vmatpush.msra.mxu0 0.0
      %1038 = vmatpush.msra.mxu0 0.0
      %1039 = vmatpush.msra.mxu0 %v405
      %1040 = vmatpush.msra.mxu0 %v267
      %1041 = vmatpush.msra.mxu0 %v235
      %1042 = vmatpush.msra.mxu0 %v203
      %1043 = vmatmul.f32.gmra.mxu0 %v308
      %v1044 = vpop.f32.mrf.mxu0
      %v1045 = vadd.f32 %v304, %v1044
      %1046 = vdwg.mxu0
      %vm1047 = vcmask 1043456
      %v1048 = vsel %vm1047, %v425, 0.0
      %v1049 = vsel %vm1047, %v445, 0.0
      %v1050 = vadd.f32 %v1048, %v1049
      %v1051 = vsel %vm1047, %v465, 0.0
      %v1052 = vadd.f32 %v1050, %v1051
      %v1053 = vsel %vm1047, %v485, 0.0
      %v1054 = vadd.f32 %v1052, %v1053
      %v1055 = vsel %vm1047, %v505, 0.0
      %v1056 = vadd.f32 %v1054, %v1055
      %v1057 = vsel %vm1047, %v525, 0.0
      %v1058 = vadd.f32 %v1056, %v1057
      %v1059 = vsel %vm1047, %v545, 0.0
      %v1060 = vadd.f32 %v1058, %v1059
      %v1061 = vsel %vm1047, %v565, 0.0
      %v1062 = vadd.f32 %v1060, %v1061
      %v1063 = vsel %vm1047, %v585, 0.0
      %v1064 = vadd.f32 %v1062, %v1063
      %v1065 = vsel %vm1047, %v605, 0.0
      %v1066 = vadd.f32 %v1064, %v1065
      %v1067 = vsel %vm1047, %v625, 0.0
      %v1068 = vadd.f32 %v1066, %v1067
      %v1069 = vsel %vm1047, %v645, 0.0
      %v1070 = vadd.f32 %v1068, %v1069
      %v1071 = vsel %vm1047, %v665, 0.0
      %v1072 = vadd.f32 %v1070, %v1071
      %v1073 = vsel %vm1047, %v685, 0.0
      %v1074 = vadd.f32 %v1072, %v1073
      %v1075 = vsel %vm1047, %v705, 0.0
      %v1076 = vadd.f32 %v1074, %v1075
      %v1077 = vsel %vm1047, %v725, 0.0
      %v1078 = vadd.f32 %v1076, %v1077
      %v1079 = vsel %vm1047, %v745, 0.0
      %v1080 = vadd.f32 %v1078, %v1079
      %v1081 = vsel %vm1047, %v765, 0.0
      %v1082 = vadd.f32 %v1080, %v1081
      %v1083 = vsel %vm1047, %v785, 0.0
      %v1084 = vadd.f32 %v1082, %v1083
      %v1085 = vsel %vm1047, %v805, 0.0
      %v1086 = vadd.f32 %v1084, %v1085
      %v1087 = vsel %vm1047, %v825, 0.0
      %v1088 = vadd.f32 %v1086, %v1087
      %v1089 = vsel %vm1047, %v845, 0.0
      %v1090 = vadd.f32 %v1088, %v1089
      %v1091 = vsel %vm1047, %v865, 0.0
      %v1092 = vadd.f32 %v1090, %v1091
      %v1093 = vsel %vm1047, %v885, 0.0
      %v1094 = vadd.f32 %v1092, %v1093
      %v1095 = vsel %vm1047, %v905, 0.0
      %v1096 = vadd.f32 %v1094, %v1095
      %v1097 = vsel %vm1047, %v925, 0.0
      %v1098 = vadd.f32 %v1096, %v1097
      %v1099 = vsel %vm1047, %v945, 0.0
      %v1100 = vadd.f32 %v1098, %v1099
      %v1101 = vsel %vm1047, %v965, 0.0
      %v1102 = vadd.f32 %v1100, %v1101
      %v1103 = vsel %vm1047, %v985, 0.0
      %v1104 = vadd.f32 %v1102, %v1103
      %v1105 = vsel %vm1047, %v1005, 0.0
      %v1106 = vadd.f32 %v1104, %v1105
      %v1107 = vsel %vm1047, %v1025, 0.0
      %v1108 = vadd.f32 %v1106, %v1107
      %v1109 = vsel %vm1047, %v1045, 0.0
      %v1110 = vadd.f32 %v1108, %v1109
      %1111 = vadd.xlane.f32.xlu0 %v1110
      %v1112 = vpop.xlane.xlu0 %1111
      %v1113 = vrcp.pop 4096.0
      %v1114 = vmul.f32 4096.0, %v1113
      %v1115 = vsub.f32 1.0, %v1114
      %v1116 = vmul.f32 %v1113, %v1115
      %v1117 = vadd.f32 %v1113, %v1116
      %vm1118 = vweird.f32 %v1113
      %v1119 = vsel %vm1118, %v1113, %v1117
      %v1120 = vmul.f32 %v1112, %v1119
      %v1121 = vsub.f32 %v425, %v1120
      %v1122 = vsub.f32 %v445, %v1120
      %v1123 = vsub.f32 %v465, %v1120
      %v1124 = vsub.f32 %v485, %v1120
      %v1125 = vsub.f32 %v505, %v1120
      %v1126 = vsub.f32 %v525, %v1120
      %v1127 = vsub.f32 %v545, %v1120
      %v1128 = vsub.f32 %v565, %v1120
      %v1129 = vsub.f32 %v585, %v1120
      %v1130 = vsub.f32 %v605, %v1120
      %v1131 = vsub.f32 %v625, %v1120
      %v1132 = vsub.f32 %v645, %v1120
      %v1133 = vsub.f32 %v665, %v1120
      %v1134 = vsub.f32 %v685, %v1120
      %v1135 = vsub.f32 %v705, %v1120
      %v1136 = vsub.f32 %v725, %v1120
      %v1137 = vsub.f32 %v745, %v1120
      %v1138 = vsub.f32 %v765, %v1120
      %v1139 = vsub.f32 %v785, %v1120
      %v1140 = vsub.f32 %v805, %v1120
      %v1141 = vsub.f32 %v825, %v1120
      %v1142 = vsub.f32 %v845, %v1120
      %v1143 = vsub.f32 %v865, %v1120
      %v1144 = vsub.f32 %v885, %v1120
      %v1145 = vsub.f32 %v905, %v1120
      %v1146 = vsub.f32 %v925, %v1120
      %v1147 = vsub.f32 %v945, %v1120
      %v1148 = vsub.f32 %v965, %v1120
      %v1149 = vsub.f32 %v985, %v1120
      %v1150 = vsub.f32 %v1005, %v1120
      %v1151 = vsub.f32 %v1025, %v1120
      %v1152 = vsub.f32 %v1045, %v1120
      %v1153 = vmul.f32 %v1121, %v1121
      %v1154 = vmul.f32 %v1122, %v1122
      %v1155 = vmul.f32 %v1123, %v1123
      %v1156 = vmul.f32 %v1124, %v1124
      %v1157 = vmul.f32 %v1125, %v1125
      %v1158 = vmul.f32 %v1126, %v1126
      %v1159 = vmul.f32 %v1127, %v1127
      %v1160 = vmul.f32 %v1128, %v1128
      %v1161 = vmul.f32 %v1129, %v1129
      %v1162 = vmul.f32 %v1130, %v1130
      %v1163 = vmul.f32 %v1131, %v1131
      %v1164 = vmul.f32 %v1132, %v1132
      %v1165 = vmul.f32 %v1133, %v1133
      %v1166 = vmul.f32 %v1134, %v1134
      %v1167 = vmul.f32 %v1135, %v1135
      %v1168 = vmul.f32 %v1136, %v1136
      %v1169 = vmul.f32 %v1137, %v1137
      %v1170 = vmul.f32 %v1138, %v1138
      %v1171 = vmul.f32 %v1139, %v1139
      %v1172 = vmul.f32 %v1140, %v1140
      %v1173 = vmul.f32 %v1141, %v1141
      %v1174 = vmul.f32 %v1142, %v1142
      %v1175 = vmul.f32 %v1143, %v1143
      %v1176 = vmul.f32 %v1144, %v1144
      %v1177 = vmul.f32 %v1145, %v1145
      %v1178 = vmul.f32 %v1146, %v1146
      %v1179 = vmul.f32 %v1147, %v1147
      %v1180 = vmul.f32 %v1148, %v1148
      %v1181 = vmul.f32 %v1149, %v1149
      %v1182 = vmul.f32 %v1150, %v1150
      %v1183 = vmul.f32 %v1151, %v1151
      %v1184 = vmul.f32 %v1152, %v1152
      %v1185 = vsel %vm1047, %v1153, 0.0
      %v1186 = vsel %vm1047, %v1154, 0.0
      %v1187 = vadd.f32 %v1185, %v1186
      %v1188 = vsel %vm1047, %v1155, 0.0
      %v1189 = vadd.f32 %v1187, %v1188
      %v1190 = vsel %vm1047, %v1156, 0.0
      %v1191 = vadd.f32 %v1189, %v1190
      %v1192 = vsel %vm1047, %v1157, 0.0
      %v1193 = vadd.f32 %v1191, %v1192
      %v1194 = vsel %vm1047, %v1158, 0.0
      %v1195 = vadd.f32 %v1193, %v1194
      %v1196 = vsel %vm1047, %v1159, 0.0
      %v1197 = vadd.f32 %v1195, %v1196
      %v1198 = vsel %vm1047, %v1160, 0.0
      %v1199 = vadd.f32 %v1197, %v1198
      %v1200 = vsel %vm1047, %v1161, 0.0
      %v1201 = vadd.f32 %v1199, %v1200
      %v1202 = vsel %vm1047, %v1162, 0.0
      %v1203 = vadd.f32 %v1201, %v1202
      %v1204 = vsel %vm1047, %v1163, 0.0
      %v1205 = vadd.f32 %v1203, %v1204
      %v1206 = vsel %vm1047, %v1164, 0.0
      %v1207 = vadd.f32 %v1205, %v1206
      %v1208 = vsel %vm1047, %v1165, 0.0
      %v1209 = vadd.f32 %v1207, %v1208
      %v1210 = vsel %vm1047, %v1166, 0.0
      %v1211 = vadd.f32 %v1209, %v1210
      %v1212 = vsel %vm1047, %v1167, 0.0
      %v1213 = vadd.f32 %v1211, %v1212
      %v1214 = vsel %vm1047, %v1168, 0.0
      %v1215 = vadd.f32 %v1213, %v1214
      %v1216 = vsel %vm1047, %v1169, 0.0
      %v1217 = vadd.f32 %v1215, %v1216
      %v1218 = vsel %vm1047, %v1170, 0.0
      %v1219 = vadd.f32 %v1217, %v1218
      %v1220 = vsel %vm1047, %v1171, 0.0
      %v1221 = vadd.f32 %v1219, %v1220
      %v1222 = vsel %vm1047, %v1172, 0.0
      %v1223 = vadd.f32 %v1221, %v1222
      %v1224 = vsel %vm1047, %v1173, 0.0
      %v1225 = vadd.f32 %v1223, %v1224
      %v1226 = vsel %vm1047, %v1174, 0.0
      %v1227 = vadd.f32 %v1225, %v1226
      %v1228 = vsel %vm1047, %v1175, 0.0
      %v1229 = vadd.f32 %v1227, %v1228
      %v1230 = vsel %vm1047, %v1176, 0.0
      %v1231 = vadd.f32 %v1229, %v1230
      %v1232 = vsel %vm1047, %v1177, 0.0
      %v1233 = vadd.f32 %v1231, %v1232
      %v1234 = vsel %vm1047, %v1178, 0.0
      %v1235 = vadd.f32 %v1233, %v1234
      %v1236 = vsel %vm1047, %v1179, 0.0
      %v1237 = vadd.f32 %v1235, %v1236
      %v1238 = vsel %vm1047, %v1180, 0.0
      %v1239 = vadd.f32 %v1237, %v1238
      %v1240 = vsel %vm1047, %v1181, 0.0
      %v1241 = vadd.f32 %v1239, %v1240
      %v1242 = vsel %vm1047, %v1182, 0.0
      %v1243 = vadd.f32 %v1241, %v1242
      %v1244 = vsel %vm1047, %v1183, 0.0
      %v1245 = vadd.f32 %v1243, %v1244
      %v1246 = vsel %vm1047, %v1184, 0.0
      %v1247 = vadd.f32 %v1245, %v1246
      %1248 = vadd.xlane.f32.xlu0 %v1247
      %v1249 = vpop.xlane.xlu0 %1248
      %v1250 = vmul.f32 %v1249, %v1119
      %v1251 = vadd.f32 %v1250, 1e-05
      %v1252 = vrsqrt.pop %v1251
      %v1253 = vmul.f32 %v1252, %v1251
      %v1254 = vmul.f32 %v1253, %v1252
      %v1255 = vmul.f32 0.5, %v1254
      %v1256 = vsub.f32 1.5, %v1255
      %v1257 = vmul.f32 %v1252, %v1256
      %vm1258 = vweird.f32 %v1251
      %vm1259 = vweird.f32 %v1252
      %vm1260 = vmor %vm1258, %vm1259
      %v1261 = vsel %vm1260, %v1252, %v1257
      %v1262 = vmul.f32 %v1121, %v1261
      %v1263 = vmul.f32 %v1122, %v1261
      %v1264 = vmul.f32 %v1123, %v1261
      %v1265 = vmul.f32 %v1124, %v1261
      %v1266 = vmul.f32 %v1125, %v1261
      %v1267 = vmul.f32 %v1126, %v1261
      %v1268 = vmul.f32 %v1127, %v1261
      %v1269 = vmul.f32 %v1128, %v1261
      %v1270 = vmul.f32 %v1129, %v1261
      %v1271 = vmul.f32 %v1130, %v1261
      %v1272 = vmul.f32 %v1131, %v1261
      %v1273 = vmul.f32 %v1132, %v1261
      %v1274 = vmul.f32 %v1133, %v1261
      %v1275 = vmul.f32 %v1134, %v1261
      %v1276 = vmul.f32 %v1135, %v1261
      %v1277 = vmul.f32 %v1136, %v1261
      %v1278 = vmul.f32 %v1137, %v1261
      %v1279 = vmul.f32 %v1138, %v1261
      %v1280 = vmul.f32 %v1139, %v1261
      %v1281 = vmul.f32 %v1140, %v1261
      %v1282 = vmul.f32 %v1141, %v1261
      %v1283 = vmul.f32 %v1142, %v1261
      %v1284 = vmul.f32 %v1143, %v1261
      %v1285 = vmul.f32 %v1144, %v1261
      %v1286 = vmul.f32 %v1145, %v1261
      %v1287 = vmul.f32 %v1146, %v1261
      %v1288 = vmul.f32 %v1147, %v1261
      %v1289 = vmul.f32 %v1148, %v1261
      %v1290 = vmul.f32 %v1149, %v1261
      %v1291 = vmul.f32 %v1150, %v1261
      %v1292 = vmul.f32 %v1151, %v1261
      %v1293 = vmul.f32 %v1152, %v1261
      %vm1294 = vcmp.ge.f32.partialorder %v1262, 0.0
      %vm1295 = vcmp.ge.f32.partialorder %v1263, 0.0
      %vm1296 = vcmp.ge.f32.partialorder %v1264, 0.0
      %vm1297 = vcmp.ge.f32.partialorder %v1265, 0.0
      %vm1298 = vcmp.ge.f32.partialorder %v1266, 0.0
      %vm1299 = vcmp.ge.f32.partialorder %v1267, 0.0
      %vm1300 = vcmp.ge.f32.partialorder %v1268, 0.0
      %vm1301 = vcmp.ge.f32.partialorder %v1269, 0.0
      %vm1302 = vcmp.ge.f32.partialorder %v1270, 0.0
      %vm1303 = vcmp.ge.f32.partialorder %v1271, 0.0
      %vm1304 = vcmp.ge.f32.partialorder %v1272, 0.0
      %vm1305 = vcmp.ge.f32.partialorder %v1273, 0.0
      %vm1306 = vcmp.ge.f32.partialorder %v1274, 0.0
      %vm1307 = vcmp.ge.f32.partialorder %v1275, 0.0
      %vm1308 = vcmp.ge.f32.partialorder %v1276, 0.0
      %vm1309 = vcmp.ge.f32.partialorder %v1277, 0.0
      %vm1310 = vcmp.ge.f32.partialorder %v1278, 0.0
      %vm1311 = vcmp.ge.f32.partialorder %v1279, 0.0
      %vm1312 = vcmp.ge.f32.partialorder %v1280, 0.0
      %vm1313 = vcmp.ge.f32.partialorder %v1281, 0.0
      %vm1314 = vcmp.ge.f32.partialorder %v1282, 0.0
      %vm1315 = vcmp.ge.f32.partialorder %v1283, 0.0
      %vm1316 = vcmp.ge.f32.partialorder %v1284, 0.0
      %vm1317 = vcmp.ge.f32.partialorder %v1285, 0.0
      %vm1318 = vcmp.ge.f32.partialorder %v1286, 0.0
      %vm1319 = vcmp.ge.f32.partialorder %v1287, 0.0
      %vm1320 = vcmp.ge.f32.partialorder %v1288, 0.0
      %vm1321 = vcmp.ge.f32.partialorder %v1289, 0.0
      %vm1322 = vcmp.ge.f32.partialorder %v1290, 0.0
      %vm1323 = vcmp.ge.f32.partialorder %v1291, 0.0
      %vm1324 = vcmp.ge.f32.partialorder %v1292, 0.0
      %vm1325 = vcmp.ge.f32.partialorder %v1293, 0.0
      %v1326 = vmul.f32 %v1262, 0.01
      %v1327 = vmul.f32 %v1263, 0.01
      %v1328 = vmul.f32 %v1264, 0.01
      %v1329 = vmul.f32 %v1265, 0.01
      %v1330 = vmul.f32 %v1266, 0.01
      %v1331 = vmul.f32 %v1267, 0.01
      %v1332 = vmul.f32 %v1268, 0.01
      %v1333 = vmul.f32 %v1269, 0.01
      %v1334 = vmul.f32 %v1270, 0.01
      %v1335 = vmul.f32 %v1271, 0.01
      %v1336 = vmul.f32 %v1272, 0.01
      %v1337 = vmul.f32 %v1273, 0.01
      %v1338 = vmul.f32 %v1274, 0.01
      %v1339 = vmul.f32 %v1275, 0.01
      %v1340 = vmul.f32 %v1276, 0.01
      %v1341 = vmul.f32 %v1277, 0.01
      %v1342 = vmul.f32 %v1278, 0.01
      %v1343 = vmul.f32 %v1279, 0.01
      %v1344 = vmul.f32 %v1280, 0.01
      %v1345 = vmul.f32 %v1281, 0.01
      %v1346 = vmul.f32 %v1282, 0.01
      %v1347 = vmul.f32 %v1283, 0.01
      %v1348 = vmul.f32 %v1284, 0.01
      %v1349 = vmul.f32 %v1285, 0.01
      %v1350 = vmul.f32 %v1286, 0.01
      %v1351 = vmul.f32 %v1287, 0.01
      %v1352 = vmul.f32 %v1288, 0.01
      %v1353 = vmul.f32 %v1289, 0.01
      %v1354 = vmul.f32 %v1290, 0.01
      %v1355 = vmul.f32 %v1291, 0.01
      %v1356 = vmul.f32 %v1292, 0.01
      %v1357 = vmul.f32 %v1293, 0.01
      %v1358 = vsel %vm1294, %v1262, %v1326
      %v1359 = vsel %vm1295, %v1263, %v1327
      %v1360 = vsel %vm1296, %v1264, %v1328
      %v1361 = vsel %vm1297, %v1265, %v1329
      %v1362 = vsel %vm1298, %v1266, %v1330
      %v1363 = vsel %vm1299, %v1267, %v1331
      %v1364 = vsel %vm1300, %v1268, %v1332
      %v1365 = vsel %vm1301, %v1269, %v1333
      %v1366 = vsel %vm1302, %v1270, %v1334
      %v1367 = vsel %vm1303, %v1271, %v1335
      %v1368 = vsel %vm1304, %v1272, %v1336
      %v1369 = vsel %vm1305, %v1273, %v1337
      %v1370 = vsel %vm1306, %v1274, %v1338
      %v1371 = vsel %vm1307, %v1275, %v1339
      %v1372 = vsel %vm1308, %v1276, %v1340
      %v1373 = vsel %vm1309, %v1277, %v1341
      %v1374 = vsel %vm1310, %v1278, %v1342
      %v1375 = vsel %vm1311, %v1279, %v1343
      %v1376 = vsel %vm1312, %v1280, %v1344
      %v1377 = vsel %vm1313, %v1281, %v1345
      %v1378 = vsel %vm1314, %v1282, %v1346
      %v1379 = vsel %vm1315, %v1283, %v1347
      %v1380 = vsel %vm1316, %v1284, %v1348
      %v1381 = vsel %vm1317, %v1285, %v1349
      %v1382 = vsel %vm1318, %v1286, %v1350
      %v1383 = vsel %vm1319, %v1287, %v1351
      %v1384 = vsel %vm1320, %v1288, %v1352
      %v1385 = vsel %vm1321, %v1289, %v1353
      %v1386 = vsel %vm1322, %v1290, %v1354
      %v1387 = vsel %vm1323, %v1291, %v1355
      %v1388 = vsel %vm1324, %v1292, %v1356
      %v1389 = vsel %vm1325, %v1293, %v1357
      %v1422 = vrot.slane %v1359, 4
      %v1423 = vrot.slane %v1361, 4
      %v1424 = vrot.slane %v1363, 4
      %v1425 = vrot.slane %v1365, 4
      %v1426 = vrot.slane %v1367, 4
      %v1427 = vrot.slane %v1369, 4
      %v1428 = vrot.slane %v1371, 4
      %v1429 = vrot.slane %v1373, 4
      %v1430 = vrot.slane %v1375, 4
      %v1431 = vrot.slane %v1377, 4
      %v1432 = vrot.slane %v1379, 4
      %v1433 = vrot.slane %v1381, 4
      %v1434 = vrot.slane %v1383, 4
      %v1435 = vrot.slane %v1385, 4
      %v1436 = vrot.slane %v1387, 4
      %v1437 = vrot.slane %v1389, 4
      %v1438 = vsel %vm1047, %v1358, %v1422
      %v1439 = vsel %vm1047, %v1360, %v1423
      %v1440 = vsel %vm1047, %v1362, %v1424
      %v1441 = vsel %vm1047, %v1364, %v1425
      %v1442 = vsel %vm1047, %v1366, %v1426
      %v1443 = vsel %vm1047, %v1368, %v1427
      %v1444 = vsel %vm1047, %v1370, %v1428
      %v1445 = vsel %vm1047, %v1372, %v1429
      %v1446 = vsel %vm1047, %v1374, %v1430
      %v1447 = vsel %vm1047, %v1376, %v1431
      %v1448 = vsel %vm1047, %v1378, %v1432
      %v1449 = vsel %vm1047, %v1380, %v1433
      %v1450 = vsel %vm1047, %v1382, %v1434
      %v1451 = vsel %vm1047, %v1384, %v1435
      %v1452 = vsel %vm1047, %v1386, %v1436
      %v1453 = vsel %vm1047, %v1388, %v1437
      %1470 = vst [vmem:[%s170] sm:$0xff] %v1438
      %1471 = vst [vmem:[%s170 + $0x8] sm:$0xff] %v1439
      %1472 = vst [vmem:[%s170 + $0x10] sm:$0xff] %v1440
      %1473 = vst [vmem:[%s170 + $0x18] sm:$0xff] %v1441
      %1474 = vst [vmem:[%s170 + $0x20] sm:$0xff] %v1442
      %1475 = vst [vmem:[%s170 + $0x28] sm:$0xff] %v1443
      %1476 = vst [vmem:[%s170 + $0x30] sm:$0xff] %v1444
      %1477 = vst [vmem:[%s170 + $0x38] sm:$0xff] %v1445
      %1478 = vst [vmem:[%s170 + $0x40] sm:$0xff] %v1446
      %1479 = vst [vmem:[%s170 + $0x48] sm:$0xff] %v1447
      %1480 = vst [vmem:[%s170 + $0x50] sm:$0xff] %v1448
      %1481 = vst [vmem:[%s170 + $0x58] sm:$0xff] %v1449
      %1482 = vst [vmem:[%s170 + $0x60] sm:$0xff] %v1450
      %1483 = vst [vmem:[%s170 + $0x68] sm:$0xff] %v1451
      %1484 = vst [vmem:[%s170 + $0x70] sm:$0xff] %v1452
      %1485 = vst [vmem:[%s170 + $0x78] sm:$0xff] %v1453
      %p1486 = scmp.lt.s32.totalorder %s14, 1
      %s1487 = scalar_select %p1486, %s14, 1
      %s1488 = smul.addr %s1487, 32
      %s1489 = smul.addr %s1488, 4
      %s1490 = scalar_lea.vmem %s3, %s1489
      // Predicated region
      $region33: #{vae_forward.5} parent=31 // pred_check
        %p1491 = pneg %p100
      $region34: #{vae_forward.5} parent=31 // pred_check_branch
        %1493 = sbr.rel (%p1491) target = $region36
      $region35: #{vae_forward.5} parent=31 // pred_region
        _
      $region36: #{vae_forward.5} parent=31 // pred_fallthru
        _
    $region32: #{vae_forward.5} parent=5 // pred_fallthru
      _
    %p1494 = scmp.le.s32.totalorder 2, %s9
    // Predicated region
    $region37: #{vae_forward.5} parent=5 // pred_check
      %p1495 = pneg %p1494
    $region38: #{vae_forward.5} parent=5 // pred_check_branch
      %1497 = sbr.rel (%p1495) target = $region40
    $region39: #{vae_forward.5} parent=5 // pred_region
      %s1498 = ssub.s32 %s9, 2
      // Predicated region
      $region41: #{vae_forward.5} parent=39 // pred_check
        %p1499 = pneg %p106
      $region42: #{vae_forward.5} parent=39 // pred_check_branch
        %1501 = sbr.rel (%p1499) target = $region44
      $region43: #{vae_forward.5} parent=39 // pred_region
        %p1502 = scmp.lt.s32.totalorder %s15, 1
        %s1503 = scalar_select %p1502, %s15, 1
        %s1504 = smul.addr %s1503, 32
        %s1505 = smul.addr %s1504, 4
        %s1506 = scalar_lea.vmem %s3, %s1505
      $region44: #{vae_forward.5} parent=39 // pred_fallthru
        _
    $region40: #{vae_forward.5} parent=5 // pred_fallthru
      _
  $region6: #{vae_forward.5} parent=0 // loop_footer
    %s13 = sadd.s32 1, %s9
  $region7: #{vae_forward.5} parent=0 // loop_footer_branch
    %8 = sbr.rel target = $region3
  $region8: #{vae_forward.5} parent=0 // loop_exit
    _

// kernel: vae_forward.6
$region0: #{vae_forward.6}
  #allocation0 [shape = 'u32[]', space=smem, size = 0x4, offset = 0x4, fixed_abs, tag = 'smem constant byte address 0x4 - core index']
  #allocation1 [shape = 'u32[72,128]{1,0:T(1,128)}', space=vmem, size = 0x9000, scoped, tag = 'internal scratch']
  %s0 = inlined_call_operand.vmem [shape: f32[2,108,512], index: 0, kind: input, shape index: {}]
  %s1 = inlined_call_operand.vmem [shape: f32[8,108], index: 1, kind: input, shape index: {}]
  %s2 = inlined_call_operand.vmem [shape: f32[8,1], index: 2, kind: input, shape index: {}]
  %s3 = inlined_call_operand.vmem [shape: f32[2,8,512], index: 3, kind: output, shape index: {}]
  %s4 = sld [smem:[#allocation0]]
  $region45: #{vae_forward.6} parent=0
    _
  %s6 = ssub.s32 1, %s4
  %s7 = scalar_select 0, %s6, %s4
  loop: start=0, step=1, limit=4
  $region2: #{vae_forward.6} parent=0 // loop_pre_header
    _
  $region3: #{vae_forward.6} parent=0 // loop_header
    %s9 = sphi 0, %s13
    %p10 = scmp.ge.s32.totalorder %s9, 4
    %s19 = sphi 0, %s21
    %s22 = sphi 0, %s19
    %s23 = sphi 0, %s22
    %s39 = sphi 0, %s23
    %s43 = sphi 0, %s43
    %s45 = sphi 0, %s43
    %s46 = sphi 0, %s45
    %s60 = sphi 0, %s46
    %s64 = sphi 0, %s64
    %s66 = sphi 0, %s64
    %s67 = sphi 0, %s66
    %s81 = sphi 0, %s67
    %s87 = sphi 0, %s89
    %s90 = sphi 0, %s87
    %s91 = sphi 0, %s90
    %s107 = sphi 0, %s91
  $region4: #{vae_forward.6} parent=0 // loop_header_branch
    %12 = sbr.rel (%p10) target = $region8
  $region5: #{vae_forward.6} parent=0 // loop_body
    %s14 = ssub.s32 %s9, 1
    %s15 = ssub.s32 %s9, 2
    %s16 = sadd.s32 %s9, 1
    %s17 = ssub.s32 %s9, %s16
    %p18 = scmp.eq.s32.totalorder %s17, 0
    %s20 = sadd.s32 %s19, 1
    %s21 = scalar_select %p18, %s19, %s20
    %p24 = pneg %p18
    %p25 = scmp.eq.s32.totalorder %s9, 1
    %p26 = por %p24, %p25
    %p27 = scmp.ne.s32.totalorder %s19, %s22
    %p28 = scmp.eq.s32.totalorder %s9, 0
    %p29 = por %p27, %p28
    %p30 = scmp.ne.s32.totalorder %s19, %s22
    %p31 = scmp.eq.s32.totalorder %s14, 1
    %p32 = por %p30, %p31
    %p33 = scmp.ne.s32.totalorder %s22, %s23
    %p34 = scmp.eq.s32.totalorder %s14, 0
    %p35 = por %p33, %p34
    %p36 = scmp.ne.s32.totalorder %s22, %s23
    %p37 = scmp.eq.s32.totalorder %s15, 1
    %p38 = por %p36, %p37
    %p40 = scmp.ne.s32.totalorder %s23, %s39
    %p41 = scmp.eq.s32.totalorder %s15, 0
    %p42 = por %p40, %p41
    %s44 = sadd.s32 %s43, 1
    %p47 = scmp.eq.s32.totalorder %s9, 1
    %p48 = scmp.ne.s32.totalorder %s43, %s45
    %p49 = scmp.eq.s32.totalorder %s9, 0
    %p50 = por %p48, %p49
    %p51 = scmp.ne.s32.totalorder %s43, %s45
    %p52 = scmp.eq.s32.totalorder %s14, 1
    %p53 = por %p51, %p52
    %p54 = scmp.ne.s32.totalorder %s45, %s46
    %p55 = scmp.eq.s32.totalorder %s14, 0
    %p56 = por %p54, %p55
    %p57 = scmp.ne.s32.totalorder %s45, %s46
    %p58 = scmp.eq.s32.totalorder %s15, 1
    %p59 = por %p57, %p58
    %p61 = scmp.ne.s32.totalorder %s46, %s60
    %p62 = scmp.eq.s32.totalorder %s15, 0
    %p63 = por %p61, %p62
    %s65 = sadd.s32 %s64, 1
    %p68 = scmp.eq.s32.totalorder %s9, 1
    %p69 = scmp.ne.s32.totalorder %s64, %s66
    %p70 = scmp.eq.s32.totalorder %s9, 0
    %p71 = por %p69, %p70
    %p72 = scmp.ne.s32.totalorder %s64, %s66
    %p73 = scmp.eq.s32.totalorder %s14, 1
    %p74 = por %p72, %p73
    %p75 = scmp.ne.s32.totalorder %s66, %s67
    %p76 = scmp.eq.s32.totalorder %s14, 0
    %p77 = por %p75, %p76
    %p78 = scmp.ne.s32.totalorder %s66, %s67
    %p79 = scmp.eq.s32.totalorder %s15, 1
    %p80 = por %p78, %p79
    %p82 = scmp.ne.s32.totalorder %s67, %s81
    %p83 = scmp.eq.s32.totalorder %s15, 0
    %p84 = por %p82, %p83
    %s85 = ssub.s32 %s9, %s16
    %p86 = scmp.eq.s32.totalorder %s85, 0
    %s88 = sadd.s32 %s87, 1
    %s89 = scalar_select %p86, %s87, %s88
    %p92 = pneg %p86
    %p93 = scmp.eq.s32.totalorder %s9, 1
    %p94 = por %p92, %p93
    %p95 = scmp.ne.s32.totalorder %s87, %s90
    %p96 = scmp.eq.s32.totalorder %s9, 0
    %p97 = por %p95, %p96
    %p98 = scmp.ne.s32.totalorder %s87, %s90
    %p99 = scmp.eq.s32.totalorder %s14, 1
    %p100 = por %p98, %p99
    %p101 = scmp.ne.s32.totalorder %s90, %s91
    %p102 = scmp.eq.s32.totalorder %s14, 0
    %p103 = por %p101, %p102
    %p104 = scmp.ne.s32.totalorder %s90, %s91
    %p105 = scmp.eq.s32.totalorder %s15, 1
    %p106 = por %p104, %p105
    %p108 = scmp.ne.s32.totalorder %s91, %s107
    %p109 = scmp.eq.s32.totalorder %s15, 0
    %p110 = por %p108, %p109
    %p111 = scmp.le.s32.totalorder 1, %s9
    %p112 = scmp.lt.s32.totalorder %s9, 3
    %p113 = pnand %p111, %p112
    %p114 = pneg %p113
    // Predicated region
    $region9: #{vae_forward.6} parent=5 // pred_check
      _
    $region10: #{vae_forward.6} parent=5 // pred_check_branch
      %116 = sbr.rel (%p113) target = $region12
    $region11: #{vae_forward.6} parent=5 // pred_region
      %s117 = ssub.s32 %s9, 1
      // Predicated region
      $region13: #{vae_forward.6} parent=11 // pred_check
        %p118 = pneg %p56
      $region14: #{vae_forward.6} parent=11 // pred_check_branch
        %120 = sbr.rel (%p118) target = $region16
      $region15: #{vae_forward.6} parent=11 // pred_region
        _
      $region16: #{vae_forward.6} parent=11 // pred_fallthru
        _
      // Predicated region
      $region17: #{vae_forward.6} parent=11 // pred_check
        %p121 = pneg %p77
      $region18: #{vae_forward.6} parent=11 // pred_check_branch
        %123 = sbr.rel (%p121) target = $region20
      $region19: #{vae_forward.6} parent=11 // pred_region
        _
      $region20: #{vae_forward.6} parent=11 // pred_fallthru
        _
    $region12: #{vae_forward.6} parent=5 // pred_fallthru
      _
    %p124 = scmp.lt.s32.totalorder %s9, 2
    // Predicated region
    $region21: #{vae_forward.6} parent=5 // pred_check
      %p125 = pneg %p124
    $region22: #{vae_forward.6} parent=5 // pred_check_branch
      %127 = sbr.rel (%p125) target = $region24
    $region23: #{vae_forward.6} parent=5 // pred_region
      // Predicated region
      $region25: #{vae_forward.6} parent=23 // pred_check
        %p128 = pneg %p29
      $region26: #{vae_forward.6} parent=23 // pred_check_branch
        %130 = sbr.rel (%p128) target = $region28
      $region27: #{vae_forward.6} parent=23 // pred_region
        %p131 = scmp.lt.s32.totalorder %s9, 1
        %s132 = scalar_select %p131, %s9, 1
        %s133 = smul.addr %s132, 56
        %s134 = smul.addr %s133, 8
        %s135 = scalar_lea.vmem %s0, %s134
      $region28: #{vae_forward.6} parent=23 // pred_fallthru
        _
    $region24: #{vae_forward.6} parent=5 // pred_fallthru
      _
    %p136 = scmp.le.s32.totalorder 1, %s9
    %p137 = scmp.lt.s32.totalorder %s9, 3
    %p138 = pnand %p136, %p137
    %p139 = pneg %p138
    // Predicated region
    $region29: #{vae_forward.6} parent=5 // pred_check
      _
    $region30: #{vae_forward.6} parent=5 // pred_check_branch
      %141 = sbr.rel (%p138) target = $region32
    $region31: #{vae_forward.6} parent=5 // pred_region
      %s142 = ssub.s32 %s9, 1
      %p143 = scmp.lt.s32.totalorder %s14, 1
      %s144 = scalar_select %p143, %s14, 1
      %s145 = smul.addr %s144, 56
      %s146 = smul.addr %s145, 8
      %s147 = scalar_lea.vmem %s0, %s146
      %p148 = pneg %p35
      %p149 = pneg %p32
      %p150 = pneg %p56
      %p151 = pneg %p53
      %p152 = pneg %p77
      %p153 = pneg %p74
      %p154 = pneg %p103
      %p155 = pneg %p100
      %p156 = scmp.lt.s32.totalorder %s14, 1
      %s157 = scalar_select %p156, %s14, 1
      %s158 = smul.addr %s157, 4
      %s159 = smul.addr %s158, 8
      %s160 = scalar_lea.vmem %s3, %s159
      %p161 = scmp.lt.s32.totalorder %s14, 1
      %s162 = scalar_select %p161, %s14, 1
      %s163 = smul.addr %s162, 56
      %s164 = smul.addr %s163, 8
      %s165 = scalar_lea.vmem %s0, %s164
      %p166 = scmp.lt.s32.totalorder %s14, 1
      %s167 = scalar_select %p166, %s14, 1
      %s168 = smul.addr %s167, 4
      %s169 = smul.addr %s168, 8
      %s170 = scalar_lea.vmem %s3, %s169
      %v171 = vld [vmem:[%s1] sm:$0xff]
      %v172 = vld [vmem:[%s165] sm:$0xff]
      %v173 = vld [vmem:[%s165 + $0x8] sm:$0xff]
      %v174 = vld [vmem:[%s165 + $0x10] sm:$0xff]
      %v175 = vld [vmem:[%s165 + $0x18] sm:$0xff]
      %v176 = vld [vmem:[%s165 + $0x20] sm:$0xff]
      %v177 = vld [vmem:[%s165 + $0x28] sm:$0xff]
      %v178 = vld [vmem:[%s165 + $0x30] sm:$0xff]
      %v179 = vld [vmem:[%s165 + $0x38] sm:$0xff]
      %v180 = vld [vmem:[%s165 + $0x40] sm:$0xff]
      %v181 = vld [vmem:[%s165 + $0x48] sm:$0xff]
      %v182 = vld [vmem:[%s165 + $0x50] sm:$0xff]
      %v183 = vld [vmem:[%s165 + $0x58] sm:$0xff]
      %v184 = vld [vmem:[%s165 + $0x60] sm:$0xff]
      %v185 = vld [vmem:[%s165 + $0x68] sm:$0xff]
      %v186 = vld [vmem:[%s165 + $0x70] sm:$0xff]
      %v187 = vld [vmem:[%s165 + $0x78] sm:$0xff]
      %v188 = vld [vmem:[%s165 + $0x80] sm:$0xff]
      %v189 = vld [vmem:[%s165 + $0x88] sm:$0xff]
      %v190 = vld [vmem:[%s165 + $0x90] sm:$0xff]
      %v191 = vld [vmem:[%s165 + $0x98] sm:$0xff]
      %v192 = vld [vmem:[%s165 + $0xa0] sm:$0xff]
      %v193 = vld [vmem:[%s165 + $0xa8] sm:$0xff]
      %v194 = vld [vmem:[%s165 + $0xb0] sm:$0xff]
      %v195 = vld [vmem:[%s165 + $0xb8] sm:$0xff]
      %v196 = vld [vmem:[%s165 + $0xc0] sm:$0xff]
      %v197 = vld [vmem:[%s165 + $0xc8] sm:$0xff]
      %v198 = vld [vmem:[%s165 + $0xd0] sm:$0xff]
      %v199 = vld [vmem:[%s165 + $0xd8] sm:$0xff]
      %v200 = vld [vmem:[%s165 + $0xe0] sm:$0xff]
      %v201 = vld [vmem:[%s165 + $0xe8] sm:$0xff]
      %v202 = vld [vmem:[%s165 + $0xf0] sm:$0xff]
      %v203 = vld [vmem:[%s165 + $0xf8] sm:$0xff]
      %v204 = vld [vmem:[%s165 + $0x100] sm:$0xff]
      %v205 = vld [vmem:[%s165 + $0x108] sm:$0xff]
      %v206 = vld [vmem:[%s165 + $0x110] sm:$0xff]
      %v207 = vld [vmem:[%s165 + $0x118] sm:$0xff]
      %v208 = vld [vmem:[%s165 + $0x120] sm:$0xff]
      %v209 = vld [vmem:[%s165 + $0x128] sm:$0xff]
      %v210 = vld [vmem:[%s165 + $0x130] sm:$0xff]
      %v211 = vld [vmem:[%s165 + $0x138] sm:$0xff]
      %v212 = vld [vmem:[%s165 + $0x140] sm:$0xff]
      %v213 = vld [vmem:[%s165 + $0x148] sm:$0xff]
      %v214 = vld [vmem:[%s165 + $0x150] sm:$0xff]
      %v215 = vld [vmem:[%s165 + $0x158] sm:$0xff]
      %v216 = vld [vmem:[%s165 + $0x160] sm:$0xff]
      %v217 = vld [vmem:[%s165 + $0x168] sm:$0xff]
      %v218 = vld [vmem:[%s165 + $0x170] sm:$0xff]
      %v219 = vld [vmem:[%s165 + $0x178] sm:$0xff]
      %v220 = vld [vmem:[%s165 + $0x180] sm:$0xff]
      %v221 = vld [vmem:[%s165 + $0x188] sm:$0xff]
      %v222 = vld [vmem:[%s165 + $0x190] sm:$0xff]
      %v223 = vld [vmem:[%s165 + $0x198] sm:$0xff]
      %v224 = vld [vmem:[%s165 + $0x1a0] sm:$0xf]
      %v225 = vld [vmem:[%s165 + $0x1a8] sm:$0xf]
      %v226 = vld [vmem:[%s165 + $0x1b0] sm:$0xf]
      %v227 = vld [vmem:[%s165 + $0x1b8] sm:$0xf]
      %v228 = vld [vmem:[%s2] sm:$0xff]
      %230 = vset.pattern.permute.xlu0 0
      %231 = vperm.xlu0 %230, %v228
      %v232 = vpop.permute.xlu0 %231
      %vm234 = vcmask 883712
      %v236 = vsel %vm234, %v171, 0
      %vm238 = vcmask 1043456
      %v240 = vsel %vm238, %v224, 0
      %v243 = vsel %vm238, %v225, 0
      %v246 = vsel %vm238, %v226, 0
      %v249 = vsel %vm238, %v227, 0
      %251 = vmatpush.msra.mxu0 0.0
      %252 = vmatpush.msra.mxu0 0.0
      %253 = vmatpush.msra.mxu0 %v240
      %254 = vmatpush.msra.mxu0 %v220
      %255 = vmatpush.msra.mxu0 %v216
      %256 = vmatpush.msra.mxu0 %v212
      %257 = vmatpush.msra.mxu0 %v208
      %258 = vmatpush.msra.mxu0 %v204
      %259 = vmatpush.msra.mxu0 %v200
      %260 = vmatpush.msra.mxu0 %v196
      %261 = vmatpush.msra.mxu0 %v192
      %262 = vmatpush.msra.mxu0 %v188
      %263 = vmatpush.msra.mxu0 %v184
      %264 = vmatpush.msra.mxu0 %v180
      %265 = vmatpush.msra.mxu0 %v176
      %266 = vmatpush.msra.mxu0 %v172
      %267 = vmatmul.f32.gmra.mxu0 %v236
      %v268 = vpop.f32.mrf.mxu0
      %v269 = vadd.f32 %v232, %v268
      %270 = vdwg.mxu0
      %271 = vmatpush.msra.mxu0 0.0
      %272 = vmatpush.msra.mxu0 0.0
      %273 = vmatpush.msra.mxu0 %v243
      %274 = vmatpush.msra.mxu0 %v221
      %275 = vmatpush.msra.mxu0 %v217
      %276 = vmatpush.msra.mxu0 %v213
      %277 = vmatpush.msra.mxu0 %v209
      %278 = vmatpush.msra.mxu0 %v205
      %279 = vmatpush.msra.mxu0 %v201
      %280 = vmatpush.msra.mxu0 %v197
      %281 = vmatpush.msra.mxu0 %v193
      %282 = vmatpush.msra.mxu0 %v189
      %283 = vmatpush.msra.mxu0 %v185
      %284 = vmatpush.msra.mxu0 %v181
      %285 = vmatpush.msra.mxu0 %v177
      %286 = vmatpush.msra.mxu0 %v173
      %287 = vmatmul.f32.gmra.mxu0 %v236
      %v288 = vpop.f32.mrf.mxu0
      %v289 = vadd.f32 %v232, %v288
      %290 = vdwg.mxu0
      %291 = vmatpush.msra.mxu0 0.0
      %292 = vmatpush.msra.mxu0 0.0
      %293 = vmatpush.msra.mxu0 %v246
      %294 = vmatpush.msra.mxu0 %v222
      %295 = vmatpush.msra.mxu0 %v218
      %296 = vmatpush.msra.mxu0 %v214
      %297 = vmatpush.msra.mxu0 %v210
      %298 = vmatpush.msra.mxu0 %v206
      %299 = vmatpush.msra.mxu0 %v202
      %300 = vmatpush.msra.mxu0 %v198
      %301 = vmatpush.msra.mxu0 %v194
      %302 = vmatpush.msra.mxu0 %v190
      %303 = vmatpush.msra.mxu0 %v186
      %304 = vmatpush.msra.mxu0 %v182
      %305 = vmatpush.msra.mxu0 %v178
      %306 = vmatpush.msra.mxu0 %v174
      %307 = vmatmul.f32.gmra.mxu0 %v236
      %v308 = vpop.f32.mrf.mxu0
      %v309 = vadd.f32 %v232, %v308
      %310 = vdwg.mxu0
      %311 = vmatpush.msra.mxu0 0.0
      %312 = vmatpush.msra.mxu0 0.0
      %313 = vmatpush.msra.mxu0 %v249
      %314 = vmatpush.msra.mxu0 %v223
      %315 = vmatpush.msra.mxu0 %v219
      %316 = vmatpush.msra.mxu0 %v215
      %317 = vmatpush.msra.mxu0 %v211
      %318 = vmatpush.msra.mxu0 %v207
      %319 = vmatpush.msra.mxu0 %v203
      %320 = vmatpush.msra.mxu0 %v199
      %321 = vmatpush.msra.mxu0 %v195
      %322 = vmatpush.msra.mxu0 %v191
      %323 = vmatpush.msra.mxu0 %v187
      %324 = vmatpush.msra.mxu0 %v183
      %325 = vmatpush.msra.mxu0 %v179
      %326 = vmatpush.msra.mxu0 %v175
      %327 = vmatmul.f32.gmra.mxu0 %v236
      %v328 = vpop.f32.mrf.mxu0
      %v329 = vadd.f32 %v232, %v328
      %330 = vdwg.mxu0
      %v331 = vadd.f32 %v269, %v289
      %v332 = vadd.f32 %v331, %v309
      %v333 = vadd.f32 %v332, %v329
      %334 = vadd.xlane.f32.xlu0 %v333
      %v335 = vpop.xlane.xlu0 %334
      %v336 = vrcp.pop 512.0
      %v337 = vmul.f32 512.0, %v336
      %v338 = vsub.f32 1.0, %v337
      %v339 = vmul.f32 %v336, %v338
      %v340 = vadd.f32 %v336, %v339
      %vm341 = vweird.f32 %v336
      %v342 = vsel %vm341, %v336, %v340
      %v343 = vmul.f32 %v335, %v342
      %v344 = vsub.f32 %v269, %v343
      %v345 = vsub.f32 %v289, %v343
      %v346 = vsub.f32 %v309, %v343
      %v347 = vsub.f32 %v329, %v343
      %v348 = vmul.f32 %v344, %v344
      %v349 = vmul.f32 %v345, %v345
      %v350 = vmul.f32 %v346, %v346
      %v351 = vmul.f32 %v347, %v347
      %v352 = vadd.f32 %v348, %v349
      %v353 = vadd.f32 %v352, %v350
      %v354 = vadd.f32 %v353, %v351
      %355 = vadd.xlane.f32.xlu0 %v354
      %v356 = vpop.xlane.xlu0 %355
      %v357 = vmul.f32 %v356, %v342
      %v358 = vadd.f32 %v357, 1e-05
      %v359 = vrsqrt.pop %v358
      %v360 = vmul.f32 %v359, %v358
      %v361 = vmul.f32 %v360, %v359
      %v362 = vmul.f32 0.5, %v361
      %v363 = vsub.f32 1.5, %v362
      %v364 = vmul.f32 %v359, %v363
      %vm365 = vweird.f32 %v358
      %vm366 = vweird.f32 %v359
      %vm367 = vmor %vm365, %vm366
      %v368 = vsel %vm367, %v359, %v364
      %v369 = vmul.f32 %v344, %v368
      %v370 = vmul.f32 %v345, %v368
      %v371 = vmul.f32 %v346, %v368
      %v372 = vmul.f32 %v347, %v368
      %vm373 = vcmp.ge.f32.partialorder %v369, 0.0
      %vm374 = vcmp.ge.f32.partialorder %v370, 0.0
      %vm375 = vcmp.ge.f32.partialorder %v371, 0.0
      %vm376 = vcmp.ge.f32.partialorder %v372, 0.0
      %v377 = vmul.f32 %v369, 0.01
      %v378 = vmul.f32 %v370, 0.01
      %v379 = vmul.f32 %v371, 0.01
      %v380 = vmul.f32 %v372, 0.01
      %v381 = vsel %vm373, %v369, %v377
      %v382 = vsel %vm374, %v370, %v378
      %v383 = vsel %vm375, %v371, %v379
      %v384 = vsel %vm376, %v372, %v380
      %385 = vst [vmem:[%s170] sm:$0xff] %v381
      %386 = vst [vmem:[%s170 + $0x8] sm:$0xff] %v382
      %387 = vst [vmem:[%s170 + $0x10] sm:$0xff] %v383
      %388 = vst [vmem:[%s170 + $0x18] sm:$0xff] %v384
      %p389 = scmp.lt.s32.totalorder %s14, 1
      %s390 = scalar_select %p389, %s14, 1
      %s391 = smul.addr %s390, 4
      %s392 = smul.addr %s391, 8
      %s393 = scalar_lea.vmem %s3, %s392
      // Predicated region
      $region33: #{vae_forward.6} parent=31 // pred_check
        %p394 = pneg %p100
      $region34: #{vae_forward.6} parent=31 // pred_check_branch
        %396 = sbr.rel (%p394) target = $region36
      $region35: #{vae_forward.6} parent=31 // pred_region
        _
      $region36: #{vae_forward.6} parent=31 // pred_fallthru
        _
    $region32: #{vae_forward.6} parent=5 // pred_fallthru
      _
    %p397 = scmp.le.s32.totalorder 2, %s9
    // Predicated region
    $region37: #{vae_forward.6} parent=5 // pred_check
      %p398 = pneg %p397
    $region38: #{vae_forward.6} parent=5 // pred_check_branch
      %400 = sbr.rel (%p398) target = $region40
    $region39: #{vae_forward.6} parent=5 // pred_region
      %s401 = ssub.s32 %s9, 2
      // Predicated region
      $region41: #{vae_forward.6} parent=39 // pred_check
        %p402 = pneg %p106
      $region42: #{vae_forward.6} parent=39 // pred_check_branch
        %404 = sbr.rel (%p402) target = $region44
      $region43: #{vae_forward.6} parent=39 // pred_region
        %p405 = scmp.lt.s32.totalorder %s15, 1
        %s406 = scalar_select %p405, %s15, 1
        %s407 = smul.addr %s406, 4
        %s408 = smul.addr %s407, 8
        %s409 = scalar_lea.vmem %s3, %s408
      $region44: #{vae_forward.6} parent=39 // pred_fallthru
        _
    $region40: #{vae_forward.6} parent=5 // pred_fallthru
      _
  $region6: #{vae_forward.6} parent=0 // loop_footer
    %s13 = sadd.s32 1, %s9
  $region7: #{vae_forward.6} parent=0 // loop_footer_branch
    %8 = sbr.rel target = $region3
  $region8: #{vae_forward.6} parent=0 // loop_exit
    _

// kernel: vae_forward.7
$region0: #{vae_forward.7}
  #allocation0 [shape = 'u32[]', space=smem, size = 0x4, offset = 0x4, fixed_abs, tag = 'smem constant byte address 0x4 - core index']
  #allocation1 [shape = 'u32[72,128]{1,0:T(1,128)}', space=vmem, size = 0x9000, scoped, tag = 'internal scratch']
  %s0 = inlined_call_operand.vmem [shape: f32[2,512], index: 0, kind: input, shape index: {}]
  %s1 = inlined_call_operand.vmem [shape: f32[512,16], index: 1, kind: input, shape index: {}]
  %s2 = inlined_call_operand.vmem [shape: f32[1,16], index: 2, kind: input, shape index: {}]
  %s3 = inlined_call_operand.vmem [shape: f32[2,8], index: 3, kind: input, shape index: {}]
  %s4 = inlined_call_operand.vmem [shape: f32[8,512], index: 4, kind: input, shape index: {}]
  %s5 = inlined_call_operand.vmem [shape: f32[1,512], index: 5, kind: input, shape index: {}]
  %s6 = inlined_call_operand.vmem [shape: f32[2,512], index: 6, kind: output, shape index: {0}]
  %s7 = inlined_call_operand.hbm [shape: f32[2,8], index: 7, kind: output, shape index: {1}]
  %s8 = inlined_call_operand.hbm [shape: f32[2,8], index: 8, kind: output, shape index: {2}]
  %9 = xla_tuple %s6, %s7, %s8
  %s10 = sld [smem:[#allocation0]]
  $region50: #{vae_forward.7} parent=0
    _
  %s12 = ssub.s32 1, %s10
  %s13 = scalar_select 0, %s12, %s10
  $region1: #{vae_forward.7} parent=0
    #allocation2 [shape = 'u8[1024]{0}', space=vmem, size = 0x400, scoped, tag = 'output window, operand 1, single buffered']
    #allocation3 [shape = 's32[1]{0}', space=sflag, size = 0x4, scoped, tag = 'scoped memory for vae_forward.7']
    #allocation4 [shape = 'u8[1024]{0}', space=vmem, size = 0x400, scoped, tag = 'output window, operand 2, single buffered']
    #allocation5 [shape = 's32[1]{0}', space=sflag, size = 0x4, scoped, tag = 'scoped memory for vae_forward.7']
    %14 = vsyncpa [#allocation3], 0
    %15 = vsyncpa [#allocation5], 0
    // Predicated region
    $region2: #{vae_forward.7} parent=1 // pred_check
      _
    $region3: #{vae_forward.7} parent=1 // pred_check_branch
      %17 = sbr.rel (0) target = $region5
    $region4: #{vae_forward.7} parent=1 // pred_region
      _
    $region5: #{vae_forward.7} parent=1 // pred_fallthru
      _
    // Predicated region
    $region6: #{vae_forward.7} parent=1 // pred_check
      _
    $region7: #{vae_forward.7} parent=1 // pred_check_branch
      %19 = sbr.rel (0) target = $region9
    $region8: #{vae_forward.7} parent=1 // pred_region
      _
    $region9: #{vae_forward.7} parent=1 // pred_fallthru
      _
    // Predicated region
    $region10: #{vae_forward.7} parent=1 // pred_check
      _
    $region11: #{vae_forward.7} parent=1 // pred_check_branch
      %21 = sbr.rel (0) target = $region13
    $region12: #{vae_forward.7} parent=1 // pred_region
      _
    $region13: #{vae_forward.7} parent=1 // pred_fallthru
      _
    // Predicated region
    $region14: #{vae_forward.7} parent=1 // pred_check
      _
    $region15: #{vae_forward.7} parent=1 // pred_check_branch
      %23 = sbr.rel (0) target = $region17
    $region16: #{vae_forward.7} parent=1 // pred_region
      _
    $region17: #{vae_forward.7} parent=1 // pred_fallthru
      _
    // Predicated region
    $region18: #{vae_forward.7} parent=1 // pred_check
      _
    $region19: #{vae_forward.7} parent=1 // pred_check_branch
      %25 = sbr.rel (0) target = $region21
    $region20: #{vae_forward.7} parent=1 // pred_region
      _
    $region21: #{vae_forward.7} parent=1 // pred_fallthru
      _
    // Predicated region
    $region22: #{vae_forward.7} parent=1 // pred_check
      _
    $region23: #{vae_forward.7} parent=1 // pred_check_branch
      %27 = sbr.rel (0) target = $region25
    $region24: #{vae_forward.7} parent=1 // pred_region
      _
    $region25: #{vae_forward.7} parent=1 // pred_fallthru
      _
    %v28 = vld [vmem:[%s0] sm:$0xff]
    %v29 = vld [vmem:[%s1] sm:$0xff]
    %v30 = vld [vmem:[%s1 + $0x8] sm:$0xff]
    %v31 = vld [vmem:[%s1 + $0x10] sm:$0xff]
    %v32 = vld [vmem:[%s1 + $0x18] sm:$0xff]
    %v33 = vld [vmem:[%s1 + $0x20] sm:$0xff]
    %v34 = vld [vmem:[%s1 + $0x28] sm:$0xff]
    %v35 = vld [vmem:[%s1 + $0x30] sm:$0xff]
    %v36 = vld [vmem:[%s1 + $0x38] sm:$0xff]
    %v37 = vld [vmem:[%s1 + $0x40] sm:$0xff]
    %v38 = vld [vmem:[%s1 + $0x48] sm:$0xff]
    %v39 = vld [vmem:[%s1 + $0x50] sm:$0xff]
    %v40 = vld [vmem:[%s1 + $0x58] sm:$0xff]
    %v41 = vld [vmem:[%s1 + $0x60] sm:$0xff]
    %v42 = vld [vmem:[%s1 + $0x68] sm:$0xff]
    %v43 = vld [vmem:[%s1 + $0x70] sm:$0xff]
    %v44 = vld [vmem:[%s1 + $0x78] sm:$0xff]
    %v45 = vld [vmem:[%s1 + $0x80] sm:$0xff]
    %v46 = vld [vmem:[%s1 + $0x88] sm:$0xff]
    %v47 = vld [vmem:[%s1 + $0x90] sm:$0xff]
    %v48 = vld [vmem:[%s1 + $0x98] sm:$0xff]
    %v49 = vld [vmem:[%s1 + $0xa0] sm:$0xff]
    %v50 = vld [vmem:[%s1 + $0xa8] sm:$0xff]
    %v51 = vld [vmem:[%s1 + $0xb0] sm:$0xff]
    %v52 = vld [vmem:[%s1 + $0xb8] sm:$0xff]
    %v53 = vld [vmem:[%s1 + $0xc0] sm:$0xff]
    %v54 = vld [vmem:[%s1 + $0xc8] sm:$0xff]
    %v55 = vld [vmem:[%s1 + $0xd0] sm:$0xff]
    %v56 = vld [vmem:[%s1 + $0xd8] sm:$0xff]
    %v57 = vld [vmem:[%s1 + $0xe0] sm:$0xff]
    %v58 = vld [vmem:[%s1 + $0xe8] sm:$0xff]
    %v59 = vld [vmem:[%s1 + $0xf0] sm:$0xff]
    %v60 = vld [vmem:[%s1 + $0xf8] sm:$0xff]
    %v61 = vld [vmem:[%s1 + $0x100] sm:$0xff]
    %v62 = vld [vmem:[%s1 + $0x108] sm:$0xff]
    %v63 = vld [vmem:[%s1 + $0x110] sm:$0xff]
    %v64 = vld [vmem:[%s1 + $0x118] sm:$0xff]
    %v65 = vld [vmem:[%s1 + $0x120] sm:$0xff]
    %v66 = vld [vmem:[%s1 + $0x128] sm:$0xff]
    %v67 = vld [vmem:[%s1 + $0x130] sm:$0xff]
    %v68 = vld [vmem:[%s1 + $0x138] sm:$0xff]
    %v69 = vld [vmem:[%s1 + $0x140] sm:$0xff]
    %v70 = vld [vmem:[%s1 + $0x148] sm:$0xff]
    %v71 = vld [vmem:[%s1 + $0x150] sm:$0xff]
    %v72 = vld [vmem:[%s1 + $0x158] sm:$0xff]
    %v73 = vld [vmem:[%s1 + $0x160] sm:$0xff]
    %v74 = vld [vmem:[%s1 + $0x168] sm:$0xff]
    %v75 = vld [vmem:[%s1 + $0x170] sm:$0xff]
    %v76 = vld [vmem:[%s1 + $0x178] sm:$0xff]
    %v77 = vld [vmem:[%s1 + $0x180] sm:$0xff]
    %v78 = vld [vmem:[%s1 + $0x188] sm:$0xff]
    %v79 = vld [vmem:[%s1 + $0x190] sm:$0xff]
    %v80 = vld [vmem:[%s1 + $0x198] sm:$0xff]
    %v81 = vld [vmem:[%s1 + $0x1a0] sm:$0xff]
    %v82 = vld [vmem:[%s1 + $0x1a8] sm:$0xff]
    %v83 = vld [vmem:[%s1 + $0x1b0] sm:$0xff]
    %v84 = vld [vmem:[%s1 + $0x1b8] sm:$0xff]
    %v85 = vld [vmem:[%s1 + $0x1c0] sm:$0xff]
    %v86 = vld [vmem:[%s1 + $0x1c8] sm:$0xff]
    %v87 = vld [vmem:[%s1 + $0x1d0] sm:$0xff]
    %v88 = vld [vmem:[%s1 + $0x1d8] sm:$0xff]
    %v89 = vld [vmem:[%s1 + $0x1e0] sm:$0xff]
    %v90 = vld [vmem:[%s1 + $0x1e8] sm:$0xff]
    %v91 = vld [vmem:[%s1 + $0x1f0] sm:$0xff]
    %v92 = vld [vmem:[%s1 + $0x1f8] sm:$0xff]
    %v93 = vld [vmem:[%s2] sm:$0x1]
    %v95 = vperm.slane %v93, 0
    %98 = vst [vmem:[#allocation1] ss:$4 sm:$0xff] %v28
    %v99 = vld.sshfl [vmem:[#allocation1] sm:$0xff pattern:$0x73625140]
    %v100 = vld.sshfl [vmem:[#allocation1 + $0x8] sm:$0xff pattern:$0x73625140]
    %v101 = vld.sshfl [vmem:[#allocation1 + $0x10] sm:$0xff pattern:$0x73625140]
    %v102 = vld.sshfl [vmem:[#allocation1 + $0x18] sm:$0xff pattern:$0x73625140]
    %107 = vmatpush.msra.mxu0 %v44
    %108 = vmatpush.msra.mxu0 %v43
    %109 = vmatpush.msra.mxu0 %v42
    %110 = vmatpush.msra.mxu0 %v41
    %111 = vmatpush.msra.mxu0 %v40
    %112 = vmatpush.msra.mxu0 %v39
    %113 = vmatpush.msra.mxu0 %v38
    %114 = vmatpush.msra.mxu0 %v37
    %115 = vmatpush.msra.mxu0 %v36
    %116 = vmatpush.msra.mxu0 %v35
    %117 = vmatpush.msra.mxu0 %v34
    %118 = vmatpush.msra.mxu0 %v33
    %119 = vmatpush.msra.mxu0 %v32
    %120 = vmatpush.msra.mxu0 %v31
    %121 = vmatpush.msra.mxu0 %v30
    %122 = vmatpush.msra.mxu0 %v29
    %123 = vmatmul.f32.gmra.mxu0 %v99
    %v124 = vpop.f32.mrf.mxu0
    %v125 = vadd.f32 %v95, %v124
    %126 = vdwg.mxu0
    %127 = vmatpush.msra.mxu0 %v60
    %128 = vmatpush.msra.mxu0 %v59
    %129 = vmatpush.msra.mxu0 %v58
    %130 = vmatpush.msra.mxu0 %v57
    %131 = vmatpush.msra.mxu0 %v56
    %132 = vmatpush.msra.mxu0 %v55
    %133 = vmatpush.msra.mxu0 %v54
    %134 = vmatpush.msra.mxu0 %v53
    %135 = vmatpush.msra.mxu0 %v52
    %136 = vmatpush.msra.mxu0 %v51
    %137 = vmatpush.msra.mxu0 %v50
    %138 = vmatpush.msra.mxu0 %v49
    %139 = vmatpush.msra.mxu0 %v48
    %140 = vmatpush.msra.mxu0 %v47
    %141 = vmatpush.msra.mxu0 %v46
    %142 = vmatpush.msra.mxu0 %v45
    %143 = vmatmul.f32.gmra.mxu0 %v100
    %v144 = vpop.f32.mrf.mxu0
    %v145 = vadd.f32 %v125, %v144
    %146 = vdwg.mxu0
    %147 = vmatpush.msra.mxu0 %v76
    %148 = vmatpush.msra.mxu0 %v75
    %149 = vmatpush.msra.mxu0 %v74
    %150 = vmatpush.msra.mxu0 %v73
    %151 = vmatpush.msra.mxu0 %v72
    %152 = vmatpush.msra.mxu0 %v71
    %153 = vmatpush.msra.mxu0 %v70
    %154 = vmatpush.msra.mxu0 %v69
    %155 = vmatpush.msra.mxu0 %v68
    %156 = vmatpush.msra.mxu0 %v67
    %157 = vmatpush.msra.mxu0 %v66
    %158 = vmatpush.msra.mxu0 %v65
    %159 = vmatpush.msra.mxu0 %v64
    %160 = vmatpush.msra.mxu0 %v63
    %161 = vmatpush.msra.mxu0 %v62
    %162 = vmatpush.msra.mxu0 %v61
    %163 = vmatmul.f32.gmra.mxu0 %v101
    %v164 = vpop.f32.mrf.mxu0
    %v165 = vadd.f32 %v145, %v164
    %166 = vdwg.mxu0
    %167 = vmatpush.msra.mxu0 %v92
    %168 = vmatpush.msra.mxu0 %v91
    %169 = vmatpush.msra.mxu0 %v90
    %170 = vmatpush.msra.mxu0 %v89
    %171 = vmatpush.msra.mxu0 %v88
    %172 = vmatpush.msra.mxu0 %v87
    %173 = vmatpush.msra.mxu0 %v86
    %174 = vmatpush.msra.mxu0 %v85
    %175 = vmatpush.msra.mxu0 %v84
    %176 = vmatpush.msra.mxu0 %v83
    %177 = vmatpush.msra.mxu0 %v82
    %178 = vmatpush.msra.mxu0 %v81
    %179 = vmatpush.msra.mxu0 %v80
    %180 = vmatpush.msra.mxu0 %v79
    %181 = vmatpush.msra.mxu0 %v78
    %182 = vmatpush.msra.mxu0 %v77
    %183 = vmatmul.f32.gmra.mxu0 %v102
    %v184 = vpop.f32.mrf.mxu0
    %v185 = vadd.f32 %v165, %v184
    %186 = vdwg.mxu0
    %v187 = vld [vmem:[%s3] sm:$0x3]
    %v188 = vmul.f32 %v185, 0.5
    %v189 = vmul.f32 %v188, 1.442695
    %v190 = vpow.pop %v189
    %192 = vrot.lane.b32.xlu0 %v190, 120
    %v193 = vpop.permute.xlu0 %192
    %v195 = vmul.f32 %v187, %v193
    %v196 = vadd.f32 %v185, %v195
    %v197 = vld [vmem:[%s4] sm:$0xff]
    %v198 = vld [vmem:[%s4 + $0x8] sm:$0xff]
    %v199 = vld [vmem:[%s4 + $0x10] sm:$0xff]
    %v200 = vld [vmem:[%s4 + $0x18] sm:$0xff]
    %v201 = vld [vmem:[%s5] sm:$0xf]
    %v203 = vperm.slane %v201, 0
    %v204 = vperm.slane %v201, 1
    %v205 = vperm.slane %v201, 2
    %v206 = vperm.slane %v201, 3
    %vm211 = vcmask 64512
    %v213 = vsel %vm211, %v196, 0
    %215 = vmatpush.msra.mxu0 0.0
    %216 = vmatpush.msra.mxu0 0.0
    %217 = vmatpush.msra.mxu0 0.0
    %218 = vmatpush.msra.mxu0 0.0
    %219 = vmatpush.msra.mxu0 0.0
    %220 = vmatpush.msra.mxu0 0.0
    %221 = vmatpush.msra.mxu0 0.0
    %222 = vmatpush.msra.mxu0 0.0
    %223 = vmatpush.msra.mxu0 0.0
    %224 = vmatpush.msra.mxu0 0.0
    %225 = vmatpush.msra.mxu0 0.0
    %226 = vmatpush.msra.mxu0 0.0
    %227 = vmatpush.msra.mxu0 0.0
    %228 = vmatpush.msra.mxu0 0.0
    %229 = vmatpush.msra.mxu0 0.0
    %230 = vmatpush.msra.mxu0 %v197
    %231 = vmatmul.f32.gmra.mxu0 %v213
    %v232 = vpop.f32.mrf.mxu0
    %v233 = vadd.f32 %v203, %v232
    %234 = vdwg.mxu0
    %235 = vmatpush.msra.mxu0 0.0
    %236 = vmatpush.msra.mxu0 0.0
    %237 = vmatpush.msra.mxu0 0.0
    %238 = vmatpush.msra.mxu0 0.0
    %239 = vmatpush.msra.mxu0 0.0
    %240 = vmatpush.msra.mxu0 0.0
    %241 = vmatpush.msra.mxu0 0.0
    %242 = vmatpush.msra.mxu0 0.0
    %243 = vmatpush.msra.mxu0 0.0
    %244 = vmatpush.msra.mxu0 0.0
    %245 = vmatpush.msra.mxu0 0.0
    %246 = vmatpush.msra.mxu0 0.0
    %247 = vmatpush.msra.mxu0 0.0
    %248 = vmatpush.msra.mxu0 0.0
    %249 = vmatpush.msra.mxu0 0.0
    %250 = vmatpush.msra.mxu0 %v198
    %251 = vmatmul.f32.gmra.mxu0 %v213
    %v252 = vpop.f32.mrf.mxu0
    %v253 = vadd.f32 %v204, %v252
    %254 = vdwg.mxu0
    %255 = vmatpush.msra.mxu0 0.0
    %256 = vmatpush.msra.mxu0 0.0
    %257 = vmatpush.msra.mxu0 0.0
    %258 = vmatpush.msra.mxu0 0.0
    %259 = vmatpush.msra.mxu0 0.0
    %260 = vmatpush.msra.mxu0 0.0
    %261 = vmatpush.msra.mxu0 0.0
    %262 = vmatpush.msra.mxu0 0.0
    %263 = vmatpush.msra.mxu0 0.0
    %264 = vmatpush.msra.mxu0 0.0
    %265 = vmatpush.msra.mxu0 0.0
    %266 = vmatpush.msra.mxu0 0.0
    %267 = vmatpush.msra.mxu0 0.0
    %268 = vmatpush.msra.mxu0 0.0
    %269 = vmatpush.msra.mxu0 0.0
    %270 = vmatpush.msra.mxu0 %v199
    %271 = vmatmul.f32.gmra.mxu0 %v213
    %v272 = vpop.f32.mrf.mxu0
    %v273 = vadd.f32 %v205, %v272
    %274 = vdwg.mxu0
    %275 = vmatpush.msra.mxu0 0.0
    %276 = vmatpush.msra.mxu0 0.0
    %277 = vmatpush.msra.mxu0 0.0
    %278 = vmatpush.msra.mxu0 0.0
    %279 = vmatpush.msra.mxu0 0.0
    %280 = vmatpush.msra.mxu0 0.0
    %281 = vmatpush.msra.mxu0 0.0
    %282 = vmatpush.msra.mxu0 0.0
    %283 = vmatpush.msra.mxu0 0.0
    %284 = vmatpush.msra.mxu0 0.0
    %285 = vmatpush.msra.mxu0 0.0
    %286 = vmatpush.msra.mxu0 0.0
    %287 = vmatpush.msra.mxu0 0.0
    %288 = vmatpush.msra.mxu0 0.0
    %289 = vmatpush.msra.mxu0 0.0
    %290 = vmatpush.msra.mxu0 %v200
    %291 = vmatmul.f32.gmra.mxu0 %v213
    %v292 = vpop.f32.mrf.mxu0
    %v293 = vadd.f32 %v206, %v292
    %294 = vdwg.mxu0
    %v299 = vrot.slane %v253, 6
    %v300 = vrot.slane %v273, 4
    %v301 = vrot.slane %v293, 2
    %vm302 = vcmask 1041408
    %v303 = vsel %vm302, %v233, %v299
    %vm304 = vcmask 1045508
    %v305 = vsel %vm304, %v300, %v301
    %vm306 = vcmask 1043456
    %v307 = vsel %vm306, %v303, %v305
    %309 = vst [vmem:[%s6] sm:$0xff] %v307
    %vm310 = vcmask 58368
    %311 = vst.msk [vmem:[#allocation2] sm:$0x3] %vm310, %v185
    %313 = vrot.lane.b32.xlu0 %v185, 120
    %v314 = vpop.permute.xlu0 %313
    %316 = vst.msk [vmem:[#allocation4] sm:$0x3] %vm310, %v314
    // Predicated region
    $region26: #{vae_forward.7} parent=1 // pred_check
      _
    $region27: #{vae_forward.7} parent=1 // pred_check_branch
      %318 = sbr.rel (0) target = $region29
    $region28: #{vae_forward.7} parent=1 // pred_region
      _
    $region29: #{vae_forward.7} parent=1 // pred_fallthru
      _
    // Predicated region
    $region30: #{vae_forward.7} parent=1 // pred_check
      _
    $region31: #{vae_forward.7} parent=1 // pred_check_branch
      %320 = sbr.rel (0) target = $region33
    $region32: #{vae_forward.7} parent=1 // pred_region
      %322 = vsyncadd [#allocation3], 0
      %s324 = sshll.u32 [#allocation2], 4
      %s325 = int_to_ptr.vmem [resolvable:$true] %s324
      %s326 = sshll.u32 %s7, 4
      %s327 = int_to_ptr.hbm [resolvable:$true] %s326
      %329 = dma.vmem_to_hbm [thread:$0]  %s325, 32, %s327, [#allocation3]
    $region33: #{vae_forward.7} parent=1 // pred_fallthru
      _
    // Predicated region
    $region34: #{vae_forward.7} parent=1 // pred_check
      _
    $region35: #{vae_forward.7} parent=1 // pred_check_branch
      %331 = sbr.rel (0) target = $region37
    $region36: #{vae_forward.7} parent=1 // pred_region
      %333 = vsyncadd [#allocation5], 0
      %s335 = sshll.u32 [#allocation4], 4
      %s336 = int_to_ptr.vmem [resolvable:$true] %s335
      %s337 = sshll.u32 %s8, 4
      %s338 = int_to_ptr.hbm [resolvable:$true] %s337
      %340 = dma.vmem_to_hbm [thread:$0]  %s336, 32, %s338, [#allocation5]
    $region37: #{vae_forward.7} parent=1 // pred_fallthru
      _
    // Predicated region
    $region38: #{vae_forward.7} parent=1 // pred_check
      _
    $region39: #{vae_forward.7} parent=1 // pred_check_branch
      %342 = sbr.rel (0) target = $region41
    $region40: #{vae_forward.7} parent=1 // pred_region
      _
    $region41: #{vae_forward.7} parent=1 // pred_fallthru
      _
    // Predicated region
    $region42: #{vae_forward.7} parent=1 // pred_check
      _
    $region43: #{vae_forward.7} parent=1 // pred_check_branch
      %344 = sbr.rel (0) target = $region45
    $region44: #{vae_forward.7} parent=1 // pred_region
      %346 = dma.done [#allocation3], 32
    $region45: #{vae_forward.7} parent=1 // pred_fallthru
      _
    // Predicated region
    $region46: #{vae_forward.7} parent=1 // pred_check
      _
    $region47: #{vae_forward.7} parent=1 // pred_check_branch
      %348 = sbr.rel (0) target = $region49
    $region48: #{vae_forward.7} parent=1 // pred_region
      %350 = dma.done [#allocation5], 32
    $region49: #{vae_forward.7} parent=1 // pred_fallthru
      _
    %351 = vsyncpa [#allocation3], 1
    %352 = vsyncpa [#allocation5], 1

// kernel: vae_forward.8
$region0: #{vae_forward.8}
  #allocation0 [shape = 'u32[]', space=smem, size = 0x4, offset = 0x4, fixed_abs, tag = 'smem constant byte address 0x4 - core index']
  #allocation1 [shape = 'u32[72,128]{1,0:T(1,128)}', space=vmem, size = 0x9000, scoped, tag = 'internal scratch']
  %s0 = inlined_call_operand.vmem [shape: f32[2,216,512], index: 0, kind: input, shape index: {}]
  %s1 = inlined_call_operand.vmem [shape: f32[4,216], index: 1, kind: input, shape index: {}]
  %s2 = inlined_call_operand.vmem [shape: f32[4,1], index: 2, kind: input, shape index: {}]
  %s3 = inlined_call_operand.vmem [shape: f32[2,4,512], index: 3, kind: output, shape index: {}]
  %s4 = sld [smem:[#allocation0]]
  $region45: #{vae_forward.8} parent=0
    _
  %s6 = ssub.s32 1, %s4
  %s7 = scalar_select 0, %s6, %s4
  loop: start=0, step=1, limit=4
  $region2: #{vae_forward.8} parent=0 // loop_pre_header
    _
  $region3: #{vae_forward.8} parent=0 // loop_header
    %s9 = sphi 0, %s13
    %p10 = scmp.ge.s32.totalorder %s9, 4
    %s19 = sphi 0, %s21
    %s22 = sphi 0, %s19
    %s23 = sphi 0, %s22
    %s39 = sphi 0, %s23
    %s43 = sphi 0, %s43
    %s45 = sphi 0, %s43
    %s46 = sphi 0, %s45
    %s60 = sphi 0, %s46
    %s64 = sphi 0, %s64
    %s66 = sphi 0, %s64
    %s67 = sphi 0, %s66
    %s81 = sphi 0, %s67
    %s87 = sphi 0, %s89
    %s90 = sphi 0, %s87
    %s91 = sphi 0, %s90
    %s107 = sphi 0, %s91
  $region4: #{vae_forward.8} parent=0 // loop_header_branch
    %12 = sbr.rel (%p10) target = $region8
  $region5: #{vae_forward.8} parent=0 // loop_body
    %s14 = ssub.s32 %s9, 1
    %s15 = ssub.s32 %s9, 2
    %s16 = sadd.s32 %s9, 1
    %s17 = ssub.s32 %s9, %s16
    %p18 = scmp.eq.s32.totalorder %s17, 0
    %s20 = sadd.s32 %s19, 1
    %s21 = scalar_select %p18, %s19, %s20
    %p24 = pneg %p18
    %p25 = scmp.eq.s32.totalorder %s9, 1
    %p26 = por %p24, %p25
    %p27 = scmp.ne.s32.totalorder %s19, %s22
    %p28 = scmp.eq.s32.totalorder %s9, 0
    %p29 = por %p27, %p28
    %p30 = scmp.ne.s32.totalorder %s19, %s22
    %p31 = scmp.eq.s32.totalorder %s14, 1
    %p32 = por %p30, %p31
    %p33 = scmp.ne.s32.totalorder %s22, %s23
    %p34 = scmp.eq.s32.totalorder %s14, 0
    %p35 = por %p33, %p34
    %p36 = scmp.ne.s32.totalorder %s22, %s23
    %p37 = scmp.eq.s32.totalorder %s15, 1
    %p38 = por %p36, %p37
    %p40 = scmp.ne.s32.totalorder %s23, %s39
    %p41 = scmp.eq.s32.totalorder %s15, 0
    %p42 = por %p40, %p41
    %s44 = sadd.s32 %s43, 1
    %p47 = scmp.eq.s32.totalorder %s9, 1
    %p48 = scmp.ne.s32.totalorder %s43, %s45
    %p49 = scmp.eq.s32.totalorder %s9, 0
    %p50 = por %p48, %p49
    %p51 = scmp.ne.s32.totalorder %s43, %s45
    %p52 = scmp.eq.s32.totalorder %s14, 1
    %p53 = por %p51, %p52
    %p54 = scmp.ne.s32.totalorder %s45, %s46
    %p55 = scmp.eq.s32.totalorder %s14, 0
    %p56 = por %p54, %p55
    %p57 = scmp.ne.s32.totalorder %s45, %s46
    %p58 = scmp.eq.s32.totalorder %s15, 1
    %p59 = por %p57, %p58
    %p61 = scmp.ne.s32.totalorder %s46, %s60
    %p62 = scmp.eq.s32.totalorder %s15, 0
    %p63 = por %p61, %p62
    %s65 = sadd.s32 %s64, 1
    %p68 = scmp.eq.s32.totalorder %s9, 1
    %p69 = scmp.ne.s32.totalorder %s64, %s66
    %p70 = scmp.eq.s32.totalorder %s9, 0
    %p71 = por %p69, %p70
    %p72 = scmp.ne.s32.totalorder %s64, %s66
    %p73 = scmp.eq.s32.totalorder %s14, 1
    %p74 = por %p72, %p73
    %p75 = scmp.ne.s32.totalorder %s66, %s67
    %p76 = scmp.eq.s32.totalorder %s14, 0
    %p77 = por %p75, %p76
    %p78 = scmp.ne.s32.totalorder %s66, %s67
    %p79 = scmp.eq.s32.totalorder %s15, 1
    %p80 = por %p78, %p79
    %p82 = scmp.ne.s32.totalorder %s67, %s81
    %p83 = scmp.eq.s32.totalorder %s15, 0
    %p84 = por %p82, %p83
    %s85 = ssub.s32 %s9, %s16
    %p86 = scmp.eq.s32.totalorder %s85, 0
    %s88 = sadd.s32 %s87, 1
    %s89 = scalar_select %p86, %s87, %s88
    %p92 = pneg %p86
    %p93 = scmp.eq.s32.totalorder %s9, 1
    %p94 = por %p92, %p93
    %p95 = scmp.ne.s32.totalorder %s87, %s90
    %p96 = scmp.eq.s32.totalorder %s9, 0
    %p97 = por %p95, %p96
    %p98 = scmp.ne.s32.totalorder %s87, %s90
    %p99 = scmp.eq.s32.totalorder %s14, 1
    %p100 = por %p98, %p99
    %p101 = scmp.ne.s32.totalorder %s90, %s91
    %p102 = scmp.eq.s32.totalorder %s14, 0
    %p103 = por %p101, %p102
    %p104 = scmp.ne.s32.totalorder %s90, %s91
    %p105 = scmp.eq.s32.totalorder %s15, 1
    %p106 = por %p104, %p105
    %p108 = scmp.ne.s32.totalorder %s91, %s107
    %p109 = scmp.eq.s32.totalorder %s15, 0
    %p110 = por %p108, %p109
    %p111 = scmp.le.s32.totalorder 1, %s9
    %p112 = scmp.lt.s32.totalorder %s9, 3
    %p113 = pnand %p111, %p112
    %p114 = pneg %p113
    // Predicated region
    $region9: #{vae_forward.8} parent=5 // pred_check
      _
    $region10: #{vae_forward.8} parent=5 // pred_check_branch
      %116 = sbr.rel (%p113) target = $region12
    $region11: #{vae_forward.8} parent=5 // pred_region
      %s117 = ssub.s32 %s9, 1
      // Predicated region
      $region13: #{vae_forward.8} parent=11 // pred_check
        %p118 = pneg %p56
      $region14: #{vae_forward.8} parent=11 // pred_check_branch
        %120 = sbr.rel (%p118) target = $region16
      $region15: #{vae_forward.8} parent=11 // pred_region
        _
      $region16: #{vae_forward.8} parent=11 // pred_fallthru
        _
      // Predicated region
      $region17: #{vae_forward.8} parent=11 // pred_check
        %p121 = pneg %p77
      $region18: #{vae_forward.8} parent=11 // pred_check_branch
        %123 = sbr.rel (%p121) target = $region20
      $region19: #{vae_forward.8} parent=11 // pred_region
        _
      $region20: #{vae_forward.8} parent=11 // pred_fallthru
        _
    $region12: #{vae_forward.8} parent=5 // pred_fallthru
      _
    %p124 = scmp.lt.s32.totalorder %s9, 2
    // Predicated region
    $region21: #{vae_forward.8} parent=5 // pred_check
      %p125 = pneg %p124
    $region22: #{vae_forward.8} parent=5 // pred_check_branch
      %127 = sbr.rel (%p125) target = $region24
    $region23: #{vae_forward.8} parent=5 // pred_region
      // Predicated region
      $region25: #{vae_forward.8} parent=23 // pred_check
        %p128 = pneg %p29
      $region26: #{vae_forward.8} parent=23 // pred_check_branch
        %130 = sbr.rel (%p128) target = $region28
      $region27: #{vae_forward.8} parent=23 // pred_region
        %p131 = scmp.lt.s32.totalorder %s9, 1
        %s132 = scalar_select %p131, %s9, 1
        %s133 = smul.addr %s132, 108
        %s134 = smul.addr %s133, 8
        %s135 = scalar_lea.vmem %s0, %s134
      $region28: #{vae_forward.8} parent=23 // pred_fallthru
        _
    $region24: #{vae_forward.8} parent=5 // pred_fallthru
      _
    %p136 = scmp.le.s32.totalorder 1, %s9
    %p137 = scmp.lt.s32.totalorder %s9, 3
    %p138 = pnand %p136, %p137
    %p139 = pneg %p138
    // Predicated region
    $region29: #{vae_forward.8} parent=5 // pred_check
      _
    $region30: #{vae_forward.8} parent=5 // pred_check_branch
      %141 = sbr.rel (%p138) target = $region32
    $region31: #{vae_forward.8} parent=5 // pred_region
      %s142 = ssub.s32 %s9, 1
      %p143 = scmp.lt.s32.totalorder %s14, 1
      %s144 = scalar_select %p143, %s14, 1
      %s145 = smul.addr %s144, 108
      %s146 = smul.addr %s145, 8
      %s147 = scalar_lea.vmem %s0, %s146
      %p148 = pneg %p35
      %p149 = pneg %p32
      %p150 = pneg %p56
      %p151 = pneg %p53
      %p152 = pneg %p77
      %p153 = pneg %p74
      %p154 = pneg %p103
      %p155 = pneg %p100
      %p156 = scmp.lt.s32.totalorder %s14, 1
      %s157 = scalar_select %p156, %s14, 1
      %s158 = smul.addr %s157, 4
      %s159 = smul.addr %s158, 4
      %s160 = scalar_lea.vmem %s3, %s159
      %p161 = scmp.lt.s32.totalorder %s14, 1
      %s162 = scalar_select %p161, %s14, 1
      %s163 = smul.addr %s162, 108
      %s164 = smul.addr %s163, 8
      %s165 = scalar_lea.vmem %s0, %s164
      %p166 = scmp.lt.s32.totalorder %s14, 1
      %s167 = scalar_select %p166, %s14, 1
      %s168 = smul.addr %s167, 4
      %s169 = smul.addr %s168, 4
      %s170 = scalar_lea.vmem %s3, %s169
      %v171 = vld [vmem:[%s1] sm:$0xff]
      %v172 = vld [vmem:[%s165] sm:$0xff]
      %v173 = vld [vmem:[%s165 + $0x8] sm:$0xff]
      %v174 = vld [vmem:[%s165 + $0x10] sm:$0xff]
      %v175 = vld [vmem:[%s165 + $0x18] sm:$0xff]
      %v176 = vld [vmem:[%s165 + $0x20] sm:$0xff]
      %v177 = vld [vmem:[%s165 + $0x28] sm:$0xff]
      %v178 = vld [vmem:[%s165 + $0x30] sm:$0xff]
      %v179 = vld [vmem:[%s165 + $0x38] sm:$0xff]
      %v180 = vld [vmem:[%s165 + $0x40] sm:$0xff]
      %v181 = vld [vmem:[%s165 + $0x48] sm:$0xff]
      %v182 = vld [vmem:[%s165 + $0x50] sm:$0xff]
      %v183 = vld [vmem:[%s165 + $0x58] sm:$0xff]
      %v184 = vld [vmem:[%s165 + $0x60] sm:$0xff]
      %v185 = vld [vmem:[%s165 + $0x68] sm:$0xff]
      %v186 = vld [vmem:[%s165 + $0x70] sm:$0xff]
      %v187 = vld [vmem:[%s165 + $0x78] sm:$0xff]
      %v188 = vld [vmem:[%s165 + $0x80] sm:$0xff]
      %v189 = vld [vmem:[%s165 + $0x88] sm:$0xff]
      %v190 = vld [vmem:[%s165 + $0x90] sm:$0xff]
      %v191 = vld [vmem:[%s165 + $0x98] sm:$0xff]
      %v192 = vld [vmem:[%s165 + $0xa0] sm:$0xff]
      %v193 = vld [vmem:[%s165 + $0xa8] sm:$0xff]
      %v194 = vld [vmem:[%s165 + $0xb0] sm:$0xff]
      %v195 = vld [vmem:[%s165 + $0xb8] sm:$0xff]
      %v196 = vld [vmem:[%s165 + $0xc0] sm:$0xff]
      %v197 = vld [vmem:[%s165 + $0xc8] sm:$0xff]
      %v198 = vld [vmem:[%s165 + $0xd0] sm:$0xff]
      %v199 = vld [vmem:[%s165 + $0xd8] sm:$0xff]
      %v200 = vld [vmem:[%s165 + $0xe0] sm:$0xff]
      %v201 = vld [vmem:[%s165 + $0xe8] sm:$0xff]
      %v202 = vld [vmem:[%s165 + $0xf0] sm:$0xff]
      %v203 = vld [vmem:[%s165 + $0xf8] sm:$0xff]
      %v204 = vld [vmem:[%s165 + $0x100] sm:$0xff]
      %v205 = vld [vmem:[%s165 + $0x108] sm:$0xff]
      %v206 = vld [vmem:[%s165 + $0x110] sm:$0xff]
      %v207 = vld [vmem:[%s165 + $0x118] sm:$0xff]
      %v208 = vld [vmem:[%s165 + $0x120] sm:$0xff]
      %v209 = vld [vmem:[%s165 + $0x128] sm:$0xff]
      %v210 = vld [vmem:[%s165 + $0x130] sm:$0xff]
      %v211 = vld [vmem:[%s165 + $0x138] sm:$0xff]
      %v212 = vld [vmem:[%s165 + $0x140] sm:$0xff]
      %v213 = vld [vmem:[%s165 + $0x148] sm:$0xff]
      %v214 = vld [vmem:[%s165 + $0x150] sm:$0xff]
      %v215 = vld [vmem:[%s165 + $0x158] sm:$0xff]
      %v216 = vld [vmem:[%s165 + $0x160] sm:$0xff]
      %v217 = vld [vmem:[%s165 + $0x168] sm:$0xff]
      %v218 = vld [vmem:[%s165 + $0x170] sm:$0xff]
      %v219 = vld [vmem:[%s165 + $0x178] sm:$0xff]
      %v220 = vld [vmem:[%s165 + $0x180] sm:$0xff]
      %v221 = vld [vmem:[%s165 + $0x188] sm:$0xff]
      %v222 = vld [vmem:[%s165 + $0x190] sm:$0xff]
      %v223 = vld [vmem:[%s165 + $0x198] sm:$0xff]
      %v224 = vld [vmem:[%s165 + $0x1a0] sm:$0xff]
      %v225 = vld [vmem:[%s165 + $0x1a8] sm:$0xff]
      %v226 = vld [vmem:[%s165 + $0x1b0] sm:$0xff]
      %v227 = vld [vmem:[%s165 + $0x1b8] sm:$0xff]
      %v228 = vld [vmem:[%s165 + $0x1c0] sm:$0xff]
      %v229 = vld [vmem:[%s165 + $0x1c8] sm:$0xff]
      %v230 = vld [vmem:[%s165 + $0x1d0] sm:$0xff]
      %v231 = vld [vmem:[%s165 + $0x1d8] sm:$0xff]
      %v232 = vld [vmem:[%s165 + $0x1e0] sm:$0xff]
      %v233 = vld [vmem:[%s165 + $0x1e8] sm:$0xff]
      %v234 = vld [vmem:[%s165 + $0x1f0] sm:$0xff]
      %v235 = vld [vmem:[%s165 + $0x1f8] sm:$0xff]
      %v236 = vld [vmem:[%s165 + $0x200] sm:$0xff]
      %v237 = vld [vmem:[%s165 + $0x208] sm:$0xff]
      %v238 = vld [vmem:[%s165 + $0x210] sm:$0xff]
      %v239 = vld [vmem:[%s165 + $0x218] sm:$0xff]
      %v240 = vld [vmem:[%s165 + $0x220] sm:$0xff]
      %v241 = vld [vmem:[%s165 + $0x228] sm:$0xff]
      %v242 = vld [vmem:[%s165 + $0x230] sm:$0xff]
      %v243 = vld [vmem:[%s165 + $0x238] sm:$0xff]
      %v244 = vld [vmem:[%s165 + $0x240] sm:$0xff]
      %v245 = vld [vmem:[%s165 + $0x248] sm:$0xff]
      %v246 = vld [vmem:[%s165 + $0x250] sm:$0xff]
      %v247 = vld [vmem:[%s165 + $0x258] sm:$0xff]
      %v248 = vld [vmem:[%s165 + $0x260] sm:$0xff]
      %v249 = vld [vmem:[%s165 + $0x268] sm:$0xff]
      %v250 = vld [vmem:[%s165 + $0x270] sm:$0xff]
      %v251 = vld [vmem:[%s165 + $0x278] sm:$0xff]
      %v252 = vld [vmem:[%s165 + $0x280] sm:$0xff]
      %v253 = vld [vmem:[%s165 + $0x288] sm:$0xff]
      %v254 = vld [vmem:[%s165 + $0x290] sm:$0xff]
      %v255 = vld [vmem:[%s165 + $0x298] sm:$0xff]
      %v256 = vld [vmem:[%s165 + $0x2a0] sm:$0xff]
      %v257 = vld [vmem:[%s165 + $0x2a8] sm:$0xff]
      %v258 = vld [vmem:[%s165 + $0x2b0] sm:$0xff]
      %v259 = vld [vmem:[%s165 + $0x2b8] sm:$0xff]
      %v260 = vld [vmem:[%s165 + $0x2c0] sm:$0xff]
      %v261 = vld [vmem:[%s165 + $0x2c8] sm:$0xff]
      %v262 = vld [vmem:[%s165 + $0x2d0] sm:$0xff]
      %v263 = vld [vmem:[%s165 + $0x2d8] sm:$0xff]
      %v264 = vld [vmem:[%s165 + $0x2e0] sm:$0xff]
      %v265 = vld [vmem:[%s165 + $0x2e8] sm:$0xff]
      %v266 = vld [vmem:[%s165 + $0x2f0] sm:$0xff]
      %v267 = vld [vmem:[%s165 + $0x2f8] sm:$0xff]
      %v268 = vld [vmem:[%s165 + $0x300] sm:$0xff]
      %v269 = vld [vmem:[%s165 + $0x308] sm:$0xff]
      %v270 = vld [vmem:[%s165 + $0x310] sm:$0xff]
      %v271 = vld [vmem:[%s165 + $0x318] sm:$0xff]
      %v272 = vld [vmem:[%s165 + $0x320] sm:$0xff]
      %v273 = vld [vmem:[%s165 + $0x328] sm:$0xff]
      %v274 = vld [vmem:[%s165 + $0x330] sm:$0xff]
      %v275 = vld [vmem:[%s165 + $0x338] sm:$0xff]
      %v276 = vld [vmem:[%s165 + $0x340] sm:$0xff]
      %v277 = vld [vmem:[%s165 + $0x348] sm:$0xff]
      %v278 = vld [vmem:[%s165 + $0x350] sm:$0xff]
      %v279 = vld [vmem:[%s165 + $0x358] sm:$0xff]
      %v280 = vld [vmem:[%s2] sm:$0xf]
      %282 = vset.pattern.permute.xlu0 0
      %283 = vperm.xlu0 %282, %v280
      %v284 = vpop.permute.xlu0 %283
      %287 = vst [vmem:[#allocation1] ss:$2 sm:$0xff] %v171
      %v288 = vld.sshfl [vmem:[#allocation1] sm:$0xff pattern:$0x75316420]
      %v289 = vld.sshfl [vmem:[#allocation1 + $0x8] sm:$0xff pattern:$0x75316420]
      %vm291 = vcmask 719872
      %v292 = vsel %vm291, %v289, 0
      %294 = vmatpush.msra.mxu0 %v232
      %295 = vmatpush.msra.mxu0 %v228
      %296 = vmatpush.msra.mxu0 %v224
      %297 = vmatpush.msra.mxu0 %v220
      %298 = vmatpush.msra.mxu0 %v216
      %299 = vmatpush.msra.mxu0 %v212
      %300 = vmatpush.msra.mxu0 %v208
      %301 = vmatpush.msra.mxu0 %v204
      %302 = vmatpush.msra.mxu0 %v200
      %303 = vmatpush.msra.mxu0 %v196
      %304 = vmatpush.msra.mxu0 %v192
      %305 = vmatpush.msra.mxu0 %v188
      %306 = vmatpush.msra.mxu0 %v184
      %307 = vmatpush.msra.mxu0 %v180
      %308 = vmatpush.msra.mxu0 %v176
      %309 = vmatpush.msra.mxu0 %v172
      %310 = vmatmul.f32.gmra.mxu0 %v288
      %v311 = vpop.f32.mrf.mxu0
      %v312 = vadd.f32 %v284, %v311
      %313 = vdwg.mxu0
      %314 = vmatpush.msra.mxu0 0.0
      %315 = vmatpush.msra.mxu0 0.0
      %316 = vmatpush.msra.mxu0 0.0
      %317 = vmatpush.msra.mxu0 0.0
      %318 = vmatpush.msra.mxu0 0.0
      %319 = vmatpush.msra.mxu0 %v276
      %320 = vmatpush.msra.mxu0 %v272
      %321 = vmatpush.msra.mxu0 %v268
      %322 = vmatpush.msra.mxu0 %v264
      %323 = vmatpush.msra.mxu0 %v260
      %324 = vmatpush.msra.mxu0 %v256
      %325 = vmatpush.msra.mxu0 %v252
      %326 = vmatpush.msra.mxu0 %v248
      %327 = vmatpush.msra.mxu0 %v244
      %328 = vmatpush.msra.mxu0 %v240
      %329 = vmatpush.msra.mxu0 %v236
      %330 = vmatmul.f32.gmra.mxu0 %v292
      %v331 = vpop.f32.mrf.mxu0
      %v332 = vadd.f32 %v312, %v331
      %333 = vdwg.mxu0
      %334 = vmatpush.msra.mxu0 %v233
      %335 = vmatpush.msra.mxu0 %v229
      %336 = vmatpush.msra.mxu0 %v225
      %337 = vmatpush.msra.mxu0 %v221
      %338 = vmatpush.msra.mxu0 %v217
      %339 = vmatpush.msra.mxu0 %v213
      %340 = vmatpush.msra.mxu0 %v209
      %341 = vmatpush.msra.mxu0 %v205
      %342 = vmatpush.msra.mxu0 %v201
      %343 = vmatpush.msra.mxu0 %v197
      %344 = vmatpush.msra.mxu0 %v193
      %345 = vmatpush.msra.mxu0 %v189
      %346 = vmatpush.msra.mxu0 %v185
      %347 = vmatpush.msra.mxu0 %v181
      %348 = vmatpush.msra.mxu0 %v177
      %349 = vmatpush.msra.mxu0 %v173
      %350 = vmatmul.f32.gmra.mxu0 %v288
      %v351 = vpop.f32.mrf.mxu0
      %v352 = vadd.f32 %v284, %v351
      %353 = vdwg.mxu0
      %354 = vmatpush.msra.mxu0 0.0
      %355 = vmatpush.msra.mxu0 0.0
      %356 = vmatpush.msra.mxu0 0.0
      %357 = vmatpush.msra.mxu0 0.0
      %358 = vmatpush.msra.mxu0 0.0
      %359 = vmatpush.msra.mxu0 %v277
      %360 = vmatpush.msra.mxu0 %v273
      %361 = vmatpush.msra.mxu0 %v269
      %362 = vmatpush.msra.mxu0 %v265
      %363 = vmatpush.msra.mxu0 %v261
      %364 = vmatpush.msra.mxu0 %v257
      %365 = vmatpush.msra.mxu0 %v253
      %366 = vmatpush.msra.mxu0 %v249
      %367 = vmatpush.msra.mxu0 %v245
      %368 = vmatpush.msra.mxu0 %v241
      %369 = vmatpush.msra.mxu0 %v237
      %370 = vmatmul.f32.gmra.mxu0 %v292
      %v371 = vpop.f32.mrf.mxu0
      %v372 = vadd.f32 %v352, %v371
      %373 = vdwg.mxu0
      %374 = vmatpush.msra.mxu0 %v234
      %375 = vmatpush.msra.mxu0 %v230
      %376 = vmatpush.msra.mxu0 %v226
      %377 = vmatpush.msra.mxu0 %v222
      %378 = vmatpush.msra.mxu0 %v218
      %379 = vmatpush.msra.mxu0 %v214
      %380 = vmatpush.msra.mxu0 %v210
      %381 = vmatpush.msra.mxu0 %v206
      %382 = vmatpush.msra.mxu0 %v202
      %383 = vmatpush.msra.mxu0 %v198
      %384 = vmatpush.msra.mxu0 %v194
      %385 = vmatpush.msra.mxu0 %v190
      %386 = vmatpush.msra.mxu0 %v186
      %387 = vmatpush.msra.mxu0 %v182
      %388 = vmatpush.msra.mxu0 %v178
      %389 = vmatpush.msra.mxu0 %v174
      %390 = vmatmul.f32.gmra.mxu0 %v288
      %v391 = vpop.f32.mrf.mxu0
      %v392 = vadd.f32 %v284, %v391
      %393 = vdwg.mxu0
      %394 = vmatpush.msra.mxu0 0.0
      %395 = vmatpush.msra.mxu0 0.0
      %396 = vmatpush.msra.mxu0 0.0
      %397 = vmatpush.msra.mxu0 0.0
      %398 = vmatpush.msra.mxu0 0.0
      %399 = vmatpush.msra.mxu0 %v278
      %400 = vmatpush.msra.mxu0 %v274
      %401 = vmatpush.msra.mxu0 %v270
      %402 = vmatpush.msra.mxu0 %v266
      %403 = vmatpush.msra.mxu0 %v262
      %404 = vmatpush.msra.mxu0 %v258
      %405 = vmatpush.msra.mxu0 %v254
      %406 = vmatpush.msra.mxu0 %v250
      %407 = vmatpush.msra.mxu0 %v246
      %408 = vmatpush.msra.mxu0 %v242
      %409 = vmatpush.msra.mxu0 %v238
      %410 = vmatmul.f32.gmra.mxu0 %v292
      %v411 = vpop.f32.mrf.mxu0
      %v412 = vadd.f32 %v392, %v411
      %413 = vdwg.mxu0
      %414 = vmatpush.msra.mxu0 %v235
      %415 = vmatpush.msra.mxu0 %v231
      %416 = vmatpush.msra.mxu0 %v227
      %417 = vmatpush.msra.mxu0 %v223
      %418 = vmatpush.msra.mxu0 %v219
      %419 = vmatpush.msra.mxu0 %v215
      %420 = vmatpush.msra.mxu0 %v211
      %421 = vmatpush.msra.mxu0 %v207
      %422 = vmatpush.msra.mxu0 %v203
      %423 = vmatpush.msra.mxu0 %v199
      %424 = vmatpush.msra.mxu0 %v195
      %425 = vmatpush.msra.mxu0 %v191
      %426 = vmatpush.msra.mxu0 %v187
      %427 = vmatpush.msra.mxu0 %v183
      %428 = vmatpush.msra.mxu0 %v179
      %429 = vmatpush.msra.mxu0 %v175
      %430 = vmatmul.f32.gmra.mxu0 %v288
      %v431 = vpop.f32.mrf.mxu0
      %v432 = vadd.f32 %v284, %v431
      %433 = vdwg.mxu0
      %434 = vmatpush.msra.mxu0 0.0
      %435 = vmatpush.msra.mxu0 0.0
      %436 = vmatpush.msra.mxu0 0.0
      %437 = vmatpush.msra.mxu0 0.0
      %438 = vmatpush.msra.mxu0 0.0
      %439 = vmatpush.msra.mxu0 %v279
      %440 = vmatpush.msra.mxu0 %v275
      %441 = vmatpush.msra.mxu0 %v271
      %442 = vmatpush.msra.mxu0 %v267
      %443 = vmatpush.msra.mxu0 %v263
      %444 = vmatpush.msra.mxu0 %v259
      %445 = vmatpush.msra.mxu0 %v255
      %446 = vmatpush.msra.mxu0 %v251
      %447 = vmatpush.msra.mxu0 %v247
      %448 = vmatpush.msra.mxu0 %v243
      %449 = vmatpush.msra.mxu0 %v239
      %450 = vmatmul.f32.gmra.mxu0 %v292
      %v451 = vpop.f32.mrf.mxu0
      %v452 = vadd.f32 %v432, %v451
      %453 = vdwg.mxu0
      %vm454 = vcmask 1043456
      %v455 = vsel %vm454, %v332, 0.0
      %v456 = vsel %vm454, %v372, 0.0
      %v457 = vadd.f32 %v455, %v456
      %v458 = vsel %vm454, %v412, 0.0
      %v459 = vadd.f32 %v457, %v458
      %v460 = vsel %vm454, %v452, 0.0
      %v461 = vadd.f32 %v459, %v460
      %462 = vadd.xlane.f32.xlu0 %v461
      %v463 = vpop.xlane.xlu0 %462
      %v464 = vrcp.pop 512.0
      %v465 = vmul.f32 512.0, %v464
      %v466 = vsub.f32 1.0, %v465
      %v467 = vmul.f32 %v464, %v466
      %v468 = vadd.f32 %v464, %v467
      %vm469 = vweird.f32 %v464
      %v470 = vsel %vm469, %v464, %v468
      %v471 = vmul.f32 %v463, %v470
      %v472 = vsub.f32 %v332, %v471
      %v473 = vsub.f32 %v372, %v471
      %v474 = vsub.f32 %v412, %v471
      %v475 = vsub.f32 %v452, %v471
      %v476 = vmul.f32 %v472, %v472
      %v477 = vmul.f32 %v473, %v473
      %v478 = vmul.f32 %v474, %v474
      %v479 = vmul.f32 %v475, %v475
      %v480 = vsel %vm454, %v476, 0.0
      %v481 = vsel %vm454, %v477, 0.0
      %v482 = vadd.f32 %v480, %v481
      %v483 = vsel %vm454, %v478, 0.0
      %v484 = vadd.f32 %v482, %v483
      %v485 = vsel %vm454, %v479, 0.0
      %v486 = vadd.f32 %v484, %v485
      %487 = vadd.xlane.f32.xlu0 %v486
      %v488 = vpop.xlane.xlu0 %487
      %v489 = vmul.f32 %v488, %v470
      %v490 = vadd.f32 %v489, 1e-05
      %v491 = vrsqrt.pop %v490
      %v492 = vmul.f32 %v491, %v490
      %v493 = vmul.f32 %v492, %v491
      %v494 = vmul.f32 0.5, %v493
      %v495 = vsub.f32 1.5, %v494
      %v496 = vmul.f32 %v491, %v495
      %vm497 = vweird.f32 %v490
      %vm498 = vweird.f32 %v491
      %vm499 = vmor %vm497, %vm498
      %v500 = vsel %vm499, %v491, %v496
      %v501 = vmul.f32 %v472, %v500
      %v502 = vmul.f32 %v473, %v500
      %v503 = vmul.f32 %v474, %v500
      %v504 = vmul.f32 %v475, %v500
      %vm505 = vcmp.ge.f32.partialorder %v501, 0.0
      %vm506 = vcmp.ge.f32.partialorder %v502, 0.0
      %vm507 = vcmp.ge.f32.partialorder %v503, 0.0
      %vm508 = vcmp.ge.f32.partialorder %v504, 0.0
      %v509 = vmul.f32 %v501, 0.01
      %v510 = vmul.f32 %v502, 0.01
      %v511 = vmul.f32 %v503, 0.01
      %v512 = vmul.f32 %v504, 0.01
      %v513 = vsel %vm505, %v501, %v509
      %v514 = vsel %vm506, %v502, %v510
      %v515 = vsel %vm507, %v503, %v511
      %v516 = vsel %vm508, %v504, %v512
      %v521 = vrot.slane %v514, 4
      %v522 = vrot.slane %v516, 4
      %v523 = vsel %vm454, %v513, %v521
      %v524 = vsel %vm454, %v515, %v522
      %527 = vst [vmem:[%s170] sm:$0xff] %v523
      %528 = vst [vmem:[%s170 + $0x8] sm:$0xff] %v524
      %p529 = scmp.lt.s32.totalorder %s14, 1
      %s530 = scalar_select %p529, %s14, 1
      %s531 = smul.addr %s530, 4
      %s532 = smul.addr %s531, 4
      %s533 = scalar_lea.vmem %s3, %s532
      // Predicated region
      $region33: #{vae_forward.8} parent=31 // pred_check
        %p534 = pneg %p100
      $region34: #{vae_forward.8} parent=31 // pred_check_branch
        %536 = sbr.rel (%p534) target = $region36
      $region35: #{vae_forward.8} parent=31 // pred_region
        _
      $region36: #{vae_forward.8} parent=31 // pred_fallthru
        _
    $region32: #{vae_forward.8} parent=5 // pred_fallthru
      _
    %p537 = scmp.le.s32.totalorder 2, %s9
    // Predicated region
    $region37: #{vae_forward.8} parent=5 // pred_check
      %p538 = pneg %p537
    $region38: #{vae_forward.8} parent=5 // pred_check_branch
      %540 = sbr.rel (%p538) target = $region40
    $region39: #{vae_forward.8} parent=5 // pred_region
      %s541 = ssub.s32 %s9, 2
      // Predicated region
      $region41: #{vae_forward.8} parent=39 // pred_check
        %p542 = pneg %p106
      $region42: #{vae_forward.8} parent=39 // pred_check_branch
        %544 = sbr.rel (%p542) target = $region44
      $region43: #{vae_forward.8} parent=39 // pred_region
        %p545 = scmp.lt.s32.totalorder %s15, 1
        %s546 = scalar_select %p545, %s15, 1
        %s547 = smul.addr %s546, 4
        %s548 = smul.addr %s547, 4
        %s549 = scalar_lea.vmem %s3, %s548
      $region44: #{vae_forward.8} parent=39 // pred_fallthru
        _
    $region40: #{vae_forward.8} parent=5 // pred_fallthru
      _
  $region6: #{vae_forward.8} parent=0 // loop_footer
    %s13 = sadd.s32 1, %s9
  $region7: #{vae_forward.8} parent=0 // loop_footer_branch
    %8 = sbr.rel target = $region3
  $region8: #{vae_forward.8} parent=0 // loop_exit
    _

// kernel: vae_forward.9
$region0: #{vae_forward.9}
  #allocation0 [shape = 'u32[]', space=smem, size = 0x4, offset = 0x4, fixed_abs, tag = 'smem constant byte address 0x4 - core index']
  #allocation1 [shape = 'u32[72,128]{1,0:T(1,128)}', space=vmem, size = 0x9000, scoped, tag = 'internal scratch']
  #allocation2 [shape = 'f32[1,1]{1,0:T(1,128)S(1)}', space=vmem, size = 0x200, scoped, tag = 'scoped memory for vae_forward.9']
  %s0 = inlined_call_operand.vmem [shape: f32[2,108,4096], index: 0, kind: input, shape index: {}]
  %s1 = inlined_call_operand.vmem [shape: f32[1,108], index: 1, kind: input, shape index: {}]
  %s2 = inlined_call_operand.<no memory space> [shape: f32[1,1], index: 2, kind: input, shape index: {}]
  %s3 = inlined_call_operand.vmem [shape: f32[2,1,4096], index: 3, kind: output, shape index: {}]
  %s4 = sld [smem:[#allocation0]]
  $region45: #{vae_forward.9} parent=0
    _
  %s6 = ssub.s32 1, %s4
  %s7 = scalar_select 0, %s6, %s4
  %v8 = vstv %s2
  %9 = vst [vmem:[#allocation2] sm:$0x1] %v8
  loop: start=0, step=1, limit=4
  $region2: #{vae_forward.9} parent=0 // loop_pre_header
    _
  $region3: #{vae_forward.9} parent=0 // loop_header
    %s11 = sphi 0, %s15
    %p12 = scmp.ge.s32.totalorder %s11, 4
    %s21 = sphi 0, %s23
    %s24 = sphi 0, %s21
    %s25 = sphi 0, %s24
    %s41 = sphi 0, %s25
    %s45 = sphi 0, %s45
    %s47 = sphi 0, %s45
    %s48 = sphi 0, %s47
    %s62 = sphi 0, %s48
    %s66 = sphi 0, %s66
    %s68 = sphi 0, %s66
    %s69 = sphi 0, %s68
    %s83 = sphi 0, %s69
    %s89 = sphi 0, %s91
    %s92 = sphi 0, %s89
    %s93 = sphi 0, %s92
    %s109 = sphi 0, %s93
  $region4: #{vae_forward.9} parent=0 // loop_header_branch
    %14 = sbr.rel (%p12) target = $region8
  $region5: #{vae_forward.9} parent=0 // loop_body
    %s16 = ssub.s32 %s11, 1
    %s17 = ssub.s32 %s11, 2
    %s18 = sadd.s32 %s11, 1
    %s19 = ssub.s32 %s11, %s18
    %p20 = scmp.eq.s32.totalorder %s19, 0
    %s22 = sadd.s32 %s21, 1
    %s23 = scalar_select %p20, %s21, %s22
    %p26 = pneg %p20
    %p27 = scmp.eq.s32.totalorder %s11, 1
    %p28 = por %p26, %p27
    %p29 = scmp.ne.s32.totalorder %s21, %s24
    %p30 = scmp.eq.s32.totalorder %s11, 0
    %p31 = por %p29, %p30
    %p32 = scmp.ne.s32.totalorder %s21, %s24
    %p33 = scmp.eq.s32.totalorder %s16, 1
    %p34 = por %p32, %p33
    %p35 = scmp.ne.s32.totalorder %s24, %s25
    %p36 = scmp.eq.s32.totalorder %s16, 0
    %p37 = por %p35, %p36
    %p38 = scmp.ne.s32.totalorder %s24, %s25
    %p39 = scmp.eq.s32.totalorder %s17, 1
    %p40 = por %p38, %p39
    %p42 = scmp.ne.s32.totalorder %s25, %s41
    %p43 = scmp.eq.s32.totalorder %s17, 0
    %p44 = por %p42, %p43
    %s46 = sadd.s32 %s45, 1
    %p49 = scmp.eq.s32.totalorder %s11, 1
    %p50 = scmp.ne.s32.totalorder %s45, %s47
    %p51 = scmp.eq.s32.totalorder %s11, 0
    %p52 = por %p50, %p51
    %p53 = scmp.ne.s32.totalorder %s45, %s47
    %p54 = scmp.eq.s32.totalorder %s16, 1
    %p55 = por %p53, %p54
    %p56 = scmp.ne.s32.totalorder %s47, %s48
    %p57 = scmp.eq.s32.totalorder %s16, 0
    %p58 = por %p56, %p57
    %p59 = scmp.ne.s32.totalorder %s47, %s48
    %p60 = scmp.eq.s32.totalorder %s17, 1
    %p61 = por %p59, %p60
    %p63 = scmp.ne.s32.totalorder %s48, %s62
    %p64 = scmp.eq.s32.totalorder %s17, 0
    %p65 = por %p63, %p64
    %s67 = sadd.s32 %s66, 1
    %p70 = scmp.eq.s32.totalorder %s11, 1
    %p71 = scmp.ne.s32.totalorder %s66, %s68
    %p72 = scmp.eq.s32.totalorder %s11, 0
    %p73 = por %p71, %p72
    %p74 = scmp.ne.s32.totalorder %s66, %s68
    %p75 = scmp.eq.s32.totalorder %s16, 1
    %p76 = por %p74, %p75
    %p77 = scmp.ne.s32.totalorder %s68, %s69
    %p78 = scmp.eq.s32.totalorder %s16, 0
    %p79 = por %p77, %p78
    %p80 = scmp.ne.s32.totalorder %s68, %s69
    %p81 = scmp.eq.s32.totalorder %s17, 1
    %p82 = por %p80, %p81
    %p84 = scmp.ne.s32.totalorder %s69, %s83
    %p85 = scmp.eq.s32.totalorder %s17, 0
    %p86 = por %p84, %p85
    %s87 = ssub.s32 %s11, %s18
    %p88 = scmp.eq.s32.totalorder %s87, 0
    %s90 = sadd.s32 %s89, 1
    %s91 = scalar_select %p88, %s89, %s90
    %p94 = pneg %p88
    %p95 = scmp.eq.s32.totalorder %s11, 1
    %p96 = por %p94, %p95
    %p97 = scmp.ne.s32.totalorder %s89, %s92
    %p98 = scmp.eq.s32.totalorder %s11, 0
    %p99 = por %p97, %p98
    %p100 = scmp.ne.s32.totalorder %s89, %s92
    %p101 = scmp.eq.s32.totalorder %s16, 1
    %p102 = por %p100, %p101
    %p103 = scmp.ne.s32.totalorder %s92, %s93
    %p104 = scmp.eq.s32.totalorder %s16, 0
    %p105 = por %p103, %p104
    %p106 = scmp.ne.s32.totalorder %s92, %s93
    %p107 = scmp.eq.s32.totalorder %s17, 1
    %p108 = por %p106, %p107
    %p110 = scmp.ne.s32.totalorder %s93, %s109
    %p111 = scmp.eq.s32.totalorder %s17, 0
    %p112 = por %p110, %p111
    %p113 = scmp.le.s32.totalorder 1, %s11
    %p114 = scmp.lt.s32.totalorder %s11, 3
    %p115 = pnand %p113, %p114
    %p116 = pneg %p115
    // Predicated region
    $region9: #{vae_forward.9} parent=5 // pred_check
      _
    $region10: #{vae_forward.9} parent=5 // pred_check_branch
      %118 = sbr.rel (%p115) target = $region12
    $region11: #{vae_forward.9} parent=5 // pred_region
      %s119 = ssub.s32 %s11, 1
      // Predicated region
      $region13: #{vae_forward.9} parent=11 // pred_check
        %p120 = pneg %p58
      $region14: #{vae_forward.9} parent=11 // pred_check_branch
        %122 = sbr.rel (%p120) target = $region16
      $region15: #{vae_forward.9} parent=11 // pred_region
        _
      $region16: #{vae_forward.9} parent=11 // pred_fallthru
        _
      // Predicated region
      $region17: #{vae_forward.9} parent=11 // pred_check
        %p123 = pneg %p79
      $region18: #{vae_forward.9} parent=11 // pred_check_branch
        %125 = sbr.rel (%p123) target = $region20
      $region19: #{vae_forward.9} parent=11 // pred_region
        _
      $region20: #{vae_forward.9} parent=11 // pred_fallthru
        _
    $region12: #{vae_forward.9} parent=5 // pred_fallthru
      _
    %p126 = scmp.lt.s32.totalorder %s11, 2
    // Predicated region
    $region21: #{vae_forward.9} parent=5 // pred_check
      %p127 = pneg %p126
    $region22: #{vae_forward.9} parent=5 // pred_check_branch
      %129 = sbr.rel (%p127) target = $region24
    $region23: #{vae_forward.9} parent=5 // pred_region
      // Predicated region
      $region25: #{vae_forward.9} parent=23 // pred_check
        %p130 = pneg %p31
      $region26: #{vae_forward.9} parent=23 // pred_check_branch
        %132 = sbr.rel (%p130) target = $region28
      $region27: #{vae_forward.9} parent=23 // pred_region
        %p133 = scmp.lt.s32.totalorder %s11, 1
        %s134 = scalar_select %p133, %s11, 1
        %s135 = smul.addr %s134, 448
        %s136 = smul.addr %s135, 8
        %s137 = scalar_lea.vmem %s0, %s136
      $region28: #{vae_forward.9} parent=23 // pred_fallthru
        _
    $region24: #{vae_forward.9} parent=5 // pred_fallthru
      _
    %p138 = scmp.le.s32.totalorder 1, %s11
    %p139 = scmp.lt.s32.totalorder %s11, 3
    %p140 = pnand %p138, %p139
    %p141 = pneg %p140
    // Predicated region
    $region29: #{vae_forward.9} parent=5 // pred_check
      _
    $region30: #{vae_forward.9} parent=5 // pred_check_branch
      %143 = sbr.rel (%p140) target = $region32
    $region31: #{vae_forward.9} parent=5 // pred_region
      %s144 = ssub.s32 %s11, 1
      %p145 = scmp.lt.s32.totalorder %s16, 1
      %s146 = scalar_select %p145, %s16, 1
      %s147 = smul.addr %s146, 448
      %s148 = smul.addr %s147, 8
      %s149 = scalar_lea.vmem %s0, %s148
      %p150 = pneg %p37
      %p151 = pneg %p34
      %p152 = pneg %p58
      %p153 = pneg %p55
      %p154 = pneg %p79
      %p155 = pneg %p76
      %p156 = pneg %p105
      %p157 = pneg %p102
      %p158 = scmp.lt.s32.totalorder %s16, 1
      %s159 = scalar_select %p158, %s16, 1
      %s160 = smul.addr %s159, 32
      %s161 = scalar_lea.vmem %s3, %s160
      %p162 = scmp.lt.s32.totalorder %s16, 1
      %s163 = scalar_select %p162, %s16, 1
      %s164 = smul.addr %s163, 448
      %s165 = smul.addr %s164, 8
      %s166 = scalar_lea.vmem %s0, %s165
      %p167 = scmp.lt.s32.totalorder %s16, 1
      %s168 = scalar_select %p167, %s16, 1
      %s169 = smul.addr %s168, 32
      %s170 = scalar_lea.vmem %s3, %s169
      %v171 = vld [vmem:[%s1] sm:$0x1]
      %v172 = vld [vmem:[%s166] sm:$0xff]
      %v173 = vld [vmem:[%s166 + $0x8] sm:$0xff]
      %v174 = vld [vmem:[%s166 + $0x10] sm:$0xff]
      %v175 = vld [vmem:[%s166 + $0x18] sm:$0xff]
      %v176 = vld [vmem:[%s166 + $0x20] sm:$0xff]
      %v177 = vld [vmem:[%s166 + $0x28] sm:$0xff]
      %v178 = vld [vmem:[%s166 + $0x30] sm:$0xff]
      %v179 = vld [vmem:[%s166 + $0x38] sm:$0xff]
      %v180 = vld [vmem:[%s166 + $0x40] sm:$0xff]
      %v181 = vld [vmem:[%s166 + $0x48] sm:$0xff]
      %v182 = vld [vmem:[%s166 + $0x50] sm:$0xff]
      %v183 = vld [vmem:[%s166 + $0x58] sm:$0xff]
      %v184 = vld [vmem:[%s166 + $0x60] sm:$0xff]
      %v185 = vld [vmem:[%s166 + $0x68] sm:$0xff]
      %v186 = vld [vmem:[%s166 + $0x70] sm:$0xff]
      %v187 = vld [vmem:[%s166 + $0x78] sm:$0xff]
      %v188 = vld [vmem:[%s166 + $0x80] sm:$0xff]
      %v189 = vld [vmem:[%s166 + $0x88] sm:$0xff]
      %v190 = vld [vmem:[%s166 + $0x90] sm:$0xff]
      %v191 = vld [vmem:[%s166 + $0x98] sm:$0xff]
      %v192 = vld [vmem:[%s166 + $0xa0] sm:$0xff]
      %v193 = vld [vmem:[%s166 + $0xa8] sm:$0xff]
      %v194 = vld [vmem:[%s166 + $0xb0] sm:$0xff]
      %v195 = vld [vmem:[%s166 + $0xb8] sm:$0xff]
      %v196 = vld [vmem:[%s166 + $0xc0] sm:$0xff]
      %v197 = vld [vmem:[%s166 + $0xc8] sm:$0xff]
      %v198 = vld [vmem:[%s166 + $0xd0] sm:$0xff]
      %v199 = vld [vmem:[%s166 + $0xd8] sm:$0xff]
      %v200 = vld [vmem:[%s166 + $0xe0] sm:$0xff]
      %v201 = vld [vmem:[%s166 + $0xe8] sm:$0xff]
      %v202 = vld [vmem:[%s166 + $0xf0] sm:$0xff]
      %v203 = vld [vmem:[%s166 + $0xf8] sm:$0xff]
      %v204 = vld [vmem:[%s166 + $0x100] sm:$0xff]
      %v205 = vld [vmem:[%s166 + $0x108] sm:$0xff]
      %v206 = vld [vmem:[%s166 + $0x110] sm:$0xff]
      %v207 = vld [vmem:[%s166 + $0x118] sm:$0xff]
      %v208 = vld [vmem:[%s166 + $0x120] sm:$0xff]
      %v209 = vld [vmem:[%s166 + $0x128] sm:$0xff]
      %v210 = vld [vmem:[%s166 + $0x130] sm:$0xff]
      %v211 = vld [vmem:[%s166 + $0x138] sm:$0xff]
      %v212 = vld [vmem:[%s166 + $0x140] sm:$0xff]
      %v213 = vld [vmem:[%s166 + $0x148] sm:$0xff]
      %v214 = vld [vmem:[%s166 + $0x150] sm:$0xff]
      %v215 = vld [vmem:[%s166 + $0x158] sm:$0xff]
      %v216 = vld [vmem:[%s166 + $0x160] sm:$0xff]
      %v217 = vld [vmem:[%s166 + $0x168] sm:$0xff]
      %v218 = vld [vmem:[%s166 + $0x170] sm:$0xff]
      %v219 = vld [vmem:[%s166 + $0x178] sm:$0xff]
      %v220 = vld [vmem:[%s166 + $0x180] sm:$0xff]
      %v221 = vld [vmem:[%s166 + $0x188] sm:$0xff]
      %v222 = vld [vmem:[%s166 + $0x190] sm:$0xff]
      %v223 = vld [vmem:[%s166 + $0x198] sm:$0xff]
      %v224 = vld [vmem:[%s166 + $0x1a0] sm:$0xff]
      %v225 = vld [vmem:[%s166 + $0x1a8] sm:$0xff]
      %v226 = vld [vmem:[%s166 + $0x1b0] sm:$0xff]
      %v227 = vld [vmem:[%s166 + $0x1b8] sm:$0xff]
      %v228 = vld [vmem:[%s166 + $0x1c0] sm:$0xff]
      %v229 = vld [vmem:[%s166 + $0x1c8] sm:$0xff]
      %v230 = vld [vmem:[%s166 + $0x1d0] sm:$0xff]
      %v231 = vld [vmem:[%s166 + $0x1d8] sm:$0xff]
      %v232 = vld [vmem:[%s166 + $0x1e0] sm:$0xff]
      %v233 = vld [vmem:[%s166 + $0x1e8] sm:$0xff]
      %v234 = vld [vmem:[%s166 + $0x1f0] sm:$0xff]
      %v235 = vld [vmem:[%s166 + $0x1f8] sm:$0xff]
      %v236 = vld [vmem:[%s166 + $0x200] sm:$0xff]
      %v237 = vld [vmem:[%s166 + $0x208] sm:$0xff]
      %v238 = vld [vmem:[%s166 + $0x210] sm:$0xff]
      %v239 = vld [vmem:[%s166 + $0x218] sm:$0xff]
      %v240 = vld [vmem:[%s166 + $0x220] sm:$0xff]
      %v241 = vld [vmem:[%s166 + $0x228] sm:$0xff]
      %v242 = vld [vmem:[%s166 + $0x230] sm:$0xff]
      %v243 = vld [vmem:[%s166 + $0x238] sm:$0xff]
      %v244 = vld [vmem:[%s166 + $0x240] sm:$0xff]
      %v245 = vld [vmem:[%s166 + $0x248] sm:$0xff]
      %v246 = vld [vmem:[%s166 + $0x250] sm:$0xff]
      %v247 = vld [vmem:[%s166 + $0x258] sm:$0xff]
      %v248 = vld [vmem:[%s166 + $0x260] sm:$0xff]
      %v249 = vld [vmem:[%s166 + $0x268] sm:$0xff]
      %v250 = vld [vmem:[%s166 + $0x270] sm:$0xff]
      %v251 = vld [vmem:[%s166 + $0x278] sm:$0xff]
      %v252 = vld [vmem:[%s166 + $0x280] sm:$0xff]
      %v253 = vld [vmem:[%s166 + $0x288] sm:$0xff]
      %v254 = vld [vmem:[%s166 + $0x290] sm:$0xff]
      %v255 = vld [vmem:[%s166 + $0x298] sm:$0xff]
      %v256 = vld [vmem:[%s166 + $0x2a0] sm:$0xff]
      %v257 = vld [vmem:[%s166 + $0x2a8] sm:$0xff]
      %v258 = vld [vmem:[%s166 + $0x2b0] sm:$0xff]
      %v259 = vld [vmem:[%s166 + $0x2b8] sm:$0xff]
      %v260 = vld [vmem:[%s166 + $0x2c0] sm:$0xff]
      %v261 = vld [vmem:[%s166 + $0x2c8] sm:$0xff]
      %v262 = vld [vmem:[%s166 + $0x2d0] sm:$0xff]
      %v263 = vld [vmem:[%s166 + $0x2d8] sm:$0xff]
      %v264 = vld [vmem:[%s166 + $0x2e0] sm:$0xff]
      %v265 = vld [vmem:[%s166 + $0x2e8] sm:$0xff]
      %v266 = vld [vmem:[%s166 + $0x2f0] sm:$0xff]
      %v267 = vld [vmem:[%s166 + $0x2f8] sm:$0xff]
      %v268 = vld [vmem:[%s166 + $0x300] sm:$0xff]
      %v269 = vld [vmem:[%s166 + $0x308] sm:$0xff]
      %v270 = vld [vmem:[%s166 + $0x310] sm:$0xff]
      %v271 = vld [vmem:[%s166 + $0x318] sm:$0xff]
      %v272 = vld [vmem:[%s166 + $0x320] sm:$0xff]
      %v273 = vld [vmem:[%s166 + $0x328] sm:$0xff]
      %v274 = vld [vmem:[%s166 + $0x330] sm:$0xff]
      %v275 = vld [vmem:[%s166 + $0x338] sm:$0xff]
      %v276 = vld [vmem:[%s166 + $0x340] sm:$0xff]
      %v277 = vld [vmem:[%s166 + $0x348] sm:$0xff]
      %v278 = vld [vmem:[%s166 + $0x350] sm:$0xff]
      %v279 = vld [vmem:[%s166 + $0x358] sm:$0xff]
      %v280 = vld [vmem:[%s166 + $0x360] sm:$0xff]
      %v281 = vld [vmem:[%s166 + $0x368] sm:$0xff]
      %v282 = vld [vmem:[%s166 + $0x370] sm:$0xff]
      %v283 = vld [vmem:[%s166 + $0x378] sm:$0xff]
      %v284 = vld [vmem:[%s166 + $0x380] sm:$0xff]
      %v285 = vld [vmem:[%s166 + $0x388] sm:$0xff]
      %v286 = vld [vmem:[%s166 + $0x390] sm:$0xff]
      %v287 = vld [vmem:[%s166 + $0x398] sm:$0xff]
      %v288 = vld [vmem:[%s166 + $0x3a0] sm:$0xff]
      %v289 = vld [vmem:[%s166 + $0x3a8] sm:$0xff]
      %v290 = vld [vmem:[%s166 + $0x3b0] sm:$0xff]
      %v291 = vld [vmem:[%s166 + $0x3b8] sm:$0xff]
      %v292 = vld [vmem:[%s166 + $0x3c0] sm:$0xff]
      %v293 = vld [vmem:[%s166 + $0x3c8] sm:$0xff]
      %v294 = vld [vmem:[%s166 + $0x3d0] sm:$0xff]
      %v295 = vld [vmem:[%s166 + $0x3d8] sm:$0xff]
      %v296 = vld [vmem:[%s166 + $0x3e0] sm:$0xff]
      %v297 = vld [vmem:[%s166 + $0x3e8] sm:$0xff]
      %v298 = vld [vmem:[%s166 + $0x3f0] sm:$0xff]
      %v299 = vld [vmem:[%s166 + $0x3f8] sm:$0xff]
      %v300 = vld [vmem:[%s166 + $0x400] sm:$0xff]
      %v301 = vld [vmem:[%s166 + $0x408] sm:$0xff]
      %v302 = vld [vmem:[%s166 + $0x410] sm:$0xff]
      %v303 = vld [vmem:[%s166 + $0x418] sm:$0xff]
      %v304 = vld [vmem:[%s166 + $0x420] sm:$0xff]
      %v305 = vld [vmem:[%s166 + $0x428] sm:$0xff]
      %v306 = vld [vmem:[%s166 + $0x430] sm:$0xff]
      %v307 = vld [vmem:[%s166 + $0x438] sm:$0xff]
      %v308 = vld [vmem:[%s166 + $0x440] sm:$0xff]
      %v309 = vld [vmem:[%s166 + $0x448] sm:$0xff]
      %v310 = vld [vmem:[%s166 + $0x450] sm:$0xff]
      %v311 = vld [vmem:[%s166 + $0x458] sm:$0xff]
      %v312 = vld [vmem:[%s166 + $0x460] sm:$0xff]
      %v313 = vld [vmem:[%s166 + $0x468] sm:$0xff]
      %v314 = vld [vmem:[%s166 + $0x470] sm:$0xff]
      %v315 = vld [vmem:[%s166 + $0x478] sm:$0xff]
      %v316 = vld [vmem:[%s166 + $0x480] sm:$0xff]
      %v317 = vld [vmem:[%s166 + $0x488] sm:$0xff]
      %v318 = vld [vmem:[%s166 + $0x490] sm:$0xff]
      %v319 = vld [vmem:[%s166 + $0x498] sm:$0xff]
      %v320 = vld [vmem:[%s166 + $0x4a0] sm:$0xff]
      %v321 = vld [vmem:[%s166 + $0x4a8] sm:$0xff]
      %v322 = vld [vmem:[%s166 + $0x4b0] sm:$0xff]
      %v323 = vld [vmem:[%s166 + $0x4b8] sm:$0xff]
      %v324 = vld [vmem:[%s166 + $0x4c0] sm:$0xff]
      %v325 = vld [vmem:[%s166 + $0x4c8] sm:$0xff]
      %v326 = vld [vmem:[%s166 + $0x4d0] sm:$0xff]
      %v327 = vld [vmem:[%s166 + $0x4d8] sm:$0xff]
      %v328 = vld [vmem:[%s166 + $0x4e0] sm:$0xff]
      %v329 = vld [vmem:[%s166 + $0x4e8] sm:$0xff]
      %v330 = vld [vmem:[%s166 + $0x4f0] sm:$0xff]
      %v331 = vld [vmem:[%s166 + $0x4f8] sm:$0xff]
      %v332 = vld [vmem:[%s166 + $0x500] sm:$0xff]
      %v333 = vld [vmem:[%s166 + $0x508] sm:$0xff]
      %v334 = vld [vmem:[%s166 + $0x510] sm:$0xff]
      %v335 = vld [vmem:[%s166 + $0x518] sm:$0xff]
      %v336 = vld [vmem:[%s166 + $0x520] sm:$0xff]
      %v337 = vld [vmem:[%s166 + $0x528] sm:$0xff]
      %v338 = vld [vmem:[%s166 + $0x530] sm:$0xff]
      %v339 = vld [vmem:[%s166 + $0x538] sm:$0xff]
      %v340 = vld [vmem:[%s166 + $0x540] sm:$0xff]
      %v341 = vld [vmem:[%s166 + $0x548] sm:$0xff]
      %v342 = vld [vmem:[%s166 + $0x550] sm:$0xff]
      %v343 = vld [vmem:[%s166 + $0x558] sm:$0xff]
      %v344 = vld [vmem:[%s166 + $0x560] sm:$0xff]
      %v345 = vld [vmem:[%s166 + $0x568] sm:$0xff]
      %v346 = vld [vmem:[%s166 + $0x570] sm:$0xff]
      %v347 = vld [vmem:[%s166 + $0x578] sm:$0xff]
      %v348 = vld [vmem:[%s166 + $0x580] sm:$0xff]
      %v349 = vld [vmem:[%s166 + $0x588] sm:$0xff]
      %v350 = vld [vmem:[%s166 + $0x590] sm:$0xff]
      %v351 = vld [vmem:[%s166 + $0x598] sm:$0xff]
      %v352 = vld [vmem:[%s166 + $0x5a0] sm:$0xff]
      %v353 = vld [vmem:[%s166 + $0x5a8] sm:$0xff]
      %v354 = vld [vmem:[%s166 + $0x5b0] sm:$0xff]
      %v355 = vld [vmem:[%s166 + $0x5b8] sm:$0xff]
      %v356 = vld [vmem:[%s166 + $0x5c0] sm:$0xff]
      %v357 = vld [vmem:[%s166 + $0x5c8] sm:$0xff]
      %v358 = vld [vmem:[%s166 + $0x5d0] sm:$0xff]
      %v359 = vld [vmem:[%s166 + $0x5d8] sm:$0xff]
      %v360 = vld [vmem:[%s166 + $0x5e0] sm:$0xff]
      %v361 = vld [vmem:[%s166 + $0x5e8] sm:$0xff]
      %v362 = vld [vmem:[%s166 + $0x5f0] sm:$0xff]
      %v363 = vld [vmem:[%s166 + $0x5f8] sm:$0xff]
      %v364 = vld [vmem:[%s166 + $0x600] sm:$0xff]
      %v365 = vld [vmem:[%s166 + $0x608] sm:$0xff]
      %v366 = vld [vmem:[%s166 + $0x610] sm:$0xff]
      %v367 = vld [vmem:[%s166 + $0x618] sm:$0xff]
      %v368 = vld [vmem:[%s166 + $0x620] sm:$0xff]
      %v369 = vld [vmem:[%s166 + $0x628] sm:$0xff]
      %v370 = vld [vmem:[%s166 + $0x630] sm:$0xff]
      %v371 = vld [vmem:[%s166 + $0x638] sm:$0xff]
      %v372 = vld [vmem:[%s166 + $0x640] sm:$0xff]
      %v373 = vld [vmem:[%s166 + $0x648] sm:$0xff]
      %v374 = vld [vmem:[%s166 + $0x650] sm:$0xff]
      %v375 = vld [vmem:[%s166 + $0x658] sm:$0xff]
      %v376 = vld [vmem:[%s166 + $0x660] sm:$0xff]
      %v377 = vld [vmem:[%s166 + $0x668] sm:$0xff]
      %v378 = vld [vmem:[%s166 + $0x670] sm:$0xff]
      %v379 = vld [vmem:[%s166 + $0x678] sm:$0xff]
      %v380 = vld [vmem:[%s166 + $0x680] sm:$0xff]
      %v381 = vld [vmem:[%s166 + $0x688] sm:$0xff]
      %v382 = vld [vmem:[%s166 + $0x690] sm:$0xff]
      %v383 = vld [vmem:[%s166 + $0x698] sm:$0xff]
      %v384 = vld [vmem:[%s166 + $0x6a0] sm:$0xff]
      %v385 = vld [vmem:[%s166 + $0x6a8] sm:$0xff]
      %v386 = vld [vmem:[%s166 + $0x6b0] sm:$0xff]
      %v387 = vld [vmem:[%s166 + $0x6b8] sm:$0xff]
      %v388 = vld [vmem:[%s166 + $0x6c0] sm:$0xff]
      %v389 = vld [vmem:[%s166 + $0x6c8] sm:$0xff]
      %v390 = vld [vmem:[%s166 + $0x6d0] sm:$0xff]
      %v391 = vld [vmem:[%s166 + $0x6d8] sm:$0xff]
      %v392 = vld [vmem:[%s166 + $0x6e0] sm:$0xff]
      %v393 = vld [vmem:[%s166 + $0x6e8] sm:$0xff]
      %v394 = vld [vmem:[%s166 + $0x6f0] sm:$0xff]
      %v395 = vld [vmem:[%s166 + $0x6f8] sm:$0xff]
      %v396 = vld [vmem:[%s166 + $0x700] sm:$0xff]
      %v397 = vld [vmem:[%s166 + $0x708] sm:$0xff]
      %v398 = vld [vmem:[%s166 + $0x710] sm:$0xff]
      %v399 = vld [vmem:[%s166 + $0x718] sm:$0xff]
      %v400 = vld [vmem:[%s166 + $0x720] sm:$0xff]
      %v401 = vld [vmem:[%s166 + $0x728] sm:$0xff]
      %v402 = vld [vmem:[%s166 + $0x730] sm:$0xff]
      %v403 = vld [vmem:[%s166 + $0x738] sm:$0xff]
      %v404 = vld [vmem:[%s166 + $0x740] sm:$0xff]
      %v405 = vld [vmem:[%s166 + $0x748] sm:$0xff]
      %v406 = vld [vmem:[%s166 + $0x750] sm:$0xff]
      %v407 = vld [vmem:[%s166 + $0x758] sm:$0xff]
      %v408 = vld [vmem:[%s166 + $0x760] sm:$0xff]
      %v409 = vld [vmem:[%s166 + $0x768] sm:$0xff]
      %v410 = vld [vmem:[%s166 + $0x770] sm:$0xff]
      %v411 = vld [vmem:[%s166 + $0x778] sm:$0xff]
      %v412 = vld [vmem:[%s166 + $0x780] sm:$0xff]
      %v413 = vld [vmem:[%s166 + $0x788] sm:$0xff]
      %v414 = vld [vmem:[%s166 + $0x790] sm:$0xff]
      %v415 = vld [vmem:[%s166 + $0x798] sm:$0xff]
      %v416 = vld [vmem:[%s166 + $0x7a0] sm:$0xff]
      %v417 = vld [vmem:[%s166 + $0x7a8] sm:$0xff]
      %v418 = vld [vmem:[%s166 + $0x7b0] sm:$0xff]
      %v419 = vld [vmem:[%s166 + $0x7b8] sm:$0xff]
      %v420 = vld [vmem:[%s166 + $0x7c0] sm:$0xff]
      %v421 = vld [vmem:[%s166 + $0x7c8] sm:$0xff]
      %v422 = vld [vmem:[%s166 + $0x7d0] sm:$0xff]
      %v423 = vld [vmem:[%s166 + $0x7d8] sm:$0xff]
      %v424 = vld [vmem:[%s166 + $0x7e0] sm:$0xff]
      %v425 = vld [vmem:[%s166 + $0x7e8] sm:$0xff]
      %v426 = vld [vmem:[%s166 + $0x7f0] sm:$0xff]
      %v427 = vld [vmem:[%s166 + $0x7f8] sm:$0xff]
      %v428 = vld [vmem:[%s166 + $0x800] sm:$0xff]
      %v429 = vld [vmem:[%s166 + $0x808] sm:$0xff]
      %v430 = vld [vmem:[%s166 + $0x810] sm:$0xff]
      %v431 = vld [vmem:[%s166 + $0x818] sm:$0xff]
      %v432 = vld [vmem:[%s166 + $0x820] sm:$0xff]
      %v433 = vld [vmem:[%s166 + $0x828] sm:$0xff]
      %v434 = vld [vmem:[%s166 + $0x830] sm:$0xff]
      %v435 = vld [vmem:[%s166 + $0x838] sm:$0xff]
      %v436 = vld [vmem:[%s166 + $0x840] sm:$0xff]
      %v437 = vld [vmem:[%s166 + $0x848] sm:$0xff]
      %v438 = vld [vmem:[%s166 + $0x850] sm:$0xff]
      %v439 = vld [vmem:[%s166 + $0x858] sm:$0xff]
      %v440 = vld [vmem:[%s166 + $0x860] sm:$0xff]
      %v441 = vld [vmem:[%s166 + $0x868] sm:$0xff]
      %v442 = vld [vmem:[%s166 + $0x870] sm:$0xff]
      %v443 = vld [vmem:[%s166 + $0x878] sm:$0xff]
      %v444 = vld [vmem:[%s166 + $0x880] sm:$0xff]
      %v445 = vld [vmem:[%s166 + $0x888] sm:$0xff]
      %v446 = vld [vmem:[%s166 + $0x890] sm:$0xff]
      %v447 = vld [vmem:[%s166 + $0x898] sm:$0xff]
      %v448 = vld [vmem:[%s166 + $0x8a0] sm:$0xff]
      %v449 = vld [vmem:[%s166 + $0x8a8] sm:$0xff]
      %v450 = vld [vmem:[%s166 + $0x8b0] sm:$0xff]
      %v451 = vld [vmem:[%s166 + $0x8b8] sm:$0xff]
      %v452 = vld [vmem:[%s166 + $0x8c0] sm:$0xff]
      %v453 = vld [vmem:[%s166 + $0x8c8] sm:$0xff]
      %v454 = vld [vmem:[%s166 + $0x8d0] sm:$0xff]
      %v455 = vld [vmem:[%s166 + $0x8d8] sm:$0xff]
      %v456 = vld [vmem:[%s166 + $0x8e0] sm:$0xff]
      %v457 = vld [vmem:[%s166 + $0x8e8] sm:$0xff]
      %v458 = vld [vmem:[%s166 + $0x8f0] sm:$0xff]
      %v459 = vld [vmem:[%s166 + $0x8f8] sm:$0xff]
      %v460 = vld [vmem:[%s166 + $0x900] sm:$0xff]
      %v461 = vld [vmem:[%s166 + $0x908] sm:$0xff]
      %v462 = vld [vmem:[%s166 + $0x910] sm:$0xff]
      %v463 = vld [vmem:[%s166 + $0x918] sm:$0xff]
      %v464 = vld [vmem:[%s166 + $0x920] sm:$0xff]
      %v465 = vld [vmem:[%s166 + $0x928] sm:$0xff]
      %v466 = vld [vmem:[%s166 + $0x930] sm:$0xff]
      %v467 = vld [vmem:[%s166 + $0x938] sm:$0xff]
      %v468 = vld [vmem:[%s166 + $0x940] sm:$0xff]
      %v469 = vld [vmem:[%s166 + $0x948] sm:$0xff]
      %v470 = vld [vmem:[%s166 + $0x950] sm:$0xff]
      %v471 = vld [vmem:[%s166 + $0x958] sm:$0xff]
      %v472 = vld [vmem:[%s166 + $0x960] sm:$0xff]
      %v473 = vld [vmem:[%s166 + $0x968] sm:$0xff]
      %v474 = vld [vmem:[%s166 + $0x970] sm:$0xff]
      %v475 = vld [vmem:[%s166 + $0x978] sm:$0xff]
      %v476 = vld [vmem:[%s166 + $0x980] sm:$0xff]
      %v477 = vld [vmem:[%s166 + $0x988] sm:$0xff]
      %v478 = vld [vmem:[%s166 + $0x990] sm:$0xff]
      %v479 = vld [vmem:[%s166 + $0x998] sm:$0xff]
      %v480 = vld [vmem:[%s166 + $0x9a0] sm:$0xff]
      %v481 = vld [vmem:[%s166 + $0x9a8] sm:$0xff]
      %v482 = vld [vmem:[%s166 + $0x9b0] sm:$0xff]
      %v483 = vld [vmem:[%s166 + $0x9b8] sm:$0xff]
      %v484 = vld [vmem:[%s166 + $0x9c0] sm:$0xff]
      %v485 = vld [vmem:[%s166 + $0x9c8] sm:$0xff]
      %v486 = vld [vmem:[%s166 + $0x9d0] sm:$0xff]
      %v487 = vld [vmem:[%s166 + $0x9d8] sm:$0xff]
      %v488 = vld [vmem:[%s166 + $0x9e0] sm:$0xff]
      %v489 = vld [vmem:[%s166 + $0x9e8] sm:$0xff]
      %v490 = vld [vmem:[%s166 + $0x9f0] sm:$0xff]
      %v491 = vld [vmem:[%s166 + $0x9f8] sm:$0xff]
      %v492 = vld [vmem:[%s166 + $0xa00] sm:$0xff]
      %v493 = vld [vmem:[%s166 + $0xa08] sm:$0xff]
      %v494 = vld [vmem:[%s166 + $0xa10] sm:$0xff]
      %v495 = vld [vmem:[%s166 + $0xa18] sm:$0xff]
      %v496 = vld [vmem:[%s166 + $0xa20] sm:$0xff]
      %v497 = vld [vmem:[%s166 + $0xa28] sm:$0xff]
      %v498 = vld [vmem:[%s166 + $0xa30] sm:$0xff]
      %v499 = vld [vmem:[%s166 + $0xa38] sm:$0xff]
      %v500 = vld [vmem:[%s166 + $0xa40] sm:$0xff]
      %v501 = vld [vmem:[%s166 + $0xa48] sm:$0xff]
      %v502 = vld [vmem:[%s166 + $0xa50] sm:$0xff]
      %v503 = vld [vmem:[%s166 + $0xa58] sm:$0xff]
      %v504 = vld [vmem:[%s166 + $0xa60] sm:$0xff]
      %v505 = vld [vmem:[%s166 + $0xa68] sm:$0xff]
      %v506 = vld [vmem:[%s166 + $0xa70] sm:$0xff]
      %v507 = vld [vmem:[%s166 + $0xa78] sm:$0xff]
      %v508 = vld [vmem:[%s166 + $0xa80] sm:$0xff]
      %v509 = vld [vmem:[%s166 + $0xa88] sm:$0xff]
      %v510 = vld [vmem:[%s166 + $0xa90] sm:$0xff]
      %v511 = vld [vmem:[%s166 + $0xa98] sm:$0xff]
      %v512 = vld [vmem:[%s166 + $0xaa0] sm:$0xff]
      %v513 = vld [vmem:[%s166 + $0xaa8] sm:$0xff]
      %v514 = vld [vmem:[%s166 + $0xab0] sm:$0xff]
      %v515 = vld [vmem:[%s166 + $0xab8] sm:$0xff]
      %v516 = vld [vmem:[%s166 + $0xac0] sm:$0xff]
      %v517 = vld [vmem:[%s166 + $0xac8] sm:$0xff]
      %v518 = vld [vmem:[%s166 + $0xad0] sm:$0xff]
      %v519 = vld [vmem:[%s166 + $0xad8] sm:$0xff]
      %v520 = vld [vmem:[%s166 + $0xae0] sm:$0xff]
      %v521 = vld [vmem:[%s166 + $0xae8] sm:$0xff]
      %v522 = vld [vmem:[%s166 + $0xaf0] sm:$0xff]
      %v523 = vld [vmem:[%s166 + $0xaf8] sm:$0xff]
      %v524 = vld [vmem:[%s166 + $0xb00] sm:$0xff]
      %v525 = vld [vmem:[%s166 + $0xb08] sm:$0xff]
      %v526 = vld [vmem:[%s166 + $0xb10] sm:$0xff]
      %v527 = vld [vmem:[%s166 + $0xb18] sm:$0xff]
      %v528 = vld [vmem:[%s166 + $0xb20] sm:$0xff]
      %v529 = vld [vmem:[%s166 + $0xb28] sm:$0xff]
      %v530 = vld [vmem:[%s166 + $0xb30] sm:$0xff]
      %v531 = vld [vmem:[%s166 + $0xb38] sm:$0xff]
      %v532 = vld [vmem:[%s166 + $0xb40] sm:$0xff]
      %v533 = vld [vmem:[%s166 + $0xb48] sm:$0xff]
      %v534 = vld [vmem:[%s166 + $0xb50] sm:$0xff]
      %v535 = vld [vmem:[%s166 + $0xb58] sm:$0xff]
      %v536 = vld [vmem:[%s166 + $0xb60] sm:$0xff]
      %v537 = vld [vmem:[%s166 + $0xb68] sm:$0xff]
      %v538 = vld [vmem:[%s166 + $0xb70] sm:$0xff]
      %v539 = vld [vmem:[%s166 + $0xb78] sm:$0xff]
      %v540 = vld [vmem:[%s166 + $0xb80] sm:$0xff]
      %v541 = vld [vmem:[%s166 + $0xb88] sm:$0xff]
      %v542 = vld [vmem:[%s166 + $0xb90] sm:$0xff]
      %v543 = vld [vmem:[%s166 + $0xb98] sm:$0xff]
      %v544 = vld [vmem:[%s166 + $0xba0] sm:$0xff]
      %v545 = vld [vmem:[%s166 + $0xba8] sm:$0xff]
      %v546 = vld [vmem:[%s166 + $0xbb0] sm:$0xff]
      %v547 = vld [vmem:[%s166 + $0xbb8] sm:$0xff]
      %v548 = vld [vmem:[%s166 + $0xbc0] sm:$0xff]
      %v549 = vld [vmem:[%s166 + $0xbc8] sm:$0xff]
      %v550 = vld [vmem:[%s166 + $0xbd0] sm:$0xff]
      %v551 = vld [vmem:[%s166 + $0xbd8] sm:$0xff]
      %v552 = vld [vmem:[%s166 + $0xbe0] sm:$0xff]
      %v553 = vld [vmem:[%s166 + $0xbe8] sm:$0xff]
      %v554 = vld [vmem:[%s166 + $0xbf0] sm:$0xff]
      %v555 = vld [vmem:[%s166 + $0xbf8] sm:$0xff]
      %v556 = vld [vmem:[%s166 + $0xc00] sm:$0xff]
      %v557 = vld [vmem:[%s166 + $0xc08] sm:$0xff]
      %v558 = vld [vmem:[%s166 + $0xc10] sm:$0xff]
      %v559 = vld [vmem:[%s166 + $0xc18] sm:$0xff]
      %v560 = vld [vmem:[%s166 + $0xc20] sm:$0xff]
      %v561 = vld [vmem:[%s166 + $0xc28] sm:$0xff]
      %v562 = vld [vmem:[%s166 + $0xc30] sm:$0xff]
      %v563 = vld [vmem:[%s166 + $0xc38] sm:$0xff]
      %v564 = vld [vmem:[%s166 + $0xc40] sm:$0xff]
      %v565 = vld [vmem:[%s166 + $0xc48] sm:$0xff]
      %v566 = vld [vmem:[%s166 + $0xc50] sm:$0xff]
      %v567 = vld [vmem:[%s166 + $0xc58] sm:$0xff]
      %v568 = vld [vmem:[%s166 + $0xc60] sm:$0xff]
      %v569 = vld [vmem:[%s166 + $0xc68] sm:$0xff]
      %v570 = vld [vmem:[%s166 + $0xc70] sm:$0xff]
      %v571 = vld [vmem:[%s166 + $0xc78] sm:$0xff]
      %v572 = vld [vmem:[%s166 + $0xc80] sm:$0xff]
      %v573 = vld [vmem:[%s166 + $0xc88] sm:$0xff]
      %v574 = vld [vmem:[%s166 + $0xc90] sm:$0xff]
      %v575 = vld [vmem:[%s166 + $0xc98] sm:$0xff]
      %v576 = vld [vmem:[%s166 + $0xca0] sm:$0xff]
      %v577 = vld [vmem:[%s166 + $0xca8] sm:$0xff]
      %v578 = vld [vmem:[%s166 + $0xcb0] sm:$0xff]
      %v579 = vld [vmem:[%s166 + $0xcb8] sm:$0xff]
      %v580 = vld [vmem:[%s166 + $0xcc0] sm:$0xff]
      %v581 = vld [vmem:[%s166 + $0xcc8] sm:$0xff]
      %v582 = vld [vmem:[%s166 + $0xcd0] sm:$0xff]
      %v583 = vld [vmem:[%s166 + $0xcd8] sm:$0xff]
      %v584 = vld [vmem:[%s166 + $0xce0] sm:$0xff]
      %v585 = vld [vmem:[%s166 + $0xce8] sm:$0xff]
      %v586 = vld [vmem:[%s166 + $0xcf0] sm:$0xff]
      %v587 = vld [vmem:[%s166 + $0xcf8] sm:$0xff]
      %v588 = vld [vmem:[%s166 + $0xd00] sm:$0xf]
      %v589 = vld [vmem:[%s166 + $0xd08] sm:$0xf]
      %v590 = vld [vmem:[%s166 + $0xd10] sm:$0xf]
      %v591 = vld [vmem:[%s166 + $0xd18] sm:$0xf]
      %v592 = vld [vmem:[%s166 + $0xd20] sm:$0xf]
      %v593 = vld [vmem:[%s166 + $0xd28] sm:$0xf]
      %v594 = vld [vmem:[%s166 + $0xd30] sm:$0xf]
      %v595 = vld [vmem:[%s166 + $0xd38] sm:$0xf]
      %v596 = vld [vmem:[%s166 + $0xd40] sm:$0xf]
      %v597 = vld [vmem:[%s166 + $0xd48] sm:$0xf]
      %v598 = vld [vmem:[%s166 + $0xd50] sm:$0xf]
      %v599 = vld [vmem:[%s166 + $0xd58] sm:$0xf]
      %v600 = vld [vmem:[%s166 + $0xd60] sm:$0xf]
      %v601 = vld [vmem:[%s166 + $0xd68] sm:$0xf]
      %v602 = vld [vmem:[%s166 + $0xd70] sm:$0xf]
      %v603 = vld [vmem:[%s166 + $0xd78] sm:$0xf]
      %v604 = vld [vmem:[%s166 + $0xd80] sm:$0xf]
      %v605 = vld [vmem:[%s166 + $0xd88] sm:$0xf]
      %v606 = vld [vmem:[%s166 + $0xd90] sm:$0xf]
      %v607 = vld [vmem:[%s166 + $0xd98] sm:$0xf]
      %v608 = vld [vmem:[%s166 + $0xda0] sm:$0xf]
      %v609 = vld [vmem:[%s166 + $0xda8] sm:$0xf]
      %v610 = vld [vmem:[%s166 + $0xdb0] sm:$0xf]
      %v611 = vld [vmem:[%s166 + $0xdb8] sm:$0xf]
      %v612 = vld [vmem:[%s166 + $0xdc0] sm:$0xf]
      %v613 = vld [vmem:[%s166 + $0xdc8] sm:$0xf]
      %v614 = vld [vmem:[%s166 + $0xdd0] sm:$0xf]
      %v615 = vld [vmem:[%s166 + $0xdd8] sm:$0xf]
      %v616 = vld [vmem:[%s166 + $0xde0] sm:$0xf]
      %v617 = vld [vmem:[%s166 + $0xde8] sm:$0xf]
      %v618 = vld [vmem:[%s166 + $0xdf0] sm:$0xf]
      %v619 = vld [vmem:[%s166 + $0xdf8] sm:$0xf]
      %v620 = vld [vmem:[#allocation2] sm:$0x1]
      %622 = vset.pattern.permute.xlu0 0
      %623 = vperm.xlu0 %622, %v620
      %v624 = vpop.permute.xlu0 %623
      %v626 = vperm.slane %v624, 0
      %vm627 = vcmask 883712
      %v629 = vsel %vm627, %v171, 0
      %vm631 = vcmask 1043456
      %v633 = vsel %vm631, %v588, 0
      %v636 = vsel %vm631, %v589, 0
      %v639 = vsel %vm631, %v590, 0
      %v642 = vsel %vm631, %v591, 0
      %v645 = vsel %vm631, %v592, 0
      %v648 = vsel %vm631, %v593, 0
      %v651 = vsel %vm631, %v594, 0
      %v654 = vsel %vm631, %v595, 0
      %v657 = vsel %vm631, %v596, 0
      %v660 = vsel %vm631, %v597, 0
      %v663 = vsel %vm631, %v598, 0
      %v666 = vsel %vm631, %v599, 0
      %v669 = vsel %vm631, %v600, 0
      %v672 = vsel %vm631, %v601, 0
      %v675 = vsel %vm631, %v602, 0
      %v678 = vsel %vm631, %v603, 0
      %v681 = vsel %vm631, %v604, 0
      %v684 = vsel %vm631, %v605, 0
      %v687 = vsel %vm631, %v606, 0
      %v690 = vsel %vm631, %v607, 0
      %v693 = vsel %vm631, %v608, 0
      %v696 = vsel %vm631, %v609, 0
      %v699 = vsel %vm631, %v610, 0
      %v702 = vsel %vm631, %v611, 0
      %v705 = vsel %vm631, %v612, 0
      %v708 = vsel %vm631, %v613, 0
      %v711 = vsel %vm631, %v614, 0
      %v714 = vsel %vm631, %v615, 0
      %v717 = vsel %vm631, %v616, 0
      %v720 = vsel %vm631, %v617, 0
      %v723 = vsel %vm631, %v618, 0
      %v726 = vsel %vm631, %v619, 0
      %728 = vmatpush.msra.mxu0 0.0
      %729 = vmatpush.msra.mxu0 0.0
      %730 = vmatpush.msra.mxu0 %v633
      %731 = vmatpush.msra.mxu0 %v556
      %732 = vmatpush.msra.mxu0 %v524
      %733 = vmatpush.msra.mxu0 %v492
      %734 = vmatpush.msra.mxu0 %v460
      %735 = vmatpush.msra.mxu0 %v428
      %736 = vmatpush.msra.mxu0 %v396
      %737 = vmatpush.msra.mxu0 %v364
      %738 = vmatpush.msra.mxu0 %v332
      %739 = vmatpush.msra.mxu0 %v300
      %740 = vmatpush.msra.mxu0 %v268
      %741 = vmatpush.msra.mxu0 %v236
      %742 = vmatpush.msra.mxu0 %v204
      %743 = vmatpush.msra.mxu0 %v172
      %744 = vmatmul.f32.gmra.mxu0 %v629
      %v745 = vpop.f32.mrf.mxu0
      %v746 = vadd.f32 %v626, %v745
      %747 = vdwg.mxu0
      %748 = vmatpush.msra.mxu0 0.0
      %749 = vmatpush.msra.mxu0 0.0
      %750 = vmatpush.msra.mxu0 %v636
      %751 = vmatpush.msra.mxu0 %v557
      %752 = vmatpush.msra.mxu0 %v525
      %753 = vmatpush.msra.mxu0 %v493
      %754 = vmatpush.msra.mxu0 %v461
      %755 = vmatpush.msra.mxu0 %v429
      %756 = vmatpush.msra.mxu0 %v397
      %757 = vmatpush.msra.mxu0 %v365
      %758 = vmatpush.msra.mxu0 %v333
      %759 = vmatpush.msra.mxu0 %v301
      %760 = vmatpush.msra.mxu0 %v269
      %761 = vmatpush.msra.mxu0 %v237
      %762 = vmatpush.msra.mxu0 %v205
      %763 = vmatpush.msra.mxu0 %v173
      %764 = vmatmul.f32.gmra.mxu0 %v629
      %v765 = vpop.f32.mrf.mxu0
      %v766 = vadd.f32 %v626, %v765
      %767 = vdwg.mxu0
      %768 = vmatpush.msra.mxu0 0.0
      %769 = vmatpush.msra.mxu0 0.0
      %770 = vmatpush.msra.mxu0 %v639
      %771 = vmatpush.msra.mxu0 %v558
      %772 = vmatpush.msra.mxu0 %v526
      %773 = vmatpush.msra.mxu0 %v494
      %774 = vmatpush.msra.mxu0 %v462
      %775 = vmatpush.msra.mxu0 %v430
      %776 = vmatpush.msra.mxu0 %v398
      %777 = vmatpush.msra.mxu0 %v366
      %778 = vmatpush.msra.mxu0 %v334
      %779 = vmatpush.msra.mxu0 %v302
      %780 = vmatpush.msra.mxu0 %v270
      %781 = vmatpush.msra.mxu0 %v238
      %782 = vmatpush.msra.mxu0 %v206
      %783 = vmatpush.msra.mxu0 %v174
      %784 = vmatmul.f32.gmra.mxu0 %v629
      %v785 = vpop.f32.mrf.mxu0
      %v786 = vadd.f32 %v626, %v785
      %787 = vdwg.mxu0
      %788 = vmatpush.msra.mxu0 0.0
      %789 = vmatpush.msra.mxu0 0.0
      %790 = vmatpush.msra.mxu0 %v642
      %791 = vmatpush.msra.mxu0 %v559
      %792 = vmatpush.msra.mxu0 %v527
      %793 = vmatpush.msra.mxu0 %v495
      %794 = vmatpush.msra.mxu0 %v463
      %795 = vmatpush.msra.mxu0 %v431
      %796 = vmatpush.msra.mxu0 %v399
      %797 = vmatpush.msra.mxu0 %v367
      %798 = vmatpush.msra.mxu0 %v335
      %799 = vmatpush.msra.mxu0 %v303
      %800 = vmatpush.msra.mxu0 %v271
      %801 = vmatpush.msra.mxu0 %v239
      %802 = vmatpush.msra.mxu0 %v207
      %803 = vmatpush.msra.mxu0 %v175
      %804 = vmatmul.f32.gmra.mxu0 %v629
      %v805 = vpop.f32.mrf.mxu0
      %v806 = vadd.f32 %v626, %v805
      %807 = vdwg.mxu0
      %808 = vmatpush.msra.mxu0 0.0
      %809 = vmatpush.msra.mxu0 0.0
      %810 = vmatpush.msra.mxu0 %v645
      %811 = vmatpush.msra.mxu0 %v560
      %812 = vmatpush.msra.mxu0 %v528
      %813 = vmatpush.msra.mxu0 %v496
      %814 = vmatpush.msra.mxu0 %v464
      %815 = vmatpush.msra.mxu0 %v432
      %816 = vmatpush.msra.mxu0 %v400
      %817 = vmatpush.msra.mxu0 %v368
      %818 = vmatpush.msra.mxu0 %v336
      %819 = vmatpush.msra.mxu0 %v304
      %820 = vmatpush.msra.mxu0 %v272
      %821 = vmatpush.msra.mxu0 %v240
      %822 = vmatpush.msra.mxu0 %v208
      %823 = vmatpush.msra.mxu0 %v176
      %824 = vmatmul.f32.gmra.mxu0 %v629
      %v825 = vpop.f32.mrf.mxu0
      %v826 = vadd.f32 %v626, %v825
      %827 = vdwg.mxu0
      %828 = vmatpush.msra.mxu0 0.0
      %829 = vmatpush.msra.mxu0 0.0
      %830 = vmatpush.msra.mxu0 %v648
      %831 = vmatpush.msra.mxu0 %v561
      %832 = vmatpush.msra.mxu0 %v529
      %833 = vmatpush.msra.mxu0 %v497
      %834 = vmatpush.msra.mxu0 %v465
      %835 = vmatpush.msra.mxu0 %v433
      %836 = vmatpush.msra.mxu0 %v401
      %837 = vmatpush.msra.mxu0 %v369
      %838 = vmatpush.msra.mxu0 %v337
      %839 = vmatpush.msra.mxu0 %v305
      %840 = vmatpush.msra.mxu0 %v273
      %841 = vmatpush.msra.mxu0 %v241
      %842 = vmatpush.msra.mxu0 %v209
      %843 = vmatpush.msra.mxu0 %v177
      %844 = vmatmul.f32.gmra.mxu0 %v629
      %v845 = vpop.f32.mrf.mxu0
      %v846 = vadd.f32 %v626, %v845
      %847 = vdwg.mxu0
      %848 = vmatpush.msra.mxu0 0.0
      %849 = vmatpush.msra.mxu0 0.0
      %850 = vmatpush.msra.mxu0 %v651
      %851 = vmatpush.msra.mxu0 %v562
      %852 = vmatpush.msra.mxu0 %v530
      %853 = vmatpush.msra.mxu0 %v498
      %854 = vmatpush.msra.mxu0 %v466
      %855 = vmatpush.msra.mxu0 %v434
      %856 = vmatpush.msra.mxu0 %v402
      %857 = vmatpush.msra.mxu0 %v370
      %858 = vmatpush.msra.mxu0 %v338
      %859 = vmatpush.msra.mxu0 %v306
      %860 = vmatpush.msra.mxu0 %v274
      %861 = vmatpush.msra.mxu0 %v242
      %862 = vmatpush.msra.mxu0 %v210
      %863 = vmatpush.msra.mxu0 %v178
      %864 = vmatmul.f32.gmra.mxu0 %v629
      %v865 = vpop.f32.mrf.mxu0
      %v866 = vadd.f32 %v626, %v865
      %867 = vdwg.mxu0
      %868 = vmatpush.msra.mxu0 0.0
      %869 = vmatpush.msra.mxu0 0.0
      %870 = vmatpush.msra.mxu0 %v654
      %871 = vmatpush.msra.mxu0 %v563
      %872 = vmatpush.msra.mxu0 %v531
      %873 = vmatpush.msra.mxu0 %v499
      %874 = vmatpush.msra.mxu0 %v467
      %875 = vmatpush.msra.mxu0 %v435
      %876 = vmatpush.msra.mxu0 %v403
      %877 = vmatpush.msra.mxu0 %v371
      %878 = vmatpush.msra.mxu0 %v339
      %879 = vmatpush.msra.mxu0 %v307
      %880 = vmatpush.msra.mxu0 %v275
      %881 = vmatpush.msra.mxu0 %v243
      %882 = vmatpush.msra.mxu0 %v211
      %883 = vmatpush.msra.mxu0 %v179
      %884 = vmatmul.f32.gmra.mxu0 %v629
      %v885 = vpop.f32.mrf.mxu0
      %v886 = vadd.f32 %v626, %v885
      %887 = vdwg.mxu0
      %888 = vmatpush.msra.mxu0 0.0
      %889 = vmatpush.msra.mxu0 0.0
      %890 = vmatpush.msra.mxu0 %v657
      %891 = vmatpush.msra.mxu0 %v564
      %892 = vmatpush.msra.mxu0 %v532
      %893 = vmatpush.msra.mxu0 %v500
      %894 = vmatpush.msra.mxu0 %v468
      %895 = vmatpush.msra.mxu0 %v436
      %896 = vmatpush.msra.mxu0 %v404
      %897 = vmatpush.msra.mxu0 %v372
      %898 = vmatpush.msra.mxu0 %v340
      %899 = vmatpush.msra.mxu0 %v308
      %900 = vmatpush.msra.mxu0 %v276
      %901 = vmatpush.msra.mxu0 %v244
      %902 = vmatpush.msra.mxu0 %v212
      %903 = vmatpush.msra.mxu0 %v180
      %904 = vmatmul.f32.gmra.mxu0 %v629
      %v905 = vpop.f32.mrf.mxu0
      %v906 = vadd.f32 %v626, %v905
      %907 = vdwg.mxu0
      %908 = vmatpush.msra.mxu0 0.0
      %909 = vmatpush.msra.mxu0 0.0
      %910 = vmatpush.msra.mxu0 %v660
      %911 = vmatpush.msra.mxu0 %v565
      %912 = vmatpush.msra.mxu0 %v533
      %913 = vmatpush.msra.mxu0 %v501
      %914 = vmatpush.msra.mxu0 %v469
      %915 = vmatpush.msra.mxu0 %v437
      %916 = vmatpush.msra.mxu0 %v405
      %917 = vmatpush.msra.mxu0 %v373
      %918 = vmatpush.msra.mxu0 %v341
      %919 = vmatpush.msra.mxu0 %v309
      %920 = vmatpush.msra.mxu0 %v277
      %921 = vmatpush.msra.mxu0 %v245
      %922 = vmatpush.msra.mxu0 %v213
      %923 = vmatpush.msra.mxu0 %v181
      %924 = vmatmul.f32.gmra.mxu0 %v629
      %v925 = vpop.f32.mrf.mxu0
      %v926 = vadd.f32 %v626, %v925
      %927 = vdwg.mxu0
      %928 = vmatpush.msra.mxu0 0.0
      %929 = vmatpush.msra.mxu0 0.0
      %930 = vmatpush.msra.mxu0 %v663
      %931 = vmatpush.msra.mxu0 %v566
      %932 = vmatpush.msra.mxu0 %v534
      %933 = vmatpush.msra.mxu0 %v502
      %934 = vmatpush.msra.mxu0 %v470
      %935 = vmatpush.msra.mxu0 %v438
      %936 = vmatpush.msra.mxu0 %v406
      %937 = vmatpush.msra.mxu0 %v374
      %938 = vmatpush.msra.mxu0 %v342
      %939 = vmatpush.msra.mxu0 %v310
      %940 = vmatpush.msra.mxu0 %v278
      %941 = vmatpush.msra.mxu0 %v246
      %942 = vmatpush.msra.mxu0 %v214
      %943 = vmatpush.msra.mxu0 %v182
      %944 = vmatmul.f32.gmra.mxu0 %v629
      %v945 = vpop.f32.mrf.mxu0
      %v946 = vadd.f32 %v626, %v945
      %947 = vdwg.mxu0
      %948 = vmatpush.msra.mxu0 0.0
      %949 = vmatpush.msra.mxu0 0.0
      %950 = vmatpush.msra.mxu0 %v666
      %951 = vmatpush.msra.mxu0 %v567
      %952 = vmatpush.msra.mxu0 %v535
      %953 = vmatpush.msra.mxu0 %v503
      %954 = vmatpush.msra.mxu0 %v471
      %955 = vmatpush.msra.mxu0 %v439
      %956 = vmatpush.msra.mxu0 %v407
      %957 = vmatpush.msra.mxu0 %v375
      %958 = vmatpush.msra.mxu0 %v343
      %959 = vmatpush.msra.mxu0 %v311
      %960 = vmatpush.msra.mxu0 %v279
      %961 = vmatpush.msra.mxu0 %v247
      %962 = vmatpush.msra.mxu0 %v215
      %963 = vmatpush.msra.mxu0 %v183
      %964 = vmatmul.f32.gmra.mxu0 %v629
      %v965 = vpop.f32.mrf.mxu0
      %v966 = vadd.f32 %v626, %v965
      %967 = vdwg.mxu0
      %968 = vmatpush.msra.mxu0 0.0
      %969 = vmatpush.msra.mxu0 0.0
      %970 = vmatpush.msra.mxu0 %v669
      %971 = vmatpush.msra.mxu0 %v568
      %972 = vmatpush.msra.mxu0 %v536
      %973 = vmatpush.msra.mxu0 %v504
      %974 = vmatpush.msra.mxu0 %v472
      %975 = vmatpush.msra.mxu0 %v440
      %976 = vmatpush.msra.mxu0 %v408
      %977 = vmatpush.msra.mxu0 %v376
      %978 = vmatpush.msra.mxu0 %v344
      %979 = vmatpush.msra.mxu0 %v312
      %980 = vmatpush.msra.mxu0 %v280
      %981 = vmatpush.msra.mxu0 %v248
      %982 = vmatpush.msra.mxu0 %v216
      %983 = vmatpush.msra.mxu0 %v184
      %984 = vmatmul.f32.gmra.mxu0 %v629
      %v985 = vpop.f32.mrf.mxu0
      %v986 = vadd.f32 %v626, %v985
      %987 = vdwg.mxu0
      %988 = vmatpush.msra.mxu0 0.0
      %989 = vmatpush.msra.mxu0 0.0
      %990 = vmatpush.msra.mxu0 %v672
      %991 = vmatpush.msra.mxu0 %v569
      %992 = vmatpush.msra.mxu0 %v537
      %993 = vmatpush.msra.mxu0 %v505
      %994 = vmatpush.msra.mxu0 %v473
      %995 = vmatpush.msra.mxu0 %v441
      %996 = vmatpush.msra.mxu0 %v409
      %997 = vmatpush.msra.mxu0 %v377
      %998 = vmatpush.msra.mxu0 %v345
      %999 = vmatpush.msra.mxu0 %v313
      %1000 = vmatpush.msra.mxu0 %v281
      %1001 = vmatpush.msra.mxu0 %v249
      %1002 = vmatpush.msra.mxu0 %v217
      %1003 = vmatpush.msra.mxu0 %v185
      %1004 = vmatmul.f32.gmra.mxu0 %v629
      %v1005 = vpop.f32.mrf.mxu0
      %v1006 = vadd.f32 %v626, %v1005
      %1007 = vdwg.mxu0
      %1008 = vmatpush.msra.mxu0 0.0
      %1009 = vmatpush.msra.mxu0 0.0
      %1010 = vmatpush.msra.mxu0 %v675
      %1011 = vmatpush.msra.mxu0 %v570
      %1012 = vmatpush.msra.mxu0 %v538
      %1013 = vmatpush.msra.mxu0 %v506
      %1014 = vmatpush.msra.mxu0 %v474
      %1015 = vmatpush.msra.mxu0 %v442
      %1016 = vmatpush.msra.mxu0 %v410
      %1017 = vmatpush.msra.mxu0 %v378
      %1018 = vmatpush.msra.mxu0 %v346
      %1019 = vmatpush.msra.mxu0 %v314
      %1020 = vmatpush.msra.mxu0 %v282
      %1021 = vmatpush.msra.mxu0 %v250
      %1022 = vmatpush.msra.mxu0 %v218
      %1023 = vmatpush.msra.mxu0 %v186
      %1024 = vmatmul.f32.gmra.mxu0 %v629
      %v1025 = vpop.f32.mrf.mxu0
      %v1026 = vadd.f32 %v626, %v1025
      %1027 = vdwg.mxu0
      %1028 = vmatpush.msra.mxu0 0.0
      %1029 = vmatpush.msra.mxu0 0.0
      %1030 = vmatpush.msra.mxu0 %v678
      %1031 = vmatpush.msra.mxu0 %v571
      %1032 = vmatpush.msra.mxu0 %v539
      %1033 = vmatpush.msra.mxu0 %v507
      %1034 = vmatpush.msra.mxu0 %v475
      %1035 = vmatpush.msra.mxu0 %v443
      %1036 = vmatpush.msra.mxu0 %v411
      %1037 = vmatpush.msra.mxu0 %v379
      %1038 = vmatpush.msra.mxu0 %v347
      %1039 = vmatpush.msra.mxu0 %v315
      %1040 = vmatpush.msra.mxu0 %v283
      %1041 = vmatpush.msra.mxu0 %v251
      %1042 = vmatpush.msra.mxu0 %v219
      %1043 = vmatpush.msra.mxu0 %v187
      %1044 = vmatmul.f32.gmra.mxu0 %v629
      %v1045 = vpop.f32.mrf.mxu0
      %v1046 = vadd.f32 %v626, %v1045
      %1047 = vdwg.mxu0
      %1048 = vmatpush.msra.mxu0 0.0
      %1049 = vmatpush.msra.mxu0 0.0
      %1050 = vmatpush.msra.mxu0 %v681
      %1051 = vmatpush.msra.mxu0 %v572
      %1052 = vmatpush.msra.mxu0 %v540
      %1053 = vmatpush.msra.mxu0 %v508
      %1054 = vmatpush.msra.mxu0 %v476
      %1055 = vmatpush.msra.mxu0 %v444
      %1056 = vmatpush.msra.mxu0 %v412
      %1057 = vmatpush.msra.mxu0 %v380
      %1058 = vmatpush.msra.mxu0 %v348
      %1059 = vmatpush.msra.mxu0 %v316
      %1060 = vmatpush.msra.mxu0 %v284
      %1061 = vmatpush.msra.mxu0 %v252
      %1062 = vmatpush.msra.mxu0 %v220
      %1063 = vmatpush.msra.mxu0 %v188
      %1064 = vmatmul.f32.gmra.mxu0 %v629
      %v1065 = vpop.f32.mrf.mxu0
      %v1066 = vadd.f32 %v626, %v1065
      %1067 = vdwg.mxu0
      %1068 = vmatpush.msra.mxu0 0.0
      %1069 = vmatpush.msra.mxu0 0.0
      %1070 = vmatpush.msra.mxu0 %v684
      %1071 = vmatpush.msra.mxu0 %v573
      %1072 = vmatpush.msra.mxu0 %v541
      %1073 = vmatpush.msra.mxu0 %v509
      %1074 = vmatpush.msra.mxu0 %v477
      %1075 = vmatpush.msra.mxu0 %v445
      %1076 = vmatpush.msra.mxu0 %v413
      %1077 = vmatpush.msra.mxu0 %v381
      %1078 = vmatpush.msra.mxu0 %v349
      %1079 = vmatpush.msra.mxu0 %v317
      %1080 = vmatpush.msra.mxu0 %v285
      %1081 = vmatpush.msra.mxu0 %v253
      %1082 = vmatpush.msra.mxu0 %v221
      %1083 = vmatpush.msra.mxu0 %v189
      %1084 = vmatmul.f32.gmra.mxu0 %v629
      %v1085 = vpop.f32.mrf.mxu0
      %v1086 = vadd.f32 %v626, %v1085
      %1087 = vdwg.mxu0
      %1088 = vmatpush.msra.mxu0 0.0
      %1089 = vmatpush.msra.mxu0 0.0
      %1090 = vmatpush.msra.mxu0 %v687
      %1091 = vmatpush.msra.mxu0 %v574
      %1092 = vmatpush.msra.mxu0 %v542
      %1093 = vmatpush.msra.mxu0 %v510
      %1094 = vmatpush.msra.mxu0 %v478
      %1095 = vmatpush.msra.mxu0 %v446
      %1096 = vmatpush.msra.mxu0 %v414
      %1097 = vmatpush.msra.mxu0 %v382
      %1098 = vmatpush.msra.mxu0 %v350
      %1099 = vmatpush.msra.mxu0 %v318
      %1100 = vmatpush.msra.mxu0 %v286
      %1101 = vmatpush.msra.mxu0 %v254
      %1102 = vmatpush.msra.mxu0 %v222
      %1103 = vmatpush.msra.mxu0 %v190
      %1104 = vmatmul.f32.gmra.mxu0 %v629
      %v1105 = vpop.f32.mrf.mxu0
      %v1106 = vadd.f32 %v626, %v1105
      %1107 = vdwg.mxu0
      %1108 = vmatpush.msra.mxu0 0.0
      %1109 = vmatpush.msra.mxu0 0.0
      %1110 = vmatpush.msra.mxu0 %v690
      %1111 = vmatpush.msra.mxu0 %v575
      %1112 = vmatpush.msra.mxu0 %v543
      %1113 = vmatpush.msra.mxu0 %v511
      %1114 = vmatpush.msra.mxu0 %v479
      %1115 = vmatpush.msra.mxu0 %v447
      %1116 = vmatpush.msra.mxu0 %v415
      %1117 = vmatpush.msra.mxu0 %v383
      %1118 = vmatpush.msra.mxu0 %v351
      %1119 = vmatpush.msra.mxu0 %v319
      %1120 = vmatpush.msra.mxu0 %v287
      %1121 = vmatpush.msra.mxu0 %v255
      %1122 = vmatpush.msra.mxu0 %v223
      %1123 = vmatpush.msra.mxu0 %v191
      %1124 = vmatmul.f32.gmra.mxu0 %v629
      %v1125 = vpop.f32.mrf.mxu0
      %v1126 = vadd.f32 %v626, %v1125
      %1127 = vdwg.mxu0
      %1128 = vmatpush.msra.mxu0 0.0
      %1129 = vmatpush.msra.mxu0 0.0
      %1130 = vmatpush.msra.mxu0 %v693
      %1131 = vmatpush.msra.mxu0 %v576
      %1132 = vmatpush.msra.mxu0 %v544
      %1133 = vmatpush.msra.mxu0 %v512
      %1134 = vmatpush.msra.mxu0 %v480
      %1135 = vmatpush.msra.mxu0 %v448
      %1136 = vmatpush.msra.mxu0 %v416
      %1137 = vmatpush.msra.mxu0 %v384
      %1138 = vmatpush.msra.mxu0 %v352
      %1139 = vmatpush.msra.mxu0 %v320
      %1140 = vmatpush.msra.mxu0 %v288
      %1141 = vmatpush.msra.mxu0 %v256
      %1142 = vmatpush.msra.mxu0 %v224
      %1143 = vmatpush.msra.mxu0 %v192
      %1144 = vmatmul.f32.gmra.mxu0 %v629
      %v1145 = vpop.f32.mrf.mxu0
      %v1146 = vadd.f32 %v626, %v1145
      %1147 = vdwg.mxu0
      %1148 = vmatpush.msra.mxu0 0.0
      %1149 = vmatpush.msra.mxu0 0.0
      %1150 = vmatpush.msra.mxu0 %v696
      %1151 = vmatpush.msra.mxu0 %v577
      %1152 = vmatpush.msra.mxu0 %v545
      %1153 = vmatpush.msra.mxu0 %v513
      %1154 = vmatpush.msra.mxu0 %v481
      %1155 = vmatpush.msra.mxu0 %v449
      %1156 = vmatpush.msra.mxu0 %v417
      %1157 = vmatpush.msra.mxu0 %v385
      %1158 = vmatpush.msra.mxu0 %v353
      %1159 = vmatpush.msra.mxu0 %v321
      %1160 = vmatpush.msra.mxu0 %v289
      %1161 = vmatpush.msra.mxu0 %v257
      %1162 = vmatpush.msra.mxu0 %v225
      %1163 = vmatpush.msra.mxu0 %v193
      %1164 = vmatmul.f32.gmra.mxu0 %v629
      %v1165 = vpop.f32.mrf.mxu0
      %v1166 = vadd.f32 %v626, %v1165
      %1167 = vdwg.mxu0
      %1168 = vmatpush.msra.mxu0 0.0
      %1169 = vmatpush.msra.mxu0 0.0
      %1170 = vmatpush.msra.mxu0 %v699
      %1171 = vmatpush.msra.mxu0 %v578
      %1172 = vmatpush.msra.mxu0 %v546
      %1173 = vmatpush.msra.mxu0 %v514
      %1174 = vmatpush.msra.mxu0 %v482
      %1175 = vmatpush.msra.mxu0 %v450
      %1176 = vmatpush.msra.mxu0 %v418
      %1177 = vmatpush.msra.mxu0 %v386
      %1178 = vmatpush.msra.mxu0 %v354
      %1179 = vmatpush.msra.mxu0 %v322
      %1180 = vmatpush.msra.mxu0 %v290
      %1181 = vmatpush.msra.mxu0 %v258
      %1182 = vmatpush.msra.mxu0 %v226
      %1183 = vmatpush.msra.mxu0 %v194
      %1184 = vmatmul.f32.gmra.mxu0 %v629
      %v1185 = vpop.f32.mrf.mxu0
      %v1186 = vadd.f32 %v626, %v1185
      %1187 = vdwg.mxu0
      %1188 = vmatpush.msra.mxu0 0.0
      %1189 = vmatpush.msra.mxu0 0.0
      %1190 = vmatpush.msra.mxu0 %v702
      %1191 = vmatpush.msra.mxu0 %v579
      %1192 = vmatpush.msra.mxu0 %v547
      %1193 = vmatpush.msra.mxu0 %v515
      %1194 = vmatpush.msra.mxu0 %v483
      %1195 = vmatpush.msra.mxu0 %v451
      %1196 = vmatpush.msra.mxu0 %v419
      %1197 = vmatpush.msra.mxu0 %v387
      %1198 = vmatpush.msra.mxu0 %v355
      %1199 = vmatpush.msra.mxu0 %v323
      %1200 = vmatpush.msra.mxu0 %v291
      %1201 = vmatpush.msra.mxu0 %v259
      %1202 = vmatpush.msra.mxu0 %v227
      %1203 = vmatpush.msra.mxu0 %v195
      %1204 = vmatmul.f32.gmra.mxu0 %v629
      %v1205 = vpop.f32.mrf.mxu0
      %v1206 = vadd.f32 %v626, %v1205
      %1207 = vdwg.mxu0
      %1208 = vmatpush.msra.mxu0 0.0
      %1209 = vmatpush.msra.mxu0 0.0
      %1210 = vmatpush.msra.mxu0 %v705
      %1211 = vmatpush.msra.mxu0 %v580
      %1212 = vmatpush.msra.mxu0 %v548
      %1213 = vmatpush.msra.mxu0 %v516
      %1214 = vmatpush.msra.mxu0 %v484
      %1215 = vmatpush.msra.mxu0 %v452
      %1216 = vmatpush.msra.mxu0 %v420
      %1217 = vmatpush.msra.mxu0 %v388
      %1218 = vmatpush.msra.mxu0 %v356
      %1219 = vmatpush.msra.mxu0 %v324
      %1220 = vmatpush.msra.mxu0 %v292
      %1221 = vmatpush.msra.mxu0 %v260
      %1222 = vmatpush.msra.mxu0 %v228
      %1223 = vmatpush.msra.mxu0 %v196
      %1224 = vmatmul.f32.gmra.mxu0 %v629
      %v1225 = vpop.f32.mrf.mxu0
      %v1226 = vadd.f32 %v626, %v1225
      %1227 = vdwg.mxu0
      %1228 = vmatpush.msra.mxu0 0.0
      %1229 = vmatpush.msra.mxu0 0.0
      %1230 = vmatpush.msra.mxu0 %v708
      %1231 = vmatpush.msra.mxu0 %v581
      %1232 = vmatpush.msra.mxu0 %v549
      %1233 = vmatpush.msra.mxu0 %v517
      %1234 = vmatpush.msra.mxu0 %v485
      %1235 = vmatpush.msra.mxu0 %v453
      %1236 = vmatpush.msra.mxu0 %v421
      %1237 = vmatpush.msra.mxu0 %v389
      %1238 = vmatpush.msra.mxu0 %v357
      %1239 = vmatpush.msra.mxu0 %v325
      %1240 = vmatpush.msra.mxu0 %v293
      %1241 = vmatpush.msra.mxu0 %v261
      %1242 = vmatpush.msra.mxu0 %v229
      %1243 = vmatpush.msra.mxu0 %v197
      %1244 = vmatmul.f32.gmra.mxu0 %v629
      %v1245 = vpop.f32.mrf.mxu0
      %v1246 = vadd.f32 %v626, %v1245
      %1247 = vdwg.mxu0
      %1248 = vmatpush.msra.mxu0 0.0
      %1249 = vmatpush.msra.mxu0 0.0
      %1250 = vmatpush.msra.mxu0 %v711
      %1251 = vmatpush.msra.mxu0 %v582
      %1252 = vmatpush.msra.mxu0 %v550
      %1253 = vmatpush.msra.mxu0 %v518
      %1254 = vmatpush.msra.mxu0 %v486
      %1255 = vmatpush.msra.mxu0 %v454
      %1256 = vmatpush.msra.mxu0 %v422
      %1257 = vmatpush.msra.mxu0 %v390
      %1258 = vmatpush.msra.mxu0 %v358
      %1259 = vmatpush.msra.mxu0 %v326
      %1260 = vmatpush.msra.mxu0 %v294
      %1261 = vmatpush.msra.mxu0 %v262
      %1262 = vmatpush.msra.mxu0 %v230
      %1263 = vmatpush.msra.mxu0 %v198
      %1264 = vmatmul.f32.gmra.mxu0 %v629
      %v1265 = vpop.f32.mrf.mxu0
      %v1266 = vadd.f32 %v626, %v1265
      %1267 = vdwg.mxu0
      %1268 = vmatpush.msra.mxu0 0.0
      %1269 = vmatpush.msra.mxu0 0.0
      %1270 = vmatpush.msra.mxu0 %v714
      %1271 = vmatpush.msra.mxu0 %v583
      %1272 = vmatpush.msra.mxu0 %v551
      %1273 = vmatpush.msra.mxu0 %v519
      %1274 = vmatpush.msra.mxu0 %v487
      %1275 = vmatpush.msra.mxu0 %v455
      %1276 = vmatpush.msra.mxu0 %v423
      %1277 = vmatpush.msra.mxu0 %v391
      %1278 = vmatpush.msra.mxu0 %v359
      %1279 = vmatpush.msra.mxu0 %v327
      %1280 = vmatpush.msra.mxu0 %v295
      %1281 = vmatpush.msra.mxu0 %v263
      %1282 = vmatpush.msra.mxu0 %v231
      %1283 = vmatpush.msra.mxu0 %v199
      %1284 = vmatmul.f32.gmra.mxu0 %v629
      %v1285 = vpop.f32.mrf.mxu0
      %v1286 = vadd.f32 %v626, %v1285
      %1287 = vdwg.mxu0
      %1288 = vmatpush.msra.mxu0 0.0
      %1289 = vmatpush.msra.mxu0 0.0
      %1290 = vmatpush.msra.mxu0 %v717
      %1291 = vmatpush.msra.mxu0 %v584
      %1292 = vmatpush.msra.mxu0 %v552
      %1293 = vmatpush.msra.mxu0 %v520
      %1294 = vmatpush.msra.mxu0 %v488
      %1295 = vmatpush.msra.mxu0 %v456
      %1296 = vmatpush.msra.mxu0 %v424
      %1297 = vmatpush.msra.mxu0 %v392
      %1298 = vmatpush.msra.mxu0 %v360
      %1299 = vmatpush.msra.mxu0 %v328
      %1300 = vmatpush.msra.mxu0 %v296
      %1301 = vmatpush.msra.mxu0 %v264
      %1302 = vmatpush.msra.mxu0 %v232
      %1303 = vmatpush.msra.mxu0 %v200
      %1304 = vmatmul.f32.gmra.mxu0 %v629
      %v1305 = vpop.f32.mrf.mxu0
      %v1306 = vadd.f32 %v626, %v1305
      %1307 = vdwg.mxu0
      %1308 = vmatpush.msra.mxu0 0.0
      %1309 = vmatpush.msra.mxu0 0.0
      %1310 = vmatpush.msra.mxu0 %v720
      %1311 = vmatpush.msra.mxu0 %v585
      %1312 = vmatpush.msra.mxu0 %v553
      %1313 = vmatpush.msra.mxu0 %v521
      %1314 = vmatpush.msra.mxu0 %v489
      %1315 = vmatpush.msra.mxu0 %v457
      %1316 = vmatpush.msra.mxu0 %v425
      %1317 = vmatpush.msra.mxu0 %v393
      %1318 = vmatpush.msra.mxu0 %v361
      %1319 = vmatpush.msra.mxu0 %v329
      %1320 = vmatpush.msra.mxu0 %v297
      %1321 = vmatpush.msra.mxu0 %v265
      %1322 = vmatpush.msra.mxu0 %v233
      %1323 = vmatpush.msra.mxu0 %v201
      %1324 = vmatmul.f32.gmra.mxu0 %v629
      %v1325 = vpop.f32.mrf.mxu0
      %v1326 = vadd.f32 %v626, %v1325
      %1327 = vdwg.mxu0
      %1328 = vmatpush.msra.mxu0 0.0
      %1329 = vmatpush.msra.mxu0 0.0
      %1330 = vmatpush.msra.mxu0 %v723
      %1331 = vmatpush.msra.mxu0 %v586
      %1332 = vmatpush.msra.mxu0 %v554
      %1333 = vmatpush.msra.mxu0 %v522
      %1334 = vmatpush.msra.mxu0 %v490
      %1335 = vmatpush.msra.mxu0 %v458
      %1336 = vmatpush.msra.mxu0 %v426
      %1337 = vmatpush.msra.mxu0 %v394
      %1338 = vmatpush.msra.mxu0 %v362
      %1339 = vmatpush.msra.mxu0 %v330
      %1340 = vmatpush.msra.mxu0 %v298
      %1341 = vmatpush.msra.mxu0 %v266
      %1342 = vmatpush.msra.mxu0 %v234
      %1343 = vmatpush.msra.mxu0 %v202
      %1344 = vmatmul.f32.gmra.mxu0 %v629
      %v1345 = vpop.f32.mrf.mxu0
      %v1346 = vadd.f32 %v626, %v1345
      %1347 = vdwg.mxu0
      %1348 = vmatpush.msra.mxu0 0.0
      %1349 = vmatpush.msra.mxu0 0.0
      %1350 = vmatpush.msra.mxu0 %v726
      %1351 = vmatpush.msra.mxu0 %v587
      %1352 = vmatpush.msra.mxu0 %v555
      %1353 = vmatpush.msra.mxu0 %v523
      %1354 = vmatpush.msra.mxu0 %v491
      %1355 = vmatpush.msra.mxu0 %v459
      %1356 = vmatpush.msra.mxu0 %v427
      %1357 = vmatpush.msra.mxu0 %v395
      %1358 = vmatpush.msra.mxu0 %v363
      %1359 = vmatpush.msra.mxu0 %v331
      %1360 = vmatpush.msra.mxu0 %v299
      %1361 = vmatpush.msra.mxu0 %v267
      %1362 = vmatpush.msra.mxu0 %v235
      %1363 = vmatpush.msra.mxu0 %v203
      %1364 = vmatmul.f32.gmra.mxu0 %v629
      %v1365 = vpop.f32.mrf.mxu0
      %v1366 = vadd.f32 %v626, %v1365
      %1367 = vdwg.mxu0
      %v1400 = vrot.slane %v766, 7
      %v1401 = vrot.slane %v786, 6
      %v1402 = vrot.slane %v806, 5
      %v1403 = vrot.slane %v826, 4
      %v1404 = vrot.slane %v846, 3
      %v1405 = vrot.slane %v866, 2
      %v1406 = vrot.slane %v886, 1
      %v1407 = vrot.slane %v926, 7
      %v1408 = vrot.slane %v946, 6
      %v1409 = vrot.slane %v966, 5
      %v1410 = vrot.slane %v986, 4
      %v1411 = vrot.slane %v1006, 3
      %v1412 = vrot.slane %v1026, 2
      %v1413 = vrot.slane %v1046, 1
      %v1414 = vrot.slane %v1086, 7
      %v1415 = vrot.slane %v1106, 6
      %v1416 = vrot.slane %v1126, 5
      %v1417 = vrot.slane %v1146, 4
      %v1418 = vrot.slane %v1166, 3
      %v1419 = vrot.slane %v1186, 2
      %v1420 = vrot.slane %v1206, 1
      %v1421 = vrot.slane %v1246, 7
      %v1422 = vrot.slane %v1266, 6
      %v1423 = vrot.slane %v1286, 5
      %v1424 = vrot.slane %v1306, 4
      %v1425 = vrot.slane %v1326, 3
      %v1426 = vrot.slane %v1346, 2
      %v1427 = vrot.slane %v1366, 1
      %vm1428 = vcmask 1040384
      %v1429 = vsel %vm1428, %v746, %v1400
      %vm1430 = vcmask 1042434
      %v1431 = vsel %vm1430, %v1401, %v1402
      %vm1432 = vcmask 1041408
      %v1433 = vsel %vm1432, %v1429, %v1431
      %vm1434 = vcmask 1044484
      %v1435 = vsel %vm1434, %v1403, %v1404
      %vm1436 = vcmask 1046534
      %v1437 = vsel %vm1436, %v1405, %v1406
      %vm1438 = vcmask 1045508
      %v1439 = vsel %vm1438, %v1435, %v1437
      %v1440 = vsel %vm631, %v1433, %v1439
      %v1441 = vsel %vm1428, %v906, %v1407
      %v1442 = vsel %vm1430, %v1408, %v1409
      %v1443 = vsel %vm1432, %v1441, %v1442
      %v1444 = vsel %vm1434, %v1410, %v1411
      %v1445 = vsel %vm1436, %v1412, %v1413
      %v1446 = vsel %vm1438, %v1444, %v1445
      %v1447 = vsel %vm631, %v1443, %v1446
      %v1448 = vsel %vm1428, %v1066, %v1414
      %v1449 = vsel %vm1430, %v1415, %v1416
      %v1450 = vsel %vm1432, %v1448, %v1449
      %v1451 = vsel %vm1434, %v1417, %v1418
      %v1452 = vsel %vm1436, %v1419, %v1420
      %v1453 = vsel %vm1438, %v1451, %v1452
      %v1454 = vsel %vm631, %v1450, %v1453
      %v1455 = vsel %vm1428, %v1226, %v1421
      %v1456 = vsel %vm1430, %v1422, %v1423
      %v1457 = vsel %vm1432, %v1455, %v1456
      %v1458 = vsel %vm1434, %v1424, %v1425
      %v1459 = vsel %vm1436, %v1426, %v1427
      %v1460 = vsel %vm1438, %v1458, %v1459
      %v1461 = vsel %vm631, %v1457, %v1460
      %1466 = vst [vmem:[%s170] sm:$0xff] %v1440
      %1467 = vst [vmem:[%s170 + $0x8] sm:$0xff] %v1447
      %1468 = vst [vmem:[%s170 + $0x10] sm:$0xff] %v1454
      %1469 = vst [vmem:[%s170 + $0x18] sm:$0xff] %v1461
      %p1470 = scmp.lt.s32.totalorder %s16, 1
      %s1471 = scalar_select %p1470, %s16, 1
      %s1472 = smul.addr %s1471, 32
      %s1473 = scalar_lea.vmem %s3, %s1472
      // Predicated region
      $region33: #{vae_forward.9} parent=31 // pred_check
        %p1474 = pneg %p102
      $region34: #{vae_forward.9} parent=31 // pred_check_branch
        %1476 = sbr.rel (%p1474) target = $region36
      $region35: #{vae_forward.9} parent=31 // pred_region
        _
      $region36: #{vae_forward.9} parent=31 // pred_fallthru
        _
    $region32: #{vae_forward.9} parent=5 // pred_fallthru
      _
    %p1477 = scmp.le.s32.totalorder 2, %s11
    // Predicated region
    $region37: #{vae_forward.9} parent=5 // pred_check
      %p1478 = pneg %p1477
    $region38: #{vae_forward.9} parent=5 // pred_check_branch
      %1480 = sbr.rel (%p1478) target = $region40
    $region39: #{vae_forward.9} parent=5 // pred_region
      %s1481 = ssub.s32 %s11, 2
      // Predicated region
      $region41: #{vae_forward.9} parent=39 // pred_check
        %p1482 = pneg %p108
      $region42: #{vae_forward.9} parent=39 // pred_check_branch
        %1484 = sbr.rel (%p1482) target = $region44
      $region43: #{vae_forward.9} parent=39 // pred_region
        %p1485 = scmp.lt.s32.totalorder %s17, 1
        %s1486 = scalar_select %p1485, %s17, 1
        %s1487 = smul.addr %s1486, 32
        %s1488 = scalar_lea.vmem %s3, %s1487
      $region44: #{vae_forward.9} parent=39 // pred_fallthru
        _
    $region40: #{vae_forward.9} parent=5 // pred_fallthru
      _
  $region6: #{vae_forward.9} parent=0 // loop_footer
    %s15 = sadd.s32 1, %s11
  $region7: #{vae_forward.9} parent=0 // loop_footer_branch
    %10 = sbr.rel target = $region3
  $region8: #{vae_forward.9} parent=0 // loop_exit
    _

</llo_original>
